<compile_context>
chip_gen: v5e
topology: v5e:2x2
jax: 0.10.0
libtpu: 0.0.40
codegen_flags: <defaults>
</compile_context>

<pallas_src>
import jax
import jax.numpy as jnp
from jax.experimental import pallas as pl
from jax.experimental.pallas import tpu as pltpu


def _round_up(v, m):
    return (v + m - 1) // m * m


def gt2rbf_kernel(x_ref, g0_ref, g1_ref, g2_ref, alpha_ref, w_ref, b_ref, out_ref):
    a_pad = alpha_ref.shape[1]          # 128 (padded alpha-slice axis, on lanes)
    two_ma = g0_ref.shape[1]            # 2 * M * a_pad
    ma = two_ma // 2
    m_num = w_ref.shape[0]              # M
    p_num = w_ref.shape[1]              # P

    x = x_ref[...]                      # [TB, N_pad]
    x2 = x * x

    # ---- exponents for all (lower/upper, m, alpha) at once, on the MXU ----
    # e[:, 0:MA]   = lower exponents, e[:, MA:2MA] = upper exponents
    dn = (((1,), (0,)), ((), ()))
    e = jax.lax.dot_general(
        x2, g0_ref[...], dimension_numbers=dn,
        preferred_element_type=jnp.float32,
        precision=jax.lax.Precision.HIGHEST)
    e = e + jax.lax.dot_general(
        x, g1_ref[...], dimension_numbers=dn,
        preferred_element_type=jnp.float32,
        precision=jax.lax.Precision.HIGHEST)
    e = e + g2_ref[...]                 # [TB, 2MA] + [1, 2MA], once per grid step

    # ---- exact stabilization: per-(b, alpha) max over the 2*M blocks ----
    # (the exp(shift) factor cancels in num/den, so the result is unchanged,
    #  but den >= 1 is guaranteed -> no underflow-to-zero NaN)
    n_blocks = 2 * m_num
    shift = e[:, 0:a_pad]
    for blk in range(1, n_blocks):
        shift = jnp.maximum(shift, e[:, blk * a_pad:(blk + 1) * a_pad])

    # ---- per-m exp + fused weighted sums (lane-dense [TB, a_pad] slabs) ----
    den = None                          # sum_m (f_up + f_lo)
    num = [None] * p_num                # per-output-column accumulators
    for m in range(m_num):
        e_lo = e[:, m * a_pad:(m + 1) * a_pad]
        e_up = e[:, ma + m * a_pad:ma + (m + 1) * a_pad]
        s_m = jnp.exp(e_lo - shift) + jnp.exp(e_up - shift)     # [TB, a_pad]
        den = s_m if den is None else den + s_m
        for p in range(p_num):
            contrib = s_m * w_ref[m, p]                          # scalar from SMEM
            num[p] = contrib if num[p] is None else num[p] + contrib

    # 1/den on the EUP (approx) + one Newton refinement -> ~f32 precision.
    inv_den = pl.reciprocal(den, approx=True)
    inv_den = inv_den * (2.0 - den * inv_den)
    scale = inv_den * alpha_ref[...]    # alpha/sum(alpha), padded lanes are 0

    for p in range(p_num):
        yp = jnp.sum(num[p] * scale, axis=-1, keepdims=True) + b_ref[0, p]
        out_ref[:, p:p + 1] = yp.astype(out_ref.dtype)


def gt2rbf_forward(x, mu, sigma, delta_sig, alpha, weights, bias, *, tile_b=None):
    B, N = x.shape
    M, P = weights.shape
    A = alpha.shape[-1]
    A_pad = _round_up(A, 128)
    N_pad = _round_up(N, 8)
    MA = M * A_pad
    f32 = jnp.float32

    x = x.astype(f32)
    mu = mu.astype(f32)
    sigma = sigma.astype(f32)
    delta_sig = delta_sig.astype(f32)
    alpha = alpha.reshape(1, A).astype(f32)
    weights = weights.astype(f32)
    bias = bias.reshape(1, P).astype(f32)

    # ---- batch-invariant coefficient tables (once per call) ----
    sig_eff = sigma + 0.5 * delta_sig                       # [N, M]
    delta = 0.5 * delta_sig
    oma = (1.0 - alpha)[0]                                  # [A]
    d_lo = sig_eff[:, :, None] + delta[:, :, None] * oma[None, None, :]   # [N,M,A]
    d_up = sig_eff[:, :, None] - delta[:, :, None] * oma[None, None, :]
    c_lo = (-0.5) / (d_lo * d_lo)
    c_up = (-0.5) / (d_up * d_up)
    # Benign lane padding A -> A_pad: c = 0 -> exponent 0 -> exp 1; the padded
    # alpha weights below are 0, so dead lanes never reach the output.
    pad_a = A_pad - A
    c_lo = jnp.pad(c_lo, ((0, 0), (0, 0), (0, pad_a)))
    c_up = jnp.pad(c_up, ((0, 0), (0, 0), (0, pad_a)))
    c = jnp.concatenate([c_lo, c_up], axis=1)               # [N, 2M, A_pad]: lower|upper
    mu2 = jnp.concatenate([mu, mu], axis=1)                  # [N, 2M]

    g0 = c.reshape(N, 2 * MA)                                # x^2 coefficients
    g1 = (-2.0 * mu2[:, :, None] * c).reshape(N, 2 * MA)     # x coefficients
    g2 = jnp.sum((mu2 * mu2)[:, :, None] * c, axis=0).reshape(1, 2 * MA)  # constants

    # pad the contraction dim to a multiple of 8 (zero rows/cols contribute 0)
    if N_pad != N:
        g0 = jnp.pad(g0, ((0, N_pad - N), (0, 0)))
        g1 = jnp.pad(g1, ((0, N_pad - N), (0, 0)))
        x = jnp.pad(x, ((0, 0), (0, N_pad - N)))

    alpha_scaled = jnp.pad(alpha / jnp.sum(alpha), ((0, 0), (0, pad_a)))  # [1, A_pad]

    # ---- batch tiling: driven by step overhead / vreg pressure, not VMEM ----
    # Single grid step while B <= 128 (v5e/v6e have one TensorCore, extra steps
    # are pure ~0.35us overhead).  tile_b = 128 for larger batches so v7x's two
    # TensorCores both get work; sweep {64, 128, 256} when tuning a chip.
    if tile_b is None:
        tile_b = _round_up(B, 8) if B <= 128 else 128
    tile_b = max(8, _round_up(tile_b, 8))
    B_pad = _round_up(B, tile_b)
    if B_pad != B:
        x = jnp.pad(x, ((0, B_pad - B), (0, 0)))             # padded rows are finite, sliced off

    grid = (B_pad // tile_b,)
    smem = pl.BlockSpec(memory_space=pltpu.MemorySpace.SMEM)

    out = pl.pallas_call(
        gt2rbf_kernel,
        out_shape=jax.ShapeDtypeStruct((B_pad, P), f32),
        grid_spec=pltpu.PrefetchScalarGridSpec(
            num_scalar_prefetch=0,
            grid=grid,
            in_specs=[
                pl.BlockSpec((tile_b, N_pad), lambda i: (i, 0)),    # x tile (VMEM)
                pl.BlockSpec((N_pad, 2 * MA), lambda i: (0, 0)),    # G0 (x^2 table)
                pl.BlockSpec((N_pad, 2 * MA), lambda i: (0, 0)),    # G1 (x table, -2*mu*c folded)
                pl.BlockSpec((1, 2 * MA), lambda i: (0, 0)),        # G2 (constant table)
                pl.BlockSpec((1, A_pad), lambda i: (0, 0)),         # alpha / sum(alpha), padded
                smem,                                               # weights [M, P] (SMEM)
                smem,                                               # bias [1, P]     (SMEM)
            ],
            out_specs=pl.BlockSpec((tile_b, P), lambda i: (i, 0)),
        ),
        compiler_params=pltpu.CompilerParams(
            dimension_semantics=("parallel",)),
    )(x, g0, g1, g2, alpha_scaled, weights, bias)
    return out[:B]


def gt2rbf_reference(x, mu, sigma, delta_sig, alpha, weights, bias):
    """Plain-JAX mirror of the torch forward (prod-of-exps form) for checking."""
    mu4 = mu[None, :, :, None]
    sig4 = sigma[None, :, :, None]
    dsig4 = delta_sig[None, :, :, None]
    alpha4 = alpha.reshape(1, 1, 1, -1)
    sig_eff = sig4 + dsig4 / 2
    delta = dsig4 / 2
    xe = x[:, :, None, None]
    lower = jnp.exp(-0.5 * ((xe - mu4) / (sig_eff + delta * (1 - alpha4))) ** 2)
    upper = jnp.exp(-0.5 * ((xe - mu4) / (sig_eff - delta * (1 - alpha4))) ** 2)
    f_u = jnp.prod(upper, axis=1)                   # [B, M, A]
    f_l = jnp.prod(lower, axis=1)
    y_alpha = jnp.swapaxes(f_u + f_l, 1, 2) @ weights / \
        (f_u.sum(1) + f_l.sum(1))[..., None]        # [B, A, P]
    y = (y_alpha * alpha.reshape(1, -1, 1)).sum(1) / alpha.sum()
    return y + bias


if __name__ == "__main__":
    # shapes consistent with the module: input_size=4, mf_num=8, output_size=2,
    # alpha_slice_num=101 (module default), batch=16.
    B, N, M, P, A = 16, 4, 8, 2, 101

    key = jax.random.PRNGKey(0)
    kx, kw, kx2 = jax.random.split(key, 3)

    x = jax.random.normal(kx, (B, N), dtype=jnp.float32)

    # deterministic parameter init mirroring __init__ (float32 instead of float64)
    mu = 0.5 * jnp.ones((N, M), jnp.float32)
    sigma = jnp.ones((N, M), jnp.float32)
    delta_sig = 0.1 * jnp.ones((N, M), jnp.float32)
    alpha = jnp.linspace(0.0, 1.0, A, dtype=jnp.float32).reshape(1, A)
    weights = jax.random.uniform(kw, (M, P), dtype=jnp.float32)
    bias = jnp.zeros((1, P), jnp.float32)   # torch.rand(...) * 0

    out = jax.block_until_ready(
        gt2rbf_forward(x, mu, sigma, delta_sig, alpha, weights, bias))
    ref = gt2rbf_reference(x, mu, sigma, delta_sig, alpha, weights, bias)
    assert out.shape == (B, P)
    assert jnp.allclose(out, ref, rtol=5e-4, atol=1e-5), (out, ref)

    # second check: ragged batch with a multi-step grid (exercises padding path)
    B2 = 200
    xb = jax.random.normal(kx2, (B2, N), dtype=jnp.float32)
    out2 = jax.block_until_ready(
        gt2rbf_forward(xb, mu, sigma, delta_sig, alpha, weights, bias))
    ref2 = gt2rbf_reference(xb, mu, sigma, delta_sig, alpha, weights, bias)
    assert out2.shape == (B2, P)
    assert jnp.allclose(out2, ref2, rtol=5e-4, atol=1e-5), (out2, ref2)

    print("KERNEL_OK")
</pallas_src>

<mosaic_0001>
module attributes {stable_mosaic.version = 11 : i64} {
  func.func @gt2rbf_kernel(%arg0: i32, %arg1: memref<16x8xf32, #tpu.memory_space<vmem>>, %arg2: memref<8x2048xf32, #tpu.memory_space<vmem>>, %arg3: memref<8x2048xf32, #tpu.memory_space<vmem>>, %arg4: memref<1x2048xf32, #tpu.memory_space<vmem>>, %arg5: memref<1x128xf32, #tpu.memory_space<vmem>>, %arg6: memref<8x2xf32, #tpu.memory_space<smem>>, %arg7: memref<1x2xf32, #tpu.memory_space<smem>>, %arg8: memref<16x2xf32, #tpu.memory_space<vmem>>) attributes {dimension_semantics = [#tpu.dimension_semantics<parallel>], iteration_bounds = array<i64: 1>, scalar_prefetch = 0 : i64, scratch_operands = 0 : i64, tpu.core_type = #tpu.core_type<tc>, window_params = [{transform_indices = @transform_0, window_bounds = array<i64: 16, 8>}, {pipeline_mode = #tpu.pipeline_mode<synchronous>, transform_indices = @transform_1, window_bounds = array<i64: 8, 2048>}, {pipeline_mode = #tpu.pipeline_mode<synchronous>, transform_indices = @transform_2, window_bounds = array<i64: 8, 2048>}, {pipeline_mode = #tpu.pipeline_mode<synchronous>, transform_indices = @transform_3, window_bounds = array<i64: 1, 2048>}, {pipeline_mode = #tpu.pipeline_mode<synchronous>, transform_indices = @transform_4, window_bounds = array<i64: 1, 128>}, {transform_indices = @transform_5, window_bounds = array<i64: 8, 2>}, {transform_indices = @transform_6, window_bounds = array<i64: 1, 2>}, {transform_indices = @transform_7, window_bounds = array<i64: 16, 2>}]} {
    %c0 = arith.constant 0 : index
    %c0_0 = arith.constant 0 : index
    %0 = vector.load %arg1[%c0, %c0_0] : memref<16x8xf32, #tpu.memory_space<vmem>>, vector<16x8xf32>
    %1 = arith.mulf %0, %0 : vector<16x8xf32>
    %c0_1 = arith.constant 0 : index
    %c0_2 = arith.constant 0 : index
    %2 = vector.load %arg2[%c0_1, %c0_2] : memref<8x2048xf32, #tpu.memory_space<vmem>>, vector<8x2048xf32>
    %cst = arith.constant dense<0.000000e+00> : vector<16x2048xf32>
    %3 = tpu.matmul %1, %2, %cst {dimension_numbers = #tpu.dot_dimension_numbers<[1], [0], [0], [1], [0, 0, 1, 1], [], []>, precision = #tpu.contract_precision<fp32>} : vector<16x8xf32>, vector<8x2048xf32>, vector<16x2048xf32> -> vector<16x2048xf32>
    %c0_3 = arith.constant 0 : index
    %c0_4 = arith.constant 0 : index
    %4 = vector.load %arg3[%c0_3, %c0_4] : memref<8x2048xf32, #tpu.memory_space<vmem>>, vector<8x2048xf32>
    %cst_5 = arith.constant dense<0.000000e+00> : vector<16x2048xf32>
    %5 = tpu.matmul %0, %4, %cst_5 {dimension_numbers = #tpu.dot_dimension_numbers<[1], [0], [0], [1], [0, 0, 1, 1], [], []>, precision = #tpu.contract_precision<fp32>} : vector<16x8xf32>, vector<8x2048xf32>, vector<16x2048xf32> -> vector<16x2048xf32>
    %6 = arith.addf %3, %5 : vector<16x2048xf32>
    %c0_6 = arith.constant 0 : index
    %c0_7 = arith.constant 0 : index
    %7 = vector.load %arg4[%c0_6, %c0_7] : memref<1x2048xf32, #tpu.memory_space<vmem>>, vector<1x2048xf32>
    %8 = vector.broadcast %7 : vector<1x2048xf32> to vector<16x2048xf32>
    %9 = arith.addf %6, %8 : vector<16x2048xf32>
    %10 = vector.extract_strided_slice %9 {offsets = [0, 0], sizes = [16, 128], strides = [1, 1]} : vector<16x2048xf32> to vector<16x128xf32>
    %11 = vector.extract_strided_slice %9 {offsets = [0, 128], sizes = [16, 128], strides = [1, 1]} : vector<16x2048xf32> to vector<16x128xf32>
    %12 = arith.maximumf %10, %11 : vector<16x128xf32>
    %13 = vector.extract_strided_slice %9 {offsets = [0, 256], sizes = [16, 128], strides = [1, 1]} : vector<16x2048xf32> to vector<16x128xf32>
    %14 = arith.maximumf %12, %13 : vector<16x128xf32>
    %15 = vector.extract_strided_slice %9 {offsets = [0, 384], sizes = [16, 128], strides = [1, 1]} : vector<16x2048xf32> to vector<16x128xf32>
    %16 = arith.maximumf %14, %15 : vector<16x128xf32>
    %17 = vector.extract_strided_slice %9 {offsets = [0, 512], sizes = [16, 128], strides = [1, 1]} : vector<16x2048xf32> to vector<16x128xf32>
    %18 = arith.maximumf %16, %17 : vector<16x128xf32>
    %19 = vector.extract_strided_slice %9 {offsets = [0, 640], sizes = [16, 128], strides = [1, 1]} : vector<16x2048xf32> to vector<16x128xf32>
    %20 = arith.maximumf %18, %19 : vector<16x128xf32>
    %21 = vector.extract_strided_slice %9 {offsets = [0, 768], sizes = [16, 128], strides = [1, 1]} : vector<16x2048xf32> to vector<16x128xf32>
    %22 = arith.maximumf %20, %21 : vector<16x128xf32>
    %23 = vector.extract_strided_slice %9 {offsets = [0, 896], sizes = [16, 128], strides = [1, 1]} : vector<16x2048xf32> to vector<16x128xf32>
    %24 = arith.maximumf %22, %23 : vector<16x128xf32>
    %25 = vector.extract_strided_slice %9 {offsets = [0, 1024], sizes = [16, 128], strides = [1, 1]} : vector<16x2048xf32> to vector<16x128xf32>
    %26 = arith.maximumf %24, %25 : vector<16x128xf32>
    %27 = vector.extract_strided_slice %9 {offsets = [0, 1152], sizes = [16, 128], strides = [1, 1]} : vector<16x2048xf32> to vector<16x128xf32>
    %28 = arith.maximumf %26, %27 : vector<16x128xf32>
    %29 = vector.extract_strided_slice %9 {offsets = [0, 1280], sizes = [16, 128], strides = [1, 1]} : vector<16x2048xf32> to vector<16x128xf32>
    %30 = arith.maximumf %28, %29 : vector<16x128xf32>
    %31 = vector.extract_strided_slice %9 {offsets = [0, 1408], sizes = [16, 128], strides = [1, 1]} : vector<16x2048xf32> to vector<16x128xf32>
    %32 = arith.maximumf %30, %31 : vector<16x128xf32>
    %33 = vector.extract_strided_slice %9 {offsets = [0, 1536], sizes = [16, 128], strides = [1, 1]} : vector<16x2048xf32> to vector<16x128xf32>
    %34 = arith.maximumf %32, %33 : vector<16x128xf32>
    %35 = vector.extract_strided_slice %9 {offsets = [0, 1664], sizes = [16, 128], strides = [1, 1]} : vector<16x2048xf32> to vector<16x128xf32>
    %36 = arith.maximumf %34, %35 : vector<16x128xf32>
    %37 = vector.extract_strided_slice %9 {offsets = [0, 1792], sizes = [16, 128], strides = [1, 1]} : vector<16x2048xf32> to vector<16x128xf32>
    %38 = arith.maximumf %36, %37 : vector<16x128xf32>
    %39 = vector.extract_strided_slice %9 {offsets = [0, 1920], sizes = [16, 128], strides = [1, 1]} : vector<16x2048xf32> to vector<16x128xf32>
    %40 = arith.maximumf %38, %39 : vector<16x128xf32>
    %41 = vector.extract_strided_slice %9 {offsets = [0, 0], sizes = [16, 128], strides = [1, 1]} : vector<16x2048xf32> to vector<16x128xf32>
    %42 = vector.extract_strided_slice %9 {offsets = [0, 1024], sizes = [16, 128], strides = [1, 1]} : vector<16x2048xf32> to vector<16x128xf32>
    %43 = arith.subf %41, %40 : vector<16x128xf32>
    %44 = math.exp %43 : vector<16x128xf32>
    %45 = arith.subf %42, %40 : vector<16x128xf32>
    %46 = math.exp %45 : vector<16x128xf32>
    %47 = arith.addf %44, %46 : vector<16x128xf32>
    %c0_8 = arith.constant 0 : index
    %c0_9 = arith.constant 0 : index
    %48 = memref.load %arg6[%c0_8, %c0_9] : memref<8x2xf32, #tpu.memory_space<smem>>
    %49 = vector.broadcast %48 : f32 to vector<16x128xf32>
    %50 = arith.mulf %47, %49 : vector<16x128xf32>
    %c0_10 = arith.constant 0 : index
    %c1 = arith.constant 1 : index
    %51 = memref.load %arg6[%c0_10, %c1] : memref<8x2xf32, #tpu.memory_space<smem>>
    %52 = vector.broadcast %51 : f32 to vector<16x128xf32>
    %53 = arith.mulf %47, %52 : vector<16x128xf32>
    %54 = vector.extract_strided_slice %9 {offsets = [0, 128], sizes = [16, 128], strides = [1, 1]} : vector<16x2048xf32> to vector<16x128xf32>
    %55 = vector.extract_strided_slice %9 {offsets = [0, 1152], sizes = [16, 128], strides = [1, 1]} : vector<16x2048xf32> to vector<16x128xf32>
    %56 = arith.subf %54, %40 : vector<16x128xf32>
    %57 = math.exp %56 : vector<16x128xf32>
    %58 = arith.subf %55, %40 : vector<16x128xf32>
    %59 = math.exp %58 : vector<16x128xf32>
    %60 = arith.addf %57, %59 : vector<16x128xf32>
    %61 = arith.addf %47, %60 : vector<16x128xf32>
    %c1_11 = arith.constant 1 : index
    %c0_12 = arith.constant 0 : index
    %62 = memref.load %arg6[%c1_11, %c0_12] : memref<8x2xf32, #tpu.memory_space<smem>>
    %63 = vector.broadcast %62 : f32 to vector<16x128xf32>
    %64 = arith.mulf %60, %63 : vector<16x128xf32>
    %65 = arith.addf %50, %64 : vector<16x128xf32>
    %c1_13 = arith.constant 1 : index
    %c1_14 = arith.constant 1 : index
    %66 = memref.load %arg6[%c1_13, %c1_14] : memref<8x2xf32, #tpu.memory_space<smem>>
    %67 = vector.broadcast %66 : f32 to vector<16x128xf32>
    %68 = arith.mulf %60, %67 : vector<16x128xf32>
    %69 = arith.addf %53, %68 : vector<16x128xf32>
    %70 = vector.extract_strided_slice %9 {offsets = [0, 256], sizes = [16, 128], strides = [1, 1]} : vector<16x2048xf32> to vector<16x128xf32>
    %71 = vector.extract_strided_slice %9 {offsets = [0, 1280], sizes = [16, 128], strides = [1, 1]} : vector<16x2048xf32> to vector<16x128xf32>
    %72 = arith.subf %70, %40 : vector<16x128xf32>
    %73 = math.exp %72 : vector<16x128xf32>
    %74 = arith.subf %71, %40 : vector<16x128xf32>
    %75 = math.exp %74 : vector<16x128xf32>
    %76 = arith.addf %73, %75 : vector<16x128xf32>
    %77 = arith.addf %61, %76 : vector<16x128xf32>
    %c2 = arith.constant 2 : index
    %c0_15 = arith.constant 0 : index
    %78 = memref.load %arg6[%c2, %c0_15] : memref<8x2xf32, #tpu.memory_space<smem>>
    %79 = vector.broadcast %78 : f32 to vector<16x128xf32>
    %80 = arith.mulf %76, %79 : vector<16x128xf32>
    %81 = arith.addf %65, %80 : vector<16x128xf32>
    %c2_16 = arith.constant 2 : index
    %c1_17 = arith.constant 1 : index
    %82 = memref.load %arg6[%c2_16, %c1_17] : memref<8x2xf32, #tpu.memory_space<smem>>
    %83 = vector.broadcast %82 : f32 to vector<16x128xf32>
    %84 = arith.mulf %76, %83 : vector<16x128xf32>
    %85 = arith.addf %69, %84 : vector<16x128xf32>
    %86 = vector.extract_strided_slice %9 {offsets = [0, 384], sizes = [16, 128], strides = [1, 1]} : vector<16x2048xf32> to vector<16x128xf32>
    %87 = vector.extract_strided_slice %9 {offsets = [0, 1408], sizes = [16, 128], strides = [1, 1]} : vector<16x2048xf32> to vector<16x128xf32>
    %88 = arith.subf %86, %40 : vector<16x128xf32>
    %89 = math.exp %88 : vector<16x128xf32>
    %90 = arith.subf %87, %40 : vector<16x128xf32>
    %91 = math.exp %90 : vector<16x128xf32>
    %92 = arith.addf %89, %91 : vector<16x128xf32>
    %93 = arith.addf %77, %92 : vector<16x128xf32>
    %c3 = arith.constant 3 : index
    %c0_18 = arith.constant 0 : index
    %94 = memref.load %arg6[%c3, %c0_18] : memref<8x2xf32, #tpu.memory_space<smem>>
    %95 = vector.broadcast %94 : f32 to vector<16x128xf32>
    %96 = arith.mulf %92, %95 : vector<16x128xf32>
    %97 = arith.addf %81, %96 : vector<16x128xf32>
    %c3_19 = arith.constant 3 : index
    %c1_20 = arith.constant 1 : index
    %98 = memref.load %arg6[%c3_19, %c1_20] : memref<8x2xf32, #tpu.memory_space<smem>>
    %99 = vector.broadcast %98 : f32 to vector<16x128xf32>
    %100 = arith.mulf %92, %99 : vector<16x128xf32>
    %101 = arith.addf %85, %100 : vector<16x128xf32>
    %102 = vector.extract_strided_slice %9 {offsets = [0, 512], sizes = [16, 128], strides = [1, 1]} : vector<16x2048xf32> to vector<16x128xf32>
    %103 = vector.extract_strided_slice %9 {offsets = [0, 1536], sizes = [16, 128], strides = [1, 1]} : vector<16x2048xf32> to vector<16x128xf32>
    %104 = arith.subf %102, %40 : vector<16x128xf32>
    %105 = math.exp %104 : vector<16x128xf32>
    %106 = arith.subf %103, %40 : vector<16x128xf32>
    %107 = math.exp %106 : vector<16x128xf32>
    %108 = arith.addf %105, %107 : vector<16x128xf32>
    %109 = arith.addf %93, %108 : vector<16x128xf32>
    %c4 = arith.constant 4 : index
    %c0_21 = arith.constant 0 : index
    %110 = memref.load %arg6[%c4, %c0_21] : memref<8x2xf32, #tpu.memory_space<smem>>
    %111 = vector.broadcast %110 : f32 to vector<16x128xf32>
    %112 = arith.mulf %108, %111 : vector<16x128xf32>
    %113 = arith.addf %97, %112 : vector<16x128xf32>
    %c4_22 = arith.constant 4 : index
    %c1_23 = arith.constant 1 : index
    %114 = memref.load %arg6[%c4_22, %c1_23] : memref<8x2xf32, #tpu.memory_space<smem>>
    %115 = vector.broadcast %114 : f32 to vector<16x128xf32>
    %116 = arith.mulf %108, %115 : vector<16x128xf32>
    %117 = arith.addf %101, %116 : vector<16x128xf32>
    %118 = vector.extract_strided_slice %9 {offsets = [0, 640], sizes = [16, 128], strides = [1, 1]} : vector<16x2048xf32> to vector<16x128xf32>
    %119 = vector.extract_strided_slice %9 {offsets = [0, 1664], sizes = [16, 128], strides = [1, 1]} : vector<16x2048xf32> to vector<16x128xf32>
    %120 = arith.subf %118, %40 : vector<16x128xf32>
    %121 = math.exp %120 : vector<16x128xf32>
    %122 = arith.subf %119, %40 : vector<16x128xf32>
    %123 = math.exp %122 : vector<16x128xf32>
    %124 = arith.addf %121, %123 : vector<16x128xf32>
    %125 = arith.addf %109, %124 : vector<16x128xf32>
    %c5 = arith.constant 5 : index
    %c0_24 = arith.constant 0 : index
    %126 = memref.load %arg6[%c5, %c0_24] : memref<8x2xf32, #tpu.memory_space<smem>>
    %127 = vector.broadcast %126 : f32 to vector<16x128xf32>
    %128 = arith.mulf %124, %127 : vector<16x128xf32>
    %129 = arith.addf %113, %128 : vector<16x128xf32>
    %c5_25 = arith.constant 5 : index
    %c1_26 = arith.constant 1 : index
    %130 = memref.load %arg6[%c5_25, %c1_26] : memref<8x2xf32, #tpu.memory_space<smem>>
    %131 = vector.broadcast %130 : f32 to vector<16x128xf32>
    %132 = arith.mulf %124, %131 : vector<16x128xf32>
    %133 = arith.addf %117, %132 : vector<16x128xf32>
    %134 = vector.extract_strided_slice %9 {offsets = [0, 768], sizes = [16, 128], strides = [1, 1]} : vector<16x2048xf32> to vector<16x128xf32>
    %135 = vector.extract_strided_slice %9 {offsets = [0, 1792], sizes = [16, 128], strides = [1, 1]} : vector<16x2048xf32> to vector<16x128xf32>
    %136 = arith.subf %134, %40 : vector<16x128xf32>
    %137 = math.exp %136 : vector<16x128xf32>
    %138 = arith.subf %135, %40 : vector<16x128xf32>
    %139 = math.exp %138 : vector<16x128xf32>
    %140 = arith.addf %137, %139 : vector<16x128xf32>
    %141 = arith.addf %125, %140 : vector<16x128xf32>
    %c6 = arith.constant 6 : index
    %c0_27 = arith.constant 0 : index
    %142 = memref.load %arg6[%c6, %c0_27] : memref<8x2xf32, #tpu.memory_space<smem>>
    %143 = vector.broadcast %142 : f32 to vector<16x128xf32>
    %144 = arith.mulf %140, %143 : vector<16x128xf32>
    %145 = arith.addf %129, %144 : vector<16x128xf32>
    %c6_28 = arith.constant 6 : index
    %c1_29 = arith.constant 1 : index
    %146 = memref.load %arg6[%c6_28, %c1_29] : memref<8x2xf32, #tpu.memory_space<smem>>
    %147 = vector.broadcast %146 : f32 to vector<16x128xf32>
    %148 = arith.mulf %140, %147 : vector<16x128xf32>
    %149 = arith.addf %133, %148 : vector<16x128xf32>
    %150 = vector.extract_strided_slice %9 {offsets = [0, 896], sizes = [16, 128], strides = [1, 1]} : vector<16x2048xf32> to vector<16x128xf32>
    %151 = vector.extract_strided_slice %9 {offsets = [0, 1920], sizes = [16, 128], strides = [1, 1]} : vector<16x2048xf32> to vector<16x128xf32>
    %152 = arith.subf %150, %40 : vector<16x128xf32>
    %153 = math.exp %152 : vector<16x128xf32>
    %154 = arith.subf %151, %40 : vector<16x128xf32>
    %155 = math.exp %154 : vector<16x128xf32>
    %156 = arith.addf %153, %155 : vector<16x128xf32>
    %157 = arith.addf %141, %156 : vector<16x128xf32>
    %c7 = arith.constant 7 : index
    %c0_30 = arith.constant 0 : index
    %158 = memref.load %arg6[%c7, %c0_30] : memref<8x2xf32, #tpu.memory_space<smem>>
    %159 = vector.broadcast %158 : f32 to vector<16x128xf32>
    %160 = arith.mulf %156, %159 : vector<16x128xf32>
    %161 = arith.addf %145, %160 : vector<16x128xf32>
    %c7_31 = arith.constant 7 : index
    %c1_32 = arith.constant 1 : index
    %162 = memref.load %arg6[%c7_31, %c1_32] : memref<8x2xf32, #tpu.memory_space<smem>>
    %163 = vector.broadcast %162 : f32 to vector<16x128xf32>
    %164 = arith.mulf %156, %163 : vector<16x128xf32>
    %165 = arith.addf %149, %164 : vector<16x128xf32>
    %166 = tpu.reciprocal %157 {approx = true} : vector<16x128xf32> -> vector<16x128xf32>
    %167 = arith.mulf %157, %166 : vector<16x128xf32>
    %cst_33 = arith.constant 2.000000e+00 : f32
    %168 = vector.broadcast %cst_33 : f32 to vector<16x128xf32>
    %169 = arith.subf %168, %167 : vector<16x128xf32>
    %170 = arith.mulf %166, %169 : vector<16x128xf32>
    %c0_34 = arith.constant 0 : index
    %c0_35 = arith.constant 0 : index
    %171 = vector.load %arg5[%c0_34, %c0_35] : memref<1x128xf32, #tpu.memory_space<vmem>>, vector<1x128xf32>
    %172 = vector.broadcast %171 : vector<1x128xf32> to vector<16x128xf32>
    %173 = arith.mulf %170, %172 : vector<16x128xf32>
    %174 = arith.mulf %161, %173 : vector<16x128xf32>
    %cst_36 = arith.constant dense<0.000000e+00> : vector<16xf32>
    %175 = vector.multi_reduction <add>, %174, %cst_36 [1] : vector<16x128xf32> to vector<16xf32>
    %176 = vector.shape_cast %175 : vector<16xf32> to vector<16x1xf32>
    %c0_37 = arith.constant 0 : index
    %c0_38 = arith.constant 0 : index
    %177 = memref.load %arg7[%c0_37, %c0_38] : memref<1x2xf32, #tpu.memory_space<smem>>
    %178 = vector.broadcast %177 : f32 to vector<16x1xf32>
    %179 = arith.addf %176, %178 : vector<16x1xf32>
    %c0_39 = arith.constant 0 : index
    %c0_40 = arith.constant 0 : index
    %180 = vector.load %arg8[%c0_39, %c0_40] : memref<16x2xf32, #tpu.memory_space<vmem>>, vector<16x1xf32>
    tpu.vector_store %arg8[%c0_39, %c0_40], %179 {strides = array<i32>} : memref<16x2xf32, #tpu.memory_space<vmem>>, vector<16x1xf32>,
    %181 = arith.mulf %165, %173 : vector<16x128xf32>
    %cst_41 = arith.constant dense<0.000000e+00> : vector<16xf32>
    %182 = vector.multi_reduction <add>, %181, %cst_41 [1] : vector<16x128xf32> to vector<16xf32>
    %183 = vector.shape_cast %182 : vector<16xf32> to vector<16x1xf32>
    %c0_42 = arith.constant 0 : index
    %c1_43 = arith.constant 1 : index
    %184 = memref.load %arg7[%c0_42, %c1_43] : memref<1x2xf32, #tpu.memory_space<smem>>
    %185 = vector.broadcast %184 : f32 to vector<16x1xf32>
    %186 = arith.addf %183, %185 : vector<16x1xf32>
    %c0_44 = arith.constant 0 : index
    %c1_45 = arith.constant 1 : index
    %187 = vector.load %arg8[%c0_44, %c1_45] : memref<16x2xf32, #tpu.memory_space<vmem>>, vector<16x1xf32>
    tpu.vector_store %arg8[%c0_44, %c1_45], %186 {strides = array<i32>} : memref<16x2xf32, #tpu.memory_space<vmem>>, vector<16x1xf32>,
    return
  }
  func.func @transform_0(%arg0: i32) -> (i32, i32) {
    %c0_i32 = arith.constant 0 : i32
    %c0_i32_0 = arith.constant 0 : i32
    return %arg0, %c0_i32 : i32, i32
  }
  func.func @transform_1(%arg0: i32) -> (i32, i32) {
    %c0_i32 = arith.constant 0 : i32
    %c0_i32_0 = arith.constant 0 : i32
    %c0_i32_1 = arith.constant 0 : i32
    return %c0_i32, %c0_i32_0 : i32, i32
  }
  func.func @transform_2(%arg0: i32) -> (i32, i32) {
    %c0_i32 = arith.constant 0 : i32
    %c0_i32_0 = arith.constant 0 : i32
    %c0_i32_1 = arith.constant 0 : i32
    return %c0_i32, %c0_i32_0 : i32, i32
  }
  func.func @transform_3(%arg0: i32) -> (i32, i32) {
    %c0_i32 = arith.constant 0 : i32
    %c0_i32_0 = arith.constant 0 : i32
    %c0_i32_1 = arith.constant 0 : i32
    return %c0_i32, %c0_i32_0 : i32, i32
  }
  func.func @transform_4(%arg0: i32) -> (i32, i32) {
    %c0_i32 = arith.constant 0 : i32
    %c0_i32_0 = arith.constant 0 : i32
    %c0_i32_1 = arith.constant 0 : i32
    return %c0_i32, %c0_i32_0 : i32, i32
  }
  func.func @transform_5(%arg0: i32) -> (i32, i32) {
    %c0_i32 = arith.constant 0 : i32
    %c0_i32_0 = arith.constant 0 : i32
    %c0_i32_1 = arith.constant 0 : i32
    return %c0_i32, %c0_i32_0 : i32, i32
  }
  func.func @transform_6(%arg0: i32) -> (i32, i32) {
    %c0_i32 = arith.constant 0 : i32
    %c0_i32_0 = arith.constant 0 : i32
    %c0_i32_1 = arith.constant 0 : i32
    return %c0_i32, %c0_i32_0 : i32, i32
  }
  func.func @transform_7(%arg0: i32) -> (i32, i32) {
    %c0_i32 = arith.constant 0 : i32
    %c0_i32_0 = arith.constant 0 : i32
    return %arg0, %c0_i32 : i32, i32
  }
}

</mosaic_0001>

<llo_original>
// kernel: tpu_custom_call.1
$region0: #{tpu_custom_call.1}
  #allocation0 [shape = 'u32[]', space=smem, size = 0x4, offset = 0x4, fixed_abs, tag = 'smem constant byte address 0x4 - core index']
  #allocation1 [shape = 'u32[72,128]{1,0:T(1,128)}', space=vmem, size = 0x9000, scoped, tag = 'internal scratch']
  %s0 = inlined_call_operand.vmem [shape: f32[16,8], index: 0, kind: input, shape index: {}]
  %s1 = inlined_call_operand.hbm [shape: f32[8,2048], index: 1, kind: input, shape index: {}]
  %s2 = inlined_call_operand.hbm [shape: f32[8,2048], index: 2, kind: input, shape index: {}]
  %s3 = inlined_call_operand.vmem [shape: f32[1,2048], index: 3, kind: input, shape index: {}]
  %s4 = inlined_call_operand.vmem [shape: f32[1,128], index: 4, kind: input, shape index: {}]
  %s5 = inlined_call_operand.vmem [shape: f32[8,2], index: 5, kind: input, shape index: {}]
  %s6 = inlined_call_operand.vmem [shape: f32[1,2], index: 6, kind: input, shape index: {}]
  %s7 = inlined_call_operand.vmem [shape: f32[16,2], index: 7, kind: output, shape index: {}]
  %s8 = sld [smem:[#allocation0]]
  $region54: #{tpu_custom_call.1} parent=0
    _
  %s10 = ssub.s32 1, %s8
  %s11 = scalar_select 0, %s10, %s8
  $region1: #{tpu_custom_call.1} parent=0
    #allocation2 [shape = 'u8[65536]{0}', space=vmem, size = 0x10000, scoped, tag = 'input window, operand 1, single buffered']
    #allocation3 [shape = 's32[1]{0}', space=sflag, size = 0x4, scoped, tag = 'scoped memory for tpu_custom_call.1']
    #allocation4 [shape = 's32[1]{0}', space=sflag, size = 0x4, scoped, tag = 'scoped memory for tpu_custom_call.1']
    #allocation5 [shape = 'u8[65536]{0}', space=vmem, size = 0x10000, scoped, tag = 'input window, operand 2, single buffered']
    #allocation6 [shape = 's32[1]{0}', space=sflag, size = 0x4, scoped, tag = 'scoped memory for tpu_custom_call.1']
    #allocation7 [shape = 'u8[4096]{0}', space=smem, size = 0x1000, scoped, tag = 'input window, operand 5, single buffered']
    #allocation8 [shape = 'u8[512]{0}', space=smem, size = 0x200, scoped, tag = 'input window, operand 6, single buffered']
    #allocation9 [shape = 's32[1]{0}', space=sflag, size = 0x4, scoped, tag = 'scoped memory for tpu_custom_call.1']
    %12 = vsyncpa [#allocation3], 0
    %13 = vsyncpa [#allocation6], 0
    %14 = vsyncpa [#allocation4], 0
    %15 = vsyncpa [#allocation9], 0
    // Predicated region
    $region2: #{tpu_custom_call.1} parent=1 // pred_check
      _
    $region3: #{tpu_custom_call.1} parent=1 // pred_check_branch
      %17 = sbr.rel (0) target = $region5
    $region4: #{tpu_custom_call.1} parent=1 // pred_region
      _
    $region5: #{tpu_custom_call.1} parent=1 // pred_fallthru
      _
    // Predicated region
    $region6: #{tpu_custom_call.1} parent=1 // pred_check
      _
    $region7: #{tpu_custom_call.1} parent=1 // pred_check_branch
      %19 = sbr.rel (0) target = $region9
    $region8: #{tpu_custom_call.1} parent=1 // pred_region
      %21 = vsyncadd [#allocation3], 0
      %s23 = sshll.u32 %s1, 4
      %s24 = int_to_ptr.hbm [resolvable:$true] %s23
      %s25 = sshll.u32 [#allocation2], 4
      %s26 = int_to_ptr.vmem [resolvable:$true] %s25
      %28 = dma.hbm_to_vmem [thread:$0]  %s24, 2048, %s26, [#allocation3]
    $region9: #{tpu_custom_call.1} parent=1 // pred_fallthru
      _
    // Predicated region
    $region10: #{tpu_custom_call.1} parent=1 // pred_check
      _
    $region11: #{tpu_custom_call.1} parent=1 // pred_check_branch
      %30 = sbr.rel (0) target = $region13
    $region12: #{tpu_custom_call.1} parent=1 // pred_region
      %32 = vsyncadd [#allocation6], 0
      %s34 = sshll.u32 %s2, 4
      %s35 = int_to_ptr.hbm [resolvable:$true] %s34
      %s36 = sshll.u32 [#allocation5], 4
      %s37 = int_to_ptr.vmem [resolvable:$true] %s36
      %39 = dma.hbm_to_vmem [thread:$0]  %s35, 2048, %s37, [#allocation6]
    $region13: #{tpu_custom_call.1} parent=1 // pred_fallthru
      _
    // Predicated region
    $region14: #{tpu_custom_call.1} parent=1 // pred_check
      _
    $region15: #{tpu_custom_call.1} parent=1 // pred_check_branch
      %41 = sbr.rel (0) target = $region17
    $region16: #{tpu_custom_call.1} parent=1 // pred_region
      _
    $region17: #{tpu_custom_call.1} parent=1 // pred_fallthru
      _
    // Predicated region
    $region18: #{tpu_custom_call.1} parent=1 // pred_check
      _
    $region19: #{tpu_custom_call.1} parent=1 // pred_check_branch
      %43 = sbr.rel (0) target = $region21
    $region20: #{tpu_custom_call.1} parent=1 // pred_region
      _
    $region21: #{tpu_custom_call.1} parent=1 // pred_fallthru
      _
    // Predicated region
    $region22: #{tpu_custom_call.1} parent=1 // pred_check
      _
    $region23: #{tpu_custom_call.1} parent=1 // pred_check_branch
      %45 = sbr.rel (0) target = $region25
    $region24: #{tpu_custom_call.1} parent=1 // pred_region
      %47 = vsyncadd [#allocation4], 0
      %s49 = sshll.u32 %s5, 4
      %s50 = int_to_ptr.vmem [resolvable:$true] %s49
      %52 = dma.vmem_to_smem %s50, 128, [#allocation7], [#allocation4]
    $region25: #{tpu_custom_call.1} parent=1 // pred_fallthru
      _
    // Predicated region
    $region26: #{tpu_custom_call.1} parent=1 // pred_check
      _
    $region27: #{tpu_custom_call.1} parent=1 // pred_check_branch
      %54 = sbr.rel (0) target = $region29
    $region28: #{tpu_custom_call.1} parent=1 // pred_region
      %56 = vsyncadd [#allocation9], 0
      %s58 = sshll.u32 %s6, 4
      %s59 = int_to_ptr.vmem [resolvable:$true] %s58
      %61 = dma.vmem_to_smem %s59, 16, [#allocation8], [#allocation9]
    $region29: #{tpu_custom_call.1} parent=1 // pred_fallthru
      _
    // Predicated region
    $region30: #{tpu_custom_call.1} parent=1 // pred_check
      _
    $region31: #{tpu_custom_call.1} parent=1 // pred_check_branch
      %63 = sbr.rel (0) target = $region33
    $region32: #{tpu_custom_call.1} parent=1 // pred_region
      %65 = dma.done [#allocation3], 2048
    $region33: #{tpu_custom_call.1} parent=1 // pred_fallthru
      _
    // Predicated region
    $region34: #{tpu_custom_call.1} parent=1 // pred_check
      _
    $region35: #{tpu_custom_call.1} parent=1 // pred_check_branch
      %67 = sbr.rel (0) target = $region37
    $region36: #{tpu_custom_call.1} parent=1 // pred_region
      %69 = dma.done [#allocation6], 2048
    $region37: #{tpu_custom_call.1} parent=1 // pred_fallthru
      _
    // Predicated region
    $region38: #{tpu_custom_call.1} parent=1 // pred_check
      _
    $region39: #{tpu_custom_call.1} parent=1 // pred_check_branch
      %71 = sbr.rel (0) target = $region41
    $region40: #{tpu_custom_call.1} parent=1 // pred_region
      %73 = dma.done [#allocation4], 128
    $region41: #{tpu_custom_call.1} parent=1 // pred_fallthru
      _
    // Predicated region
    $region42: #{tpu_custom_call.1} parent=1 // pred_check
      _
    $region43: #{tpu_custom_call.1} parent=1 // pred_check_branch
      %75 = sbr.rel (0) target = $region45
    $region44: #{tpu_custom_call.1} parent=1 // pred_region
      %77 = dma.done [#allocation9], 16
    $region45: #{tpu_custom_call.1} parent=1 // pred_fallthru
      _
    %78 = sfence
    %v79 = vld [vmem:[%s0] sm:$0xff]
    %v80 = vld [vmem:[%s0 + $0x8] sm:$0xff]
    %v81 = vmul.f32 %v79, %v79
    %v82 = vmul.f32 %v80, %v80
    %v83 = vld [vmem:[#allocation2] sm:$0xff]
    %v84 = vld [vmem:[#allocation2 + $0x8] sm:$0xff]
    %v85 = vld [vmem:[#allocation2 + $0x10] sm:$0xff]
    %v86 = vld [vmem:[#allocation2 + $0x18] sm:$0xff]
    %v87 = vld [vmem:[#allocation2 + $0x20] sm:$0xff]
    %v88 = vld [vmem:[#allocation2 + $0x28] sm:$0xff]
    %v89 = vld [vmem:[#allocation2 + $0x30] sm:$0xff]
    %v90 = vld [vmem:[#allocation2 + $0x38] sm:$0xff]
    %v91 = vld [vmem:[#allocation2 + $0x40] sm:$0xff]
    %v92 = vld [vmem:[#allocation2 + $0x48] sm:$0xff]
    %v93 = vld [vmem:[#allocation2 + $0x50] sm:$0xff]
    %v94 = vld [vmem:[#allocation2 + $0x58] sm:$0xff]
    %v95 = vld [vmem:[#allocation2 + $0x60] sm:$0xff]
    %v96 = vld [vmem:[#allocation2 + $0x68] sm:$0xff]
    %v97 = vld [vmem:[#allocation2 + $0x70] sm:$0xff]
    %v98 = vld [vmem:[#allocation2 + $0x78] sm:$0xff]
    %v99 = vld [vmem:[#allocation5] sm:$0xff]
    %v100 = vld [vmem:[#allocation5 + $0x8] sm:$0xff]
    %v101 = vld [vmem:[#allocation5 + $0x10] sm:$0xff]
    %v102 = vld [vmem:[#allocation5 + $0x18] sm:$0xff]
    %v103 = vld [vmem:[#allocation5 + $0x20] sm:$0xff]
    %v104 = vld [vmem:[#allocation5 + $0x28] sm:$0xff]
    %v105 = vld [vmem:[#allocation5 + $0x30] sm:$0xff]
    %v106 = vld [vmem:[#allocation5 + $0x38] sm:$0xff]
    %v107 = vld [vmem:[#allocation5 + $0x40] sm:$0xff]
    %v108 = vld [vmem:[#allocation5 + $0x48] sm:$0xff]
    %v109 = vld [vmem:[#allocation5 + $0x50] sm:$0xff]
    %v110 = vld [vmem:[#allocation5 + $0x58] sm:$0xff]
    %v111 = vld [vmem:[#allocation5 + $0x60] sm:$0xff]
    %v112 = vld [vmem:[#allocation5 + $0x68] sm:$0xff]
    %v113 = vld [vmem:[#allocation5 + $0x70] sm:$0xff]
    %v114 = vld [vmem:[#allocation5 + $0x78] sm:$0xff]
    %vm115 = vcmask 64512
    %v117 = vsel %vm115, %v79, 0
    %v120 = vsel %vm115, %v80, 0
    %122 = vmatpush.msra.mxu0 0.0
    %123 = vmatpush.msra.mxu0 0.0
    %124 = vmatpush.msra.mxu0 0.0
    %125 = vmatpush.msra.mxu0 0.0
    %126 = vmatpush.msra.mxu0 0.0
    %127 = vmatpush.msra.mxu0 0.0
    %128 = vmatpush.msra.mxu0 0.0
    %129 = vmatpush.msra.mxu0 0.0
    %130 = vmatpush.msra.mxu0 0.0
    %131 = vmatpush.msra.mxu0 0.0
    %132 = vmatpush.msra.mxu0 0.0
    %133 = vmatpush.msra.mxu0 0.0
    %134 = vmatpush.msra.mxu0 0.0
    %135 = vmatpush.msra.mxu0 0.0
    %136 = vmatpush.msra.mxu0 0.0
    %v137 = vand.u32 %v99, 4294901760
    %138 = vmatpush.msra.mxu0 %v137
    %v139 = vand.u32 %v117, 4294901760
    %v140 = vsub.f32 %v117, %v139
    %v141 = vand.u32 %v140, 4294901760
    %v142 = vsub.f32 %v140, %v141
    %v143 = vand.u32 %v142, 4294901760
    %144 = vmatmul.f32.gmra.mxu0 %v143
    %v145 = vpop.f32.mrf.mxu0
    %v146 = vadd.f32 0.0, %v145
    %v147 = vand.u32 %v120, 4294901760
    %v148 = vsub.f32 %v120, %v147
    %v149 = vand.u32 %v148, 4294901760
    %v150 = vsub.f32 %v148, %v149
    %v151 = vand.u32 %v150, 4294901760
    %152 = vmatmul.f32.gmra.mxu0 %v151
    %v153 = vpop.f32.mrf.mxu0
    %v154 = vadd.f32 0.0, %v153
    %155 = vdwg.mxu0
    %156 = vmatpush.msra.mxu0 0.0
    %157 = vmatpush.msra.mxu0 0.0
    %158 = vmatpush.msra.mxu0 0.0
    %159 = vmatpush.msra.mxu0 0.0
    %160 = vmatpush.msra.mxu0 0.0
    %161 = vmatpush.msra.mxu0 0.0
    %162 = vmatpush.msra.mxu0 0.0
    %163 = vmatpush.msra.mxu0 0.0
    %164 = vmatpush.msra.mxu0 0.0
    %165 = vmatpush.msra.mxu0 0.0
    %166 = vmatpush.msra.mxu0 0.0
    %167 = vmatpush.msra.mxu0 0.0
    %168 = vmatpush.msra.mxu0 0.0
    %169 = vmatpush.msra.mxu0 0.0
    %170 = vmatpush.msra.mxu0 0.0
    %v171 = vand.u32 %v99, 4294901760
    %v172 = vsub.f32 %v99, %v171
    %v173 = vand.u32 %v172, 4294901760
    %v174 = vsub.f32 %v172, %v173
    %v175 = vand.u32 %v174, 4294901760
    %176 = vmatpush.msra.mxu0 %v175
    %v177 = vand.u32 %v117, 4294901760
    %178 = vmatmul.f32.gmra.mxu0 %v177
    %v179 = vpop.f32.mrf.mxu0
    %v180 = vadd.f32 %v146, %v179
    %v181 = vand.u32 %v120, 4294901760
    %182 = vmatmul.f32.gmra.mxu0 %v181
    %v183 = vpop.f32.mrf.mxu0
    %v184 = vadd.f32 %v154, %v183
    %185 = vdwg.mxu0
    %186 = vmatpush.msra.mxu0 0.0
    %187 = vmatpush.msra.mxu0 0.0
    %188 = vmatpush.msra.mxu0 0.0
    %189 = vmatpush.msra.mxu0 0.0
    %190 = vmatpush.msra.mxu0 0.0
    %191 = vmatpush.msra.mxu0 0.0
    %192 = vmatpush.msra.mxu0 0.0
    %193 = vmatpush.msra.mxu0 0.0
    %194 = vmatpush.msra.mxu0 0.0
    %195 = vmatpush.msra.mxu0 0.0
    %196 = vmatpush.msra.mxu0 0.0
    %197 = vmatpush.msra.mxu0 0.0
    %198 = vmatpush.msra.mxu0 0.0
    %199 = vmatpush.msra.mxu0 0.0
    %200 = vmatpush.msra.mxu0 0.0
    %v201 = vand.u32 %v99, 4294901760
    %v202 = vsub.f32 %v99, %v201
    %203 = vmatpush.msra.mxu0 %v202
    %v204 = vand.u32 %v117, 4294901760
    %v205 = vsub.f32 %v117, %v204
    %206 = vmatmul.f32.gmra.mxu0 %v205
    %v207 = vpop.f32.mrf.mxu0
    %v208 = vadd.f32 %v180, %v207
    %v209 = vand.u32 %v120, 4294901760
    %v210 = vsub.f32 %v120, %v209
    %211 = vmatmul.f32.gmra.mxu0 %v210
    %v212 = vpop.f32.mrf.mxu0
    %v213 = vadd.f32 %v184, %v212
    %214 = vdwg.mxu0
    %215 = vmatpush.msra.mxu0 0.0
    %216 = vmatpush.msra.mxu0 0.0
    %217 = vmatpush.msra.mxu0 0.0
    %218 = vmatpush.msra.mxu0 0.0
    %219 = vmatpush.msra.mxu0 0.0
    %220 = vmatpush.msra.mxu0 0.0
    %221 = vmatpush.msra.mxu0 0.0
    %222 = vmatpush.msra.mxu0 0.0
    %223 = vmatpush.msra.mxu0 0.0
    %224 = vmatpush.msra.mxu0 0.0
    %225 = vmatpush.msra.mxu0 0.0
    %226 = vmatpush.msra.mxu0 0.0
    %227 = vmatpush.msra.mxu0 0.0
    %228 = vmatpush.msra.mxu0 0.0
    %229 = vmatpush.msra.mxu0 0.0
    %v230 = vand.u32 %v99, 4294901760
    %231 = vmatpush.msra.mxu0 %v230
    %v232 = vand.u32 %v117, 4294901760
    %v233 = vsub.f32 %v117, %v232
    %v234 = vand.u32 %v233, 4294901760
    %235 = vmatmul.f32.gmra.mxu0 %v234
    %v236 = vpop.f32.mrf.mxu0
    %v237 = vadd.f32 %v208, %v236
    %v238 = vand.u32 %v120, 4294901760
    %v239 = vsub.f32 %v120, %v238
    %v240 = vand.u32 %v239, 4294901760
    %241 = vmatmul.f32.gmra.mxu0 %v240
    %v242 = vpop.f32.mrf.mxu0
    %v243 = vadd.f32 %v213, %v242
    %244 = vdwg.mxu0
    %245 = vmatpush.msra.mxu0 0.0
    %246 = vmatpush.msra.mxu0 0.0
    %247 = vmatpush.msra.mxu0 0.0
    %248 = vmatpush.msra.mxu0 0.0
    %249 = vmatpush.msra.mxu0 0.0
    %250 = vmatpush.msra.mxu0 0.0
    %251 = vmatpush.msra.mxu0 0.0
    %252 = vmatpush.msra.mxu0 0.0
    %253 = vmatpush.msra.mxu0 0.0
    %254 = vmatpush.msra.mxu0 0.0
    %255 = vmatpush.msra.mxu0 0.0
    %256 = vmatpush.msra.mxu0 0.0
    %257 = vmatpush.msra.mxu0 0.0
    %258 = vmatpush.msra.mxu0 0.0
    %259 = vmatpush.msra.mxu0 0.0
    %v260 = vand.u32 %v99, 4294901760
    %v261 = vsub.f32 %v99, %v260
    %v262 = vand.u32 %v261, 4294901760
    %263 = vmatpush.msra.mxu0 %v262
    %v264 = vand.u32 %v117, 4294901760
    %265 = vmatmul.f32.gmra.mxu0 %v264
    %v266 = vpop.f32.mrf.mxu0
    %v267 = vadd.f32 %v237, %v266
    %v268 = vand.u32 %v120, 4294901760
    %269 = vmatmul.f32.gmra.mxu0 %v268
    %v270 = vpop.f32.mrf.mxu0
    %v271 = vadd.f32 %v243, %v270
    %272 = vdwg.mxu0
    %273 = vmatpush.msra.mxu0 0.0
    %274 = vmatpush.msra.mxu0 0.0
    %275 = vmatpush.msra.mxu0 0.0
    %276 = vmatpush.msra.mxu0 0.0
    %277 = vmatpush.msra.mxu0 0.0
    %278 = vmatpush.msra.mxu0 0.0
    %279 = vmatpush.msra.mxu0 0.0
    %280 = vmatpush.msra.mxu0 0.0
    %281 = vmatpush.msra.mxu0 0.0
    %282 = vmatpush.msra.mxu0 0.0
    %283 = vmatpush.msra.mxu0 0.0
    %284 = vmatpush.msra.mxu0 0.0
    %285 = vmatpush.msra.mxu0 0.0
    %286 = vmatpush.msra.mxu0 0.0
    %287 = vmatpush.msra.mxu0 0.0
    %v288 = vand.u32 %v99, 4294901760
    %289 = vmatpush.msra.mxu0 %v288
    %v290 = vand.u32 %v117, 4294901760
    %291 = vmatmul.f32.gmra.mxu0 %v290
    %v292 = vpop.f32.mrf.mxu0
    %v293 = vadd.f32 %v267, %v292
    %v294 = vand.u32 %v120, 4294901760
    %295 = vmatmul.f32.gmra.mxu0 %v294
    %v296 = vpop.f32.mrf.mxu0
    %v297 = vadd.f32 %v271, %v296
    %298 = vdwg.mxu0
    %299 = vmatpush.msra.mxu0 0.0
    %300 = vmatpush.msra.mxu0 0.0
    %301 = vmatpush.msra.mxu0 0.0
    %302 = vmatpush.msra.mxu0 0.0
    %303 = vmatpush.msra.mxu0 0.0
    %304 = vmatpush.msra.mxu0 0.0
    %305 = vmatpush.msra.mxu0 0.0
    %306 = vmatpush.msra.mxu0 0.0
    %307 = vmatpush.msra.mxu0 0.0
    %308 = vmatpush.msra.mxu0 0.0
    %309 = vmatpush.msra.mxu0 0.0
    %310 = vmatpush.msra.mxu0 0.0
    %311 = vmatpush.msra.mxu0 0.0
    %312 = vmatpush.msra.mxu0 0.0
    %313 = vmatpush.msra.mxu0 0.0
    %v314 = vand.u32 %v100, 4294901760
    %315 = vmatpush.msra.mxu0 %v314
    %v316 = vand.u32 %v117, 4294901760
    %v317 = vsub.f32 %v117, %v316
    %v318 = vand.u32 %v317, 4294901760
    %v319 = vsub.f32 %v317, %v318
    %v320 = vand.u32 %v319, 4294901760
    %321 = vmatmul.f32.gmra.mxu0 %v320
    %v322 = vpop.f32.mrf.mxu0
    %v323 = vadd.f32 0.0, %v322
    %v324 = vand.u32 %v120, 4294901760
    %v325 = vsub.f32 %v120, %v324
    %v326 = vand.u32 %v325, 4294901760
    %v327 = vsub.f32 %v325, %v326
    %v328 = vand.u32 %v327, 4294901760
    %329 = vmatmul.f32.gmra.mxu0 %v328
    %v330 = vpop.f32.mrf.mxu0
    %v331 = vadd.f32 0.0, %v330
    %332 = vdwg.mxu0
    %333 = vmatpush.msra.mxu0 0.0
    %334 = vmatpush.msra.mxu0 0.0
    %335 = vmatpush.msra.mxu0 0.0
    %336 = vmatpush.msra.mxu0 0.0
    %337 = vmatpush.msra.mxu0 0.0
    %338 = vmatpush.msra.mxu0 0.0
    %339 = vmatpush.msra.mxu0 0.0
    %340 = vmatpush.msra.mxu0 0.0
    %341 = vmatpush.msra.mxu0 0.0
    %342 = vmatpush.msra.mxu0 0.0
    %343 = vmatpush.msra.mxu0 0.0
    %344 = vmatpush.msra.mxu0 0.0
    %345 = vmatpush.msra.mxu0 0.0
    %346 = vmatpush.msra.mxu0 0.0
    %347 = vmatpush.msra.mxu0 0.0
    %v348 = vand.u32 %v100, 4294901760
    %v349 = vsub.f32 %v100, %v348
    %v350 = vand.u32 %v349, 4294901760
    %v351 = vsub.f32 %v349, %v350
    %v352 = vand.u32 %v351, 4294901760
    %353 = vmatpush.msra.mxu0 %v352
    %v354 = vand.u32 %v117, 4294901760
    %355 = vmatmul.f32.gmra.mxu0 %v354
    %v356 = vpop.f32.mrf.mxu0
    %v357 = vadd.f32 %v323, %v356
    %v358 = vand.u32 %v120, 4294901760
    %359 = vmatmul.f32.gmra.mxu0 %v358
    %v360 = vpop.f32.mrf.mxu0
    %v361 = vadd.f32 %v331, %v360
    %362 = vdwg.mxu0
    %363 = vmatpush.msra.mxu0 0.0
    %364 = vmatpush.msra.mxu0 0.0
    %365 = vmatpush.msra.mxu0 0.0
    %366 = vmatpush.msra.mxu0 0.0
    %367 = vmatpush.msra.mxu0 0.0
    %368 = vmatpush.msra.mxu0 0.0
    %369 = vmatpush.msra.mxu0 0.0
    %370 = vmatpush.msra.mxu0 0.0
    %371 = vmatpush.msra.mxu0 0.0
    %372 = vmatpush.msra.mxu0 0.0
    %373 = vmatpush.msra.mxu0 0.0
    %374 = vmatpush.msra.mxu0 0.0
    %375 = vmatpush.msra.mxu0 0.0
    %376 = vmatpush.msra.mxu0 0.0
    %377 = vmatpush.msra.mxu0 0.0
    %v378 = vand.u32 %v100, 4294901760
    %v379 = vsub.f32 %v100, %v378
    %380 = vmatpush.msra.mxu0 %v379
    %v381 = vand.u32 %v117, 4294901760
    %v382 = vsub.f32 %v117, %v381
    %383 = vmatmul.f32.gmra.mxu0 %v382
    %v384 = vpop.f32.mrf.mxu0
    %v385 = vadd.f32 %v357, %v384
    %v386 = vand.u32 %v120, 4294901760
    %v387 = vsub.f32 %v120, %v386
    %388 = vmatmul.f32.gmra.mxu0 %v387
    %v389 = vpop.f32.mrf.mxu0
    %v390 = vadd.f32 %v361, %v389
    %391 = vdwg.mxu0
    %392 = vmatpush.msra.mxu0 0.0
    %393 = vmatpush.msra.mxu0 0.0
    %394 = vmatpush.msra.mxu0 0.0
    %395 = vmatpush.msra.mxu0 0.0
    %396 = vmatpush.msra.mxu0 0.0
    %397 = vmatpush.msra.mxu0 0.0
    %398 = vmatpush.msra.mxu0 0.0
    %399 = vmatpush.msra.mxu0 0.0
    %400 = vmatpush.msra.mxu0 0.0
    %401 = vmatpush.msra.mxu0 0.0
    %402 = vmatpush.msra.mxu0 0.0
    %403 = vmatpush.msra.mxu0 0.0
    %404 = vmatpush.msra.mxu0 0.0
    %405 = vmatpush.msra.mxu0 0.0
    %406 = vmatpush.msra.mxu0 0.0
    %v407 = vand.u32 %v100, 4294901760
    %408 = vmatpush.msra.mxu0 %v407
    %v409 = vand.u32 %v117, 4294901760
    %v410 = vsub.f32 %v117, %v409
    %v411 = vand.u32 %v410, 4294901760
    %412 = vmatmul.f32.gmra.mxu0 %v411
    %v413 = vpop.f32.mrf.mxu0
    %v414 = vadd.f32 %v385, %v413
    %v415 = vand.u32 %v120, 4294901760
    %v416 = vsub.f32 %v120, %v415
    %v417 = vand.u32 %v416, 4294901760
    %418 = vmatmul.f32.gmra.mxu0 %v417
    %v419 = vpop.f32.mrf.mxu0
    %v420 = vadd.f32 %v390, %v419
    %421 = vdwg.mxu0
    %422 = vmatpush.msra.mxu0 0.0
    %423 = vmatpush.msra.mxu0 0.0
    %424 = vmatpush.msra.mxu0 0.0
    %425 = vmatpush.msra.mxu0 0.0
    %426 = vmatpush.msra.mxu0 0.0
    %427 = vmatpush.msra.mxu0 0.0
    %428 = vmatpush.msra.mxu0 0.0
    %429 = vmatpush.msra.mxu0 0.0
    %430 = vmatpush.msra.mxu0 0.0
    %431 = vmatpush.msra.mxu0 0.0
    %432 = vmatpush.msra.mxu0 0.0
    %433 = vmatpush.msra.mxu0 0.0
    %434 = vmatpush.msra.mxu0 0.0
    %435 = vmatpush.msra.mxu0 0.0
    %436 = vmatpush.msra.mxu0 0.0
    %v437 = vand.u32 %v100, 4294901760
    %v438 = vsub.f32 %v100, %v437
    %v439 = vand.u32 %v438, 4294901760
    %440 = vmatpush.msra.mxu0 %v439
    %v441 = vand.u32 %v117, 4294901760
    %442 = vmatmul.f32.gmra.mxu0 %v441
    %v443 = vpop.f32.mrf.mxu0
    %v444 = vadd.f32 %v414, %v443
    %v445 = vand.u32 %v120, 4294901760
    %446 = vmatmul.f32.gmra.mxu0 %v445
    %v447 = vpop.f32.mrf.mxu0
    %v448 = vadd.f32 %v420, %v447
    %449 = vdwg.mxu0
    %450 = vmatpush.msra.mxu0 0.0
    %451 = vmatpush.msra.mxu0 0.0
    %452 = vmatpush.msra.mxu0 0.0
    %453 = vmatpush.msra.mxu0 0.0
    %454 = vmatpush.msra.mxu0 0.0
    %455 = vmatpush.msra.mxu0 0.0
    %456 = vmatpush.msra.mxu0 0.0
    %457 = vmatpush.msra.mxu0 0.0
    %458 = vmatpush.msra.mxu0 0.0
    %459 = vmatpush.msra.mxu0 0.0
    %460 = vmatpush.msra.mxu0 0.0
    %461 = vmatpush.msra.mxu0 0.0
    %462 = vmatpush.msra.mxu0 0.0
    %463 = vmatpush.msra.mxu0 0.0
    %464 = vmatpush.msra.mxu0 0.0
    %v465 = vand.u32 %v100, 4294901760
    %466 = vmatpush.msra.mxu0 %v465
    %v467 = vand.u32 %v117, 4294901760
    %468 = vmatmul.f32.gmra.mxu0 %v467
    %v469 = vpop.f32.mrf.mxu0
    %v470 = vadd.f32 %v444, %v469
    %v471 = vand.u32 %v120, 4294901760
    %472 = vmatmul.f32.gmra.mxu0 %v471
    %v473 = vpop.f32.mrf.mxu0
    %v474 = vadd.f32 %v448, %v473
    %475 = vdwg.mxu0
    %476 = vmatpush.msra.mxu0 0.0
    %477 = vmatpush.msra.mxu0 0.0
    %478 = vmatpush.msra.mxu0 0.0
    %479 = vmatpush.msra.mxu0 0.0
    %480 = vmatpush.msra.mxu0 0.0
    %481 = vmatpush.msra.mxu0 0.0
    %482 = vmatpush.msra.mxu0 0.0
    %483 = vmatpush.msra.mxu0 0.0
    %484 = vmatpush.msra.mxu0 0.0
    %485 = vmatpush.msra.mxu0 0.0
    %486 = vmatpush.msra.mxu0 0.0
    %487 = vmatpush.msra.mxu0 0.0
    %488 = vmatpush.msra.mxu0 0.0
    %489 = vmatpush.msra.mxu0 0.0
    %490 = vmatpush.msra.mxu0 0.0
    %v491 = vand.u32 %v101, 4294901760
    %492 = vmatpush.msra.mxu0 %v491
    %v493 = vand.u32 %v117, 4294901760
    %v494 = vsub.f32 %v117, %v493
    %v495 = vand.u32 %v494, 4294901760
    %v496 = vsub.f32 %v494, %v495
    %v497 = vand.u32 %v496, 4294901760
    %498 = vmatmul.f32.gmra.mxu0 %v497
    %v499 = vpop.f32.mrf.mxu0
    %v500 = vadd.f32 0.0, %v499
    %v501 = vand.u32 %v120, 4294901760
    %v502 = vsub.f32 %v120, %v501
    %v503 = vand.u32 %v502, 4294901760
    %v504 = vsub.f32 %v502, %v503
    %v505 = vand.u32 %v504, 4294901760
    %506 = vmatmul.f32.gmra.mxu0 %v505
    %v507 = vpop.f32.mrf.mxu0
    %v508 = vadd.f32 0.0, %v507
    %509 = vdwg.mxu0
    %510 = vmatpush.msra.mxu0 0.0
    %511 = vmatpush.msra.mxu0 0.0
    %512 = vmatpush.msra.mxu0 0.0
    %513 = vmatpush.msra.mxu0 0.0
    %514 = vmatpush.msra.mxu0 0.0
    %515 = vmatpush.msra.mxu0 0.0
    %516 = vmatpush.msra.mxu0 0.0
    %517 = vmatpush.msra.mxu0 0.0
    %518 = vmatpush.msra.mxu0 0.0
    %519 = vmatpush.msra.mxu0 0.0
    %520 = vmatpush.msra.mxu0 0.0
    %521 = vmatpush.msra.mxu0 0.0
    %522 = vmatpush.msra.mxu0 0.0
    %523 = vmatpush.msra.mxu0 0.0
    %524 = vmatpush.msra.mxu0 0.0
    %v525 = vand.u32 %v101, 4294901760
    %v526 = vsub.f32 %v101, %v525
    %v527 = vand.u32 %v526, 4294901760
    %v528 = vsub.f32 %v526, %v527
    %v529 = vand.u32 %v528, 4294901760
    %530 = vmatpush.msra.mxu0 %v529
    %v531 = vand.u32 %v117, 4294901760
    %532 = vmatmul.f32.gmra.mxu0 %v531
    %v533 = vpop.f32.mrf.mxu0
    %v534 = vadd.f32 %v500, %v533
    %v535 = vand.u32 %v120, 4294901760
    %536 = vmatmul.f32.gmra.mxu0 %v535
    %v537 = vpop.f32.mrf.mxu0
    %v538 = vadd.f32 %v508, %v537
    %539 = vdwg.mxu0
    %540 = vmatpush.msra.mxu0 0.0
    %541 = vmatpush.msra.mxu0 0.0
    %542 = vmatpush.msra.mxu0 0.0
    %543 = vmatpush.msra.mxu0 0.0
    %544 = vmatpush.msra.mxu0 0.0
    %545 = vmatpush.msra.mxu0 0.0
    %546 = vmatpush.msra.mxu0 0.0
    %547 = vmatpush.msra.mxu0 0.0
    %548 = vmatpush.msra.mxu0 0.0
    %549 = vmatpush.msra.mxu0 0.0
    %550 = vmatpush.msra.mxu0 0.0
    %551 = vmatpush.msra.mxu0 0.0
    %552 = vmatpush.msra.mxu0 0.0
    %553 = vmatpush.msra.mxu0 0.0
    %554 = vmatpush.msra.mxu0 0.0
    %v555 = vand.u32 %v101, 4294901760
    %v556 = vsub.f32 %v101, %v555
    %557 = vmatpush.msra.mxu0 %v556
    %v558 = vand.u32 %v117, 4294901760
    %v559 = vsub.f32 %v117, %v558
    %560 = vmatmul.f32.gmra.mxu0 %v559
    %v561 = vpop.f32.mrf.mxu0
    %v562 = vadd.f32 %v534, %v561
    %v563 = vand.u32 %v120, 4294901760
    %v564 = vsub.f32 %v120, %v563
    %565 = vmatmul.f32.gmra.mxu0 %v564
    %v566 = vpop.f32.mrf.mxu0
    %v567 = vadd.f32 %v538, %v566
    %568 = vdwg.mxu0
    %569 = vmatpush.msra.mxu0 0.0
    %570 = vmatpush.msra.mxu0 0.0
    %571 = vmatpush.msra.mxu0 0.0
    %572 = vmatpush.msra.mxu0 0.0
    %573 = vmatpush.msra.mxu0 0.0
    %574 = vmatpush.msra.mxu0 0.0
    %575 = vmatpush.msra.mxu0 0.0
    %576 = vmatpush.msra.mxu0 0.0
    %577 = vmatpush.msra.mxu0 0.0
    %578 = vmatpush.msra.mxu0 0.0
    %579 = vmatpush.msra.mxu0 0.0
    %580 = vmatpush.msra.mxu0 0.0
    %581 = vmatpush.msra.mxu0 0.0
    %582 = vmatpush.msra.mxu0 0.0
    %583 = vmatpush.msra.mxu0 0.0
    %v584 = vand.u32 %v101, 4294901760
    %585 = vmatpush.msra.mxu0 %v584
    %v586 = vand.u32 %v117, 4294901760
    %v587 = vsub.f32 %v117, %v586
    %v588 = vand.u32 %v587, 4294901760
    %589 = vmatmul.f32.gmra.mxu0 %v588
    %v590 = vpop.f32.mrf.mxu0
    %v591 = vadd.f32 %v562, %v590
    %v592 = vand.u32 %v120, 4294901760
    %v593 = vsub.f32 %v120, %v592
    %v594 = vand.u32 %v593, 4294901760
    %595 = vmatmul.f32.gmra.mxu0 %v594
    %v596 = vpop.f32.mrf.mxu0
    %v597 = vadd.f32 %v567, %v596
    %598 = vdwg.mxu0
    %599 = vmatpush.msra.mxu0 0.0
    %600 = vmatpush.msra.mxu0 0.0
    %601 = vmatpush.msra.mxu0 0.0
    %602 = vmatpush.msra.mxu0 0.0
    %603 = vmatpush.msra.mxu0 0.0
    %604 = vmatpush.msra.mxu0 0.0
    %605 = vmatpush.msra.mxu0 0.0
    %606 = vmatpush.msra.mxu0 0.0
    %607 = vmatpush.msra.mxu0 0.0
    %608 = vmatpush.msra.mxu0 0.0
    %609 = vmatpush.msra.mxu0 0.0
    %610 = vmatpush.msra.mxu0 0.0
    %611 = vmatpush.msra.mxu0 0.0
    %612 = vmatpush.msra.mxu0 0.0
    %613 = vmatpush.msra.mxu0 0.0
    %v614 = vand.u32 %v101, 4294901760
    %v615 = vsub.f32 %v101, %v614
    %v616 = vand.u32 %v615, 4294901760
    %617 = vmatpush.msra.mxu0 %v616
    %v618 = vand.u32 %v117, 4294901760
    %619 = vmatmul.f32.gmra.mxu0 %v618
    %v620 = vpop.f32.mrf.mxu0
    %v621 = vadd.f32 %v591, %v620
    %v622 = vand.u32 %v120, 4294901760
    %623 = vmatmul.f32.gmra.mxu0 %v622
    %v624 = vpop.f32.mrf.mxu0
    %v625 = vadd.f32 %v597, %v624
    %626 = vdwg.mxu0
    %627 = vmatpush.msra.mxu0 0.0
    %628 = vmatpush.msra.mxu0 0.0
    %629 = vmatpush.msra.mxu0 0.0
    %630 = vmatpush.msra.mxu0 0.0
    %631 = vmatpush.msra.mxu0 0.0
    %632 = vmatpush.msra.mxu0 0.0
    %633 = vmatpush.msra.mxu0 0.0
    %634 = vmatpush.msra.mxu0 0.0
    %635 = vmatpush.msra.mxu0 0.0
    %636 = vmatpush.msra.mxu0 0.0
    %637 = vmatpush.msra.mxu0 0.0
    %638 = vmatpush.msra.mxu0 0.0
    %639 = vmatpush.msra.mxu0 0.0
    %640 = vmatpush.msra.mxu0 0.0
    %641 = vmatpush.msra.mxu0 0.0
    %v642 = vand.u32 %v101, 4294901760
    %643 = vmatpush.msra.mxu0 %v642
    %v644 = vand.u32 %v117, 4294901760
    %645 = vmatmul.f32.gmra.mxu0 %v644
    %v646 = vpop.f32.mrf.mxu0
    %v647 = vadd.f32 %v621, %v646
    %v648 = vand.u32 %v120, 4294901760
    %649 = vmatmul.f32.gmra.mxu0 %v648
    %v650 = vpop.f32.mrf.mxu0
    %v651 = vadd.f32 %v625, %v650
    %652 = vdwg.mxu0
    %653 = vmatpush.msra.mxu0 0.0
    %654 = vmatpush.msra.mxu0 0.0
    %655 = vmatpush.msra.mxu0 0.0
    %656 = vmatpush.msra.mxu0 0.0
    %657 = vmatpush.msra.mxu0 0.0
    %658 = vmatpush.msra.mxu0 0.0
    %659 = vmatpush.msra.mxu0 0.0
    %660 = vmatpush.msra.mxu0 0.0
    %661 = vmatpush.msra.mxu0 0.0
    %662 = vmatpush.msra.mxu0 0.0
    %663 = vmatpush.msra.mxu0 0.0
    %664 = vmatpush.msra.mxu0 0.0
    %665 = vmatpush.msra.mxu0 0.0
    %666 = vmatpush.msra.mxu0 0.0
    %667 = vmatpush.msra.mxu0 0.0
    %v668 = vand.u32 %v102, 4294901760
    %669 = vmatpush.msra.mxu0 %v668
    %v670 = vand.u32 %v117, 4294901760
    %v671 = vsub.f32 %v117, %v670
    %v672 = vand.u32 %v671, 4294901760
    %v673 = vsub.f32 %v671, %v672
    %v674 = vand.u32 %v673, 4294901760
    %675 = vmatmul.f32.gmra.mxu0 %v674
    %v676 = vpop.f32.mrf.mxu0
    %v677 = vadd.f32 0.0, %v676
    %v678 = vand.u32 %v120, 4294901760
    %v679 = vsub.f32 %v120, %v678
    %v680 = vand.u32 %v679, 4294901760
    %v681 = vsub.f32 %v679, %v680
    %v682 = vand.u32 %v681, 4294901760
    %683 = vmatmul.f32.gmra.mxu0 %v682
    %v684 = vpop.f32.mrf.mxu0
    %v685 = vadd.f32 0.0, %v684
    %686 = vdwg.mxu0
    %687 = vmatpush.msra.mxu0 0.0
    %688 = vmatpush.msra.mxu0 0.0
    %689 = vmatpush.msra.mxu0 0.0
    %690 = vmatpush.msra.mxu0 0.0
    %691 = vmatpush.msra.mxu0 0.0
    %692 = vmatpush.msra.mxu0 0.0
    %693 = vmatpush.msra.mxu0 0.0
    %694 = vmatpush.msra.mxu0 0.0
    %695 = vmatpush.msra.mxu0 0.0
    %696 = vmatpush.msra.mxu0 0.0
    %697 = vmatpush.msra.mxu0 0.0
    %698 = vmatpush.msra.mxu0 0.0
    %699 = vmatpush.msra.mxu0 0.0
    %700 = vmatpush.msra.mxu0 0.0
    %701 = vmatpush.msra.mxu0 0.0
    %v702 = vand.u32 %v102, 4294901760
    %v703 = vsub.f32 %v102, %v702
    %v704 = vand.u32 %v703, 4294901760
    %v705 = vsub.f32 %v703, %v704
    %v706 = vand.u32 %v705, 4294901760
    %707 = vmatpush.msra.mxu0 %v706
    %v708 = vand.u32 %v117, 4294901760
    %709 = vmatmul.f32.gmra.mxu0 %v708
    %v710 = vpop.f32.mrf.mxu0
    %v711 = vadd.f32 %v677, %v710
    %v712 = vand.u32 %v120, 4294901760
    %713 = vmatmul.f32.gmra.mxu0 %v712
    %v714 = vpop.f32.mrf.mxu0
    %v715 = vadd.f32 %v685, %v714
    %716 = vdwg.mxu0
    %717 = vmatpush.msra.mxu0 0.0
    %718 = vmatpush.msra.mxu0 0.0
    %719 = vmatpush.msra.mxu0 0.0
    %720 = vmatpush.msra.mxu0 0.0
    %721 = vmatpush.msra.mxu0 0.0
    %722 = vmatpush.msra.mxu0 0.0
    %723 = vmatpush.msra.mxu0 0.0
    %724 = vmatpush.msra.mxu0 0.0
    %725 = vmatpush.msra.mxu0 0.0
    %726 = vmatpush.msra.mxu0 0.0
    %727 = vmatpush.msra.mxu0 0.0
    %728 = vmatpush.msra.mxu0 0.0
    %729 = vmatpush.msra.mxu0 0.0
    %730 = vmatpush.msra.mxu0 0.0
    %731 = vmatpush.msra.mxu0 0.0
    %v732 = vand.u32 %v102, 4294901760
    %v733 = vsub.f32 %v102, %v732
    %734 = vmatpush.msra.mxu0 %v733
    %v735 = vand.u32 %v117, 4294901760
    %v736 = vsub.f32 %v117, %v735
    %737 = vmatmul.f32.gmra.mxu0 %v736
    %v738 = vpop.f32.mrf.mxu0
    %v739 = vadd.f32 %v711, %v738
    %v740 = vand.u32 %v120, 4294901760
    %v741 = vsub.f32 %v120, %v740
    %742 = vmatmul.f32.gmra.mxu0 %v741
    %v743 = vpop.f32.mrf.mxu0
    %v744 = vadd.f32 %v715, %v743
    %745 = vdwg.mxu0
    %746 = vmatpush.msra.mxu0 0.0
    %747 = vmatpush.msra.mxu0 0.0
    %748 = vmatpush.msra.mxu0 0.0
    %749 = vmatpush.msra.mxu0 0.0
    %750 = vmatpush.msra.mxu0 0.0
    %751 = vmatpush.msra.mxu0 0.0
    %752 = vmatpush.msra.mxu0 0.0
    %753 = vmatpush.msra.mxu0 0.0
    %754 = vmatpush.msra.mxu0 0.0
    %755 = vmatpush.msra.mxu0 0.0
    %756 = vmatpush.msra.mxu0 0.0
    %757 = vmatpush.msra.mxu0 0.0
    %758 = vmatpush.msra.mxu0 0.0
    %759 = vmatpush.msra.mxu0 0.0
    %760 = vmatpush.msra.mxu0 0.0
    %v761 = vand.u32 %v102, 4294901760
    %762 = vmatpush.msra.mxu0 %v761
    %v763 = vand.u32 %v117, 4294901760
    %v764 = vsub.f32 %v117, %v763
    %v765 = vand.u32 %v764, 4294901760
    %766 = vmatmul.f32.gmra.mxu0 %v765
    %v767 = vpop.f32.mrf.mxu0
    %v768 = vadd.f32 %v739, %v767
    %v769 = vand.u32 %v120, 4294901760
    %v770 = vsub.f32 %v120, %v769
    %v771 = vand.u32 %v770, 4294901760
    %772 = vmatmul.f32.gmra.mxu0 %v771
    %v773 = vpop.f32.mrf.mxu0
    %v774 = vadd.f32 %v744, %v773
    %775 = vdwg.mxu0
    %776 = vmatpush.msra.mxu0 0.0
    %777 = vmatpush.msra.mxu0 0.0
    %778 = vmatpush.msra.mxu0 0.0
    %779 = vmatpush.msra.mxu0 0.0
    %780 = vmatpush.msra.mxu0 0.0
    %781 = vmatpush.msra.mxu0 0.0
    %782 = vmatpush.msra.mxu0 0.0
    %783 = vmatpush.msra.mxu0 0.0
    %784 = vmatpush.msra.mxu0 0.0
    %785 = vmatpush.msra.mxu0 0.0
    %786 = vmatpush.msra.mxu0 0.0
    %787 = vmatpush.msra.mxu0 0.0
    %788 = vmatpush.msra.mxu0 0.0
    %789 = vmatpush.msra.mxu0 0.0
    %790 = vmatpush.msra.mxu0 0.0
    %v791 = vand.u32 %v102, 4294901760
    %v792 = vsub.f32 %v102, %v791
    %v793 = vand.u32 %v792, 4294901760
    %794 = vmatpush.msra.mxu0 %v793
    %v795 = vand.u32 %v117, 4294901760
    %796 = vmatmul.f32.gmra.mxu0 %v795
    %v797 = vpop.f32.mrf.mxu0
    %v798 = vadd.f32 %v768, %v797
    %v799 = vand.u32 %v120, 4294901760
    %800 = vmatmul.f32.gmra.mxu0 %v799
    %v801 = vpop.f32.mrf.mxu0
    %v802 = vadd.f32 %v774, %v801
    %803 = vdwg.mxu0
    %804 = vmatpush.msra.mxu0 0.0
    %805 = vmatpush.msra.mxu0 0.0
    %806 = vmatpush.msra.mxu0 0.0
    %807 = vmatpush.msra.mxu0 0.0
    %808 = vmatpush.msra.mxu0 0.0
    %809 = vmatpush.msra.mxu0 0.0
    %810 = vmatpush.msra.mxu0 0.0
    %811 = vmatpush.msra.mxu0 0.0
    %812 = vmatpush.msra.mxu0 0.0
    %813 = vmatpush.msra.mxu0 0.0
    %814 = vmatpush.msra.mxu0 0.0
    %815 = vmatpush.msra.mxu0 0.0
    %816 = vmatpush.msra.mxu0 0.0
    %817 = vmatpush.msra.mxu0 0.0
    %818 = vmatpush.msra.mxu0 0.0
    %v819 = vand.u32 %v102, 4294901760
    %820 = vmatpush.msra.mxu0 %v819
    %v821 = vand.u32 %v117, 4294901760
    %822 = vmatmul.f32.gmra.mxu0 %v821
    %v823 = vpop.f32.mrf.mxu0
    %v824 = vadd.f32 %v798, %v823
    %v825 = vand.u32 %v120, 4294901760
    %826 = vmatmul.f32.gmra.mxu0 %v825
    %v827 = vpop.f32.mrf.mxu0
    %v828 = vadd.f32 %v802, %v827
    %829 = vdwg.mxu0
    %830 = vmatpush.msra.mxu0 0.0
    %831 = vmatpush.msra.mxu0 0.0
    %832 = vmatpush.msra.mxu0 0.0
    %833 = vmatpush.msra.mxu0 0.0
    %834 = vmatpush.msra.mxu0 0.0
    %835 = vmatpush.msra.mxu0 0.0
    %836 = vmatpush.msra.mxu0 0.0
    %837 = vmatpush.msra.mxu0 0.0
    %838 = vmatpush.msra.mxu0 0.0
    %839 = vmatpush.msra.mxu0 0.0
    %840 = vmatpush.msra.mxu0 0.0
    %841 = vmatpush.msra.mxu0 0.0
    %842 = vmatpush.msra.mxu0 0.0
    %843 = vmatpush.msra.mxu0 0.0
    %844 = vmatpush.msra.mxu0 0.0
    %v845 = vand.u32 %v103, 4294901760
    %846 = vmatpush.msra.mxu0 %v845
    %v847 = vand.u32 %v117, 4294901760
    %v848 = vsub.f32 %v117, %v847
    %v849 = vand.u32 %v848, 4294901760
    %v850 = vsub.f32 %v848, %v849
    %v851 = vand.u32 %v850, 4294901760
    %852 = vmatmul.f32.gmra.mxu0 %v851
    %v853 = vpop.f32.mrf.mxu0
    %v854 = vadd.f32 0.0, %v853
    %v855 = vand.u32 %v120, 4294901760
    %v856 = vsub.f32 %v120, %v855
    %v857 = vand.u32 %v856, 4294901760
    %v858 = vsub.f32 %v856, %v857
    %v859 = vand.u32 %v858, 4294901760
    %860 = vmatmul.f32.gmra.mxu0 %v859
    %v861 = vpop.f32.mrf.mxu0
    %v862 = vadd.f32 0.0, %v861
    %863 = vdwg.mxu0
    %864 = vmatpush.msra.mxu0 0.0
    %865 = vmatpush.msra.mxu0 0.0
    %866 = vmatpush.msra.mxu0 0.0
    %867 = vmatpush.msra.mxu0 0.0
    %868 = vmatpush.msra.mxu0 0.0
    %869 = vmatpush.msra.mxu0 0.0
    %870 = vmatpush.msra.mxu0 0.0
    %871 = vmatpush.msra.mxu0 0.0
    %872 = vmatpush.msra.mxu0 0.0
    %873 = vmatpush.msra.mxu0 0.0
    %874 = vmatpush.msra.mxu0 0.0
    %875 = vmatpush.msra.mxu0 0.0
    %876 = vmatpush.msra.mxu0 0.0
    %877 = vmatpush.msra.mxu0 0.0
    %878 = vmatpush.msra.mxu0 0.0
    %v879 = vand.u32 %v103, 4294901760
    %v880 = vsub.f32 %v103, %v879
    %v881 = vand.u32 %v880, 4294901760
    %v882 = vsub.f32 %v880, %v881
    %v883 = vand.u32 %v882, 4294901760
    %884 = vmatpush.msra.mxu0 %v883
    %v885 = vand.u32 %v117, 4294901760
    %886 = vmatmul.f32.gmra.mxu0 %v885
    %v887 = vpop.f32.mrf.mxu0
    %v888 = vadd.f32 %v854, %v887
    %v889 = vand.u32 %v120, 4294901760
    %890 = vmatmul.f32.gmra.mxu0 %v889
    %v891 = vpop.f32.mrf.mxu0
    %v892 = vadd.f32 %v862, %v891
    %893 = vdwg.mxu0
    %894 = vmatpush.msra.mxu0 0.0
    %895 = vmatpush.msra.mxu0 0.0
    %896 = vmatpush.msra.mxu0 0.0
    %897 = vmatpush.msra.mxu0 0.0
    %898 = vmatpush.msra.mxu0 0.0
    %899 = vmatpush.msra.mxu0 0.0
    %900 = vmatpush.msra.mxu0 0.0
    %901 = vmatpush.msra.mxu0 0.0
    %902 = vmatpush.msra.mxu0 0.0
    %903 = vmatpush.msra.mxu0 0.0
    %904 = vmatpush.msra.mxu0 0.0
    %905 = vmatpush.msra.mxu0 0.0
    %906 = vmatpush.msra.mxu0 0.0
    %907 = vmatpush.msra.mxu0 0.0
    %908 = vmatpush.msra.mxu0 0.0
    %v909 = vand.u32 %v103, 4294901760
    %v910 = vsub.f32 %v103, %v909
    %911 = vmatpush.msra.mxu0 %v910
    %v912 = vand.u32 %v117, 4294901760
    %v913 = vsub.f32 %v117, %v912
    %914 = vmatmul.f32.gmra.mxu0 %v913
    %v915 = vpop.f32.mrf.mxu0
    %v916 = vadd.f32 %v888, %v915
    %v917 = vand.u32 %v120, 4294901760
    %v918 = vsub.f32 %v120, %v917
    %919 = vmatmul.f32.gmra.mxu0 %v918
    %v920 = vpop.f32.mrf.mxu0
    %v921 = vadd.f32 %v892, %v920
    %922 = vdwg.mxu0
    %923 = vmatpush.msra.mxu0 0.0
    %924 = vmatpush.msra.mxu0 0.0
    %925 = vmatpush.msra.mxu0 0.0
    %926 = vmatpush.msra.mxu0 0.0
    %927 = vmatpush.msra.mxu0 0.0
    %928 = vmatpush.msra.mxu0 0.0
    %929 = vmatpush.msra.mxu0 0.0
    %930 = vmatpush.msra.mxu0 0.0
    %931 = vmatpush.msra.mxu0 0.0
    %932 = vmatpush.msra.mxu0 0.0
    %933 = vmatpush.msra.mxu0 0.0
    %934 = vmatpush.msra.mxu0 0.0
    %935 = vmatpush.msra.mxu0 0.0
    %936 = vmatpush.msra.mxu0 0.0
    %937 = vmatpush.msra.mxu0 0.0
    %v938 = vand.u32 %v103, 4294901760
    %939 = vmatpush.msra.mxu0 %v938
    %v940 = vand.u32 %v117, 4294901760
    %v941 = vsub.f32 %v117, %v940
    %v942 = vand.u32 %v941, 4294901760
    %943 = vmatmul.f32.gmra.mxu0 %v942
    %v944 = vpop.f32.mrf.mxu0
    %v945 = vadd.f32 %v916, %v944
    %v946 = vand.u32 %v120, 4294901760
    %v947 = vsub.f32 %v120, %v946
    %v948 = vand.u32 %v947, 4294901760
    %949 = vmatmul.f32.gmra.mxu0 %v948
    %v950 = vpop.f32.mrf.mxu0
    %v951 = vadd.f32 %v921, %v950
    %952 = vdwg.mxu0
    %953 = vmatpush.msra.mxu0 0.0
    %954 = vmatpush.msra.mxu0 0.0
    %955 = vmatpush.msra.mxu0 0.0
    %956 = vmatpush.msra.mxu0 0.0
    %957 = vmatpush.msra.mxu0 0.0
    %958 = vmatpush.msra.mxu0 0.0
    %959 = vmatpush.msra.mxu0 0.0
    %960 = vmatpush.msra.mxu0 0.0
    %961 = vmatpush.msra.mxu0 0.0
    %962 = vmatpush.msra.mxu0 0.0
    %963 = vmatpush.msra.mxu0 0.0
    %964 = vmatpush.msra.mxu0 0.0
    %965 = vmatpush.msra.mxu0 0.0
    %966 = vmatpush.msra.mxu0 0.0
    %967 = vmatpush.msra.mxu0 0.0
    %v968 = vand.u32 %v103, 4294901760
    %v969 = vsub.f32 %v103, %v968
    %v970 = vand.u32 %v969, 4294901760
    %971 = vmatpush.msra.mxu0 %v970
    %v972 = vand.u32 %v117, 4294901760
    %973 = vmatmul.f32.gmra.mxu0 %v972
    %v974 = vpop.f32.mrf.mxu0
    %v975 = vadd.f32 %v945, %v974
    %v976 = vand.u32 %v120, 4294901760
    %977 = vmatmul.f32.gmra.mxu0 %v976
    %v978 = vpop.f32.mrf.mxu0
    %v979 = vadd.f32 %v951, %v978
    %980 = vdwg.mxu0
    %981 = vmatpush.msra.mxu0 0.0
    %982 = vmatpush.msra.mxu0 0.0
    %983 = vmatpush.msra.mxu0 0.0
    %984 = vmatpush.msra.mxu0 0.0
    %985 = vmatpush.msra.mxu0 0.0
    %986 = vmatpush.msra.mxu0 0.0
    %987 = vmatpush.msra.mxu0 0.0
    %988 = vmatpush.msra.mxu0 0.0
    %989 = vmatpush.msra.mxu0 0.0
    %990 = vmatpush.msra.mxu0 0.0
    %991 = vmatpush.msra.mxu0 0.0
    %992 = vmatpush.msra.mxu0 0.0
    %993 = vmatpush.msra.mxu0 0.0
    %994 = vmatpush.msra.mxu0 0.0
    %995 = vmatpush.msra.mxu0 0.0
    %v996 = vand.u32 %v103, 4294901760
    %997 = vmatpush.msra.mxu0 %v996
    %v998 = vand.u32 %v117, 4294901760
    %999 = vmatmul.f32.gmra.mxu0 %v998
    %v1000 = vpop.f32.mrf.mxu0
    %v1001 = vadd.f32 %v975, %v1000
    %v1002 = vand.u32 %v120, 4294901760
    %1003 = vmatmul.f32.gmra.mxu0 %v1002
    %v1004 = vpop.f32.mrf.mxu0
    %v1005 = vadd.f32 %v979, %v1004
    %1006 = vdwg.mxu0
    %1007 = vmatpush.msra.mxu0 0.0
    %1008 = vmatpush.msra.mxu0 0.0
    %1009 = vmatpush.msra.mxu0 0.0
    %1010 = vmatpush.msra.mxu0 0.0
    %1011 = vmatpush.msra.mxu0 0.0
    %1012 = vmatpush.msra.mxu0 0.0
    %1013 = vmatpush.msra.mxu0 0.0
    %1014 = vmatpush.msra.mxu0 0.0
    %1015 = vmatpush.msra.mxu0 0.0
    %1016 = vmatpush.msra.mxu0 0.0
    %1017 = vmatpush.msra.mxu0 0.0
    %1018 = vmatpush.msra.mxu0 0.0
    %1019 = vmatpush.msra.mxu0 0.0
    %1020 = vmatpush.msra.mxu0 0.0
    %1021 = vmatpush.msra.mxu0 0.0
    %v1022 = vand.u32 %v104, 4294901760
    %1023 = vmatpush.msra.mxu0 %v1022
    %v1024 = vand.u32 %v117, 4294901760
    %v1025 = vsub.f32 %v117, %v1024
    %v1026 = vand.u32 %v1025, 4294901760
    %v1027 = vsub.f32 %v1025, %v1026
    %v1028 = vand.u32 %v1027, 4294901760
    %1029 = vmatmul.f32.gmra.mxu0 %v1028
    %v1030 = vpop.f32.mrf.mxu0
    %v1031 = vadd.f32 0.0, %v1030
    %v1032 = vand.u32 %v120, 4294901760
    %v1033 = vsub.f32 %v120, %v1032
    %v1034 = vand.u32 %v1033, 4294901760
    %v1035 = vsub.f32 %v1033, %v1034
    %v1036 = vand.u32 %v1035, 4294901760
    %1037 = vmatmul.f32.gmra.mxu0 %v1036
    %v1038 = vpop.f32.mrf.mxu0
    %v1039 = vadd.f32 0.0, %v1038
    %1040 = vdwg.mxu0
    %1041 = vmatpush.msra.mxu0 0.0
    %1042 = vmatpush.msra.mxu0 0.0
    %1043 = vmatpush.msra.mxu0 0.0
    %1044 = vmatpush.msra.mxu0 0.0
    %1045 = vmatpush.msra.mxu0 0.0
    %1046 = vmatpush.msra.mxu0 0.0
    %1047 = vmatpush.msra.mxu0 0.0
    %1048 = vmatpush.msra.mxu0 0.0
    %1049 = vmatpush.msra.mxu0 0.0
    %1050 = vmatpush.msra.mxu0 0.0
    %1051 = vmatpush.msra.mxu0 0.0
    %1052 = vmatpush.msra.mxu0 0.0
    %1053 = vmatpush.msra.mxu0 0.0
    %1054 = vmatpush.msra.mxu0 0.0
    %1055 = vmatpush.msra.mxu0 0.0
    %v1056 = vand.u32 %v104, 4294901760
    %v1057 = vsub.f32 %v104, %v1056
    %v1058 = vand.u32 %v1057, 4294901760
    %v1059 = vsub.f32 %v1057, %v1058
    %v1060 = vand.u32 %v1059, 4294901760
    %1061 = vmatpush.msra.mxu0 %v1060
    %v1062 = vand.u32 %v117, 4294901760
    %1063 = vmatmul.f32.gmra.mxu0 %v1062
    %v1064 = vpop.f32.mrf.mxu0
    %v1065 = vadd.f32 %v1031, %v1064
    %v1066 = vand.u32 %v120, 4294901760
    %1067 = vmatmul.f32.gmra.mxu0 %v1066
    %v1068 = vpop.f32.mrf.mxu0
    %v1069 = vadd.f32 %v1039, %v1068
    %1070 = vdwg.mxu0
    %1071 = vmatpush.msra.mxu0 0.0
    %1072 = vmatpush.msra.mxu0 0.0
    %1073 = vmatpush.msra.mxu0 0.0
    %1074 = vmatpush.msra.mxu0 0.0
    %1075 = vmatpush.msra.mxu0 0.0
    %1076 = vmatpush.msra.mxu0 0.0
    %1077 = vmatpush.msra.mxu0 0.0
    %1078 = vmatpush.msra.mxu0 0.0
    %1079 = vmatpush.msra.mxu0 0.0
    %1080 = vmatpush.msra.mxu0 0.0
    %1081 = vmatpush.msra.mxu0 0.0
    %1082 = vmatpush.msra.mxu0 0.0
    %1083 = vmatpush.msra.mxu0 0.0
    %1084 = vmatpush.msra.mxu0 0.0
    %1085 = vmatpush.msra.mxu0 0.0
    %v1086 = vand.u32 %v104, 4294901760
    %v1087 = vsub.f32 %v104, %v1086
    %1088 = vmatpush.msra.mxu0 %v1087
    %v1089 = vand.u32 %v117, 4294901760
    %v1090 = vsub.f32 %v117, %v1089
    %1091 = vmatmul.f32.gmra.mxu0 %v1090
    %v1092 = vpop.f32.mrf.mxu0
    %v1093 = vadd.f32 %v1065, %v1092
    %v1094 = vand.u32 %v120, 4294901760
    %v1095 = vsub.f32 %v120, %v1094
    %1096 = vmatmul.f32.gmra.mxu0 %v1095
    %v1097 = vpop.f32.mrf.mxu0
    %v1098 = vadd.f32 %v1069, %v1097
    %1099 = vdwg.mxu0
    %1100 = vmatpush.msra.mxu0 0.0
    %1101 = vmatpush.msra.mxu0 0.0
    %1102 = vmatpush.msra.mxu0 0.0
    %1103 = vmatpush.msra.mxu0 0.0
    %1104 = vmatpush.msra.mxu0 0.0
    %1105 = vmatpush.msra.mxu0 0.0
    %1106 = vmatpush.msra.mxu0 0.0
    %1107 = vmatpush.msra.mxu0 0.0
    %1108 = vmatpush.msra.mxu0 0.0
    %1109 = vmatpush.msra.mxu0 0.0
    %1110 = vmatpush.msra.mxu0 0.0
    %1111 = vmatpush.msra.mxu0 0.0
    %1112 = vmatpush.msra.mxu0 0.0
    %1113 = vmatpush.msra.mxu0 0.0
    %1114 = vmatpush.msra.mxu0 0.0
    %v1115 = vand.u32 %v104, 4294901760
    %1116 = vmatpush.msra.mxu0 %v1115
    %v1117 = vand.u32 %v117, 4294901760
    %v1118 = vsub.f32 %v117, %v1117
    %v1119 = vand.u32 %v1118, 4294901760
    %1120 = vmatmul.f32.gmra.mxu0 %v1119
    %v1121 = vpop.f32.mrf.mxu0
    %v1122 = vadd.f32 %v1093, %v1121
    %v1123 = vand.u32 %v120, 4294901760
    %v1124 = vsub.f32 %v120, %v1123
    %v1125 = vand.u32 %v1124, 4294901760
    %1126 = vmatmul.f32.gmra.mxu0 %v1125
    %v1127 = vpop.f32.mrf.mxu0
    %v1128 = vadd.f32 %v1098, %v1127
    %1129 = vdwg.mxu0
    %1130 = vmatpush.msra.mxu0 0.0
    %1131 = vmatpush.msra.mxu0 0.0
    %1132 = vmatpush.msra.mxu0 0.0
    %1133 = vmatpush.msra.mxu0 0.0
    %1134 = vmatpush.msra.mxu0 0.0
    %1135 = vmatpush.msra.mxu0 0.0
    %1136 = vmatpush.msra.mxu0 0.0
    %1137 = vmatpush.msra.mxu0 0.0
    %1138 = vmatpush.msra.mxu0 0.0
    %1139 = vmatpush.msra.mxu0 0.0
    %1140 = vmatpush.msra.mxu0 0.0
    %1141 = vmatpush.msra.mxu0 0.0
    %1142 = vmatpush.msra.mxu0 0.0
    %1143 = vmatpush.msra.mxu0 0.0
    %1144 = vmatpush.msra.mxu0 0.0
    %v1145 = vand.u32 %v104, 4294901760
    %v1146 = vsub.f32 %v104, %v1145
    %v1147 = vand.u32 %v1146, 4294901760
    %1148 = vmatpush.msra.mxu0 %v1147
    %v1149 = vand.u32 %v117, 4294901760
    %1150 = vmatmul.f32.gmra.mxu0 %v1149
    %v1151 = vpop.f32.mrf.mxu0
    %v1152 = vadd.f32 %v1122, %v1151
    %v1153 = vand.u32 %v120, 4294901760
    %1154 = vmatmul.f32.gmra.mxu0 %v1153
    %v1155 = vpop.f32.mrf.mxu0
    %v1156 = vadd.f32 %v1128, %v1155
    %1157 = vdwg.mxu0
    %1158 = vmatpush.msra.mxu0 0.0
    %1159 = vmatpush.msra.mxu0 0.0
    %1160 = vmatpush.msra.mxu0 0.0
    %1161 = vmatpush.msra.mxu0 0.0
    %1162 = vmatpush.msra.mxu0 0.0
    %1163 = vmatpush.msra.mxu0 0.0
    %1164 = vmatpush.msra.mxu0 0.0
    %1165 = vmatpush.msra.mxu0 0.0
    %1166 = vmatpush.msra.mxu0 0.0
    %1167 = vmatpush.msra.mxu0 0.0
    %1168 = vmatpush.msra.mxu0 0.0
    %1169 = vmatpush.msra.mxu0 0.0
    %1170 = vmatpush.msra.mxu0 0.0
    %1171 = vmatpush.msra.mxu0 0.0
    %1172 = vmatpush.msra.mxu0 0.0
    %v1173 = vand.u32 %v104, 4294901760
    %1174 = vmatpush.msra.mxu0 %v1173
    %v1175 = vand.u32 %v117, 4294901760
    %1176 = vmatmul.f32.gmra.mxu0 %v1175
    %v1177 = vpop.f32.mrf.mxu0
    %v1178 = vadd.f32 %v1152, %v1177
    %v1179 = vand.u32 %v120, 4294901760
    %1180 = vmatmul.f32.gmra.mxu0 %v1179
    %v1181 = vpop.f32.mrf.mxu0
    %v1182 = vadd.f32 %v1156, %v1181
    %1183 = vdwg.mxu0
    %1184 = vmatpush.msra.mxu0 0.0
    %1185 = vmatpush.msra.mxu0 0.0
    %1186 = vmatpush.msra.mxu0 0.0
    %1187 = vmatpush.msra.mxu0 0.0
    %1188 = vmatpush.msra.mxu0 0.0
    %1189 = vmatpush.msra.mxu0 0.0
    %1190 = vmatpush.msra.mxu0 0.0
    %1191 = vmatpush.msra.mxu0 0.0
    %1192 = vmatpush.msra.mxu0 0.0
    %1193 = vmatpush.msra.mxu0 0.0
    %1194 = vmatpush.msra.mxu0 0.0
    %1195 = vmatpush.msra.mxu0 0.0
    %1196 = vmatpush.msra.mxu0 0.0
    %1197 = vmatpush.msra.mxu0 0.0
    %1198 = vmatpush.msra.mxu0 0.0
    %v1199 = vand.u32 %v105, 4294901760
    %1200 = vmatpush.msra.mxu0 %v1199
    %v1201 = vand.u32 %v117, 4294901760
    %v1202 = vsub.f32 %v117, %v1201
    %v1203 = vand.u32 %v1202, 4294901760
    %v1204 = vsub.f32 %v1202, %v1203
    %v1205 = vand.u32 %v1204, 4294901760
    %1206 = vmatmul.f32.gmra.mxu0 %v1205
    %v1207 = vpop.f32.mrf.mxu0
    %v1208 = vadd.f32 0.0, %v1207
    %v1209 = vand.u32 %v120, 4294901760
    %v1210 = vsub.f32 %v120, %v1209
    %v1211 = vand.u32 %v1210, 4294901760
    %v1212 = vsub.f32 %v1210, %v1211
    %v1213 = vand.u32 %v1212, 4294901760
    %1214 = vmatmul.f32.gmra.mxu0 %v1213
    %v1215 = vpop.f32.mrf.mxu0
    %v1216 = vadd.f32 0.0, %v1215
    %1217 = vdwg.mxu0
    %1218 = vmatpush.msra.mxu0 0.0
    %1219 = vmatpush.msra.mxu0 0.0
    %1220 = vmatpush.msra.mxu0 0.0
    %1221 = vmatpush.msra.mxu0 0.0
    %1222 = vmatpush.msra.mxu0 0.0
    %1223 = vmatpush.msra.mxu0 0.0
    %1224 = vmatpush.msra.mxu0 0.0
    %1225 = vmatpush.msra.mxu0 0.0
    %1226 = vmatpush.msra.mxu0 0.0
    %1227 = vmatpush.msra.mxu0 0.0
    %1228 = vmatpush.msra.mxu0 0.0
    %1229 = vmatpush.msra.mxu0 0.0
    %1230 = vmatpush.msra.mxu0 0.0
    %1231 = vmatpush.msra.mxu0 0.0
    %1232 = vmatpush.msra.mxu0 0.0
    %v1233 = vand.u32 %v105, 4294901760
    %v1234 = vsub.f32 %v105, %v1233
    %v1235 = vand.u32 %v1234, 4294901760
    %v1236 = vsub.f32 %v1234, %v1235
    %v1237 = vand.u32 %v1236, 4294901760
    %1238 = vmatpush.msra.mxu0 %v1237
    %v1239 = vand.u32 %v117, 4294901760
    %1240 = vmatmul.f32.gmra.mxu0 %v1239
    %v1241 = vpop.f32.mrf.mxu0
    %v1242 = vadd.f32 %v1208, %v1241
    %v1243 = vand.u32 %v120, 4294901760
    %1244 = vmatmul.f32.gmra.mxu0 %v1243
    %v1245 = vpop.f32.mrf.mxu0
    %v1246 = vadd.f32 %v1216, %v1245
    %1247 = vdwg.mxu0
    %1248 = vmatpush.msra.mxu0 0.0
    %1249 = vmatpush.msra.mxu0 0.0
    %1250 = vmatpush.msra.mxu0 0.0
    %1251 = vmatpush.msra.mxu0 0.0
    %1252 = vmatpush.msra.mxu0 0.0
    %1253 = vmatpush.msra.mxu0 0.0
    %1254 = vmatpush.msra.mxu0 0.0
    %1255 = vmatpush.msra.mxu0 0.0
    %1256 = vmatpush.msra.mxu0 0.0
    %1257 = vmatpush.msra.mxu0 0.0
    %1258 = vmatpush.msra.mxu0 0.0
    %1259 = vmatpush.msra.mxu0 0.0
    %1260 = vmatpush.msra.mxu0 0.0
    %1261 = vmatpush.msra.mxu0 0.0
    %1262 = vmatpush.msra.mxu0 0.0
    %v1263 = vand.u32 %v105, 4294901760
    %v1264 = vsub.f32 %v105, %v1263
    %1265 = vmatpush.msra.mxu0 %v1264
    %v1266 = vand.u32 %v117, 4294901760
    %v1267 = vsub.f32 %v117, %v1266
    %1268 = vmatmul.f32.gmra.mxu0 %v1267
    %v1269 = vpop.f32.mrf.mxu0
    %v1270 = vadd.f32 %v1242, %v1269
    %v1271 = vand.u32 %v120, 4294901760
    %v1272 = vsub.f32 %v120, %v1271
    %1273 = vmatmul.f32.gmra.mxu0 %v1272
    %v1274 = vpop.f32.mrf.mxu0
    %v1275 = vadd.f32 %v1246, %v1274
    %1276 = vdwg.mxu0
    %1277 = vmatpush.msra.mxu0 0.0
    %1278 = vmatpush.msra.mxu0 0.0
    %1279 = vmatpush.msra.mxu0 0.0
    %1280 = vmatpush.msra.mxu0 0.0
    %1281 = vmatpush.msra.mxu0 0.0
    %1282 = vmatpush.msra.mxu0 0.0
    %1283 = vmatpush.msra.mxu0 0.0
    %1284 = vmatpush.msra.mxu0 0.0
    %1285 = vmatpush.msra.mxu0 0.0
    %1286 = vmatpush.msra.mxu0 0.0
    %1287 = vmatpush.msra.mxu0 0.0
    %1288 = vmatpush.msra.mxu0 0.0
    %1289 = vmatpush.msra.mxu0 0.0
    %1290 = vmatpush.msra.mxu0 0.0
    %1291 = vmatpush.msra.mxu0 0.0
    %v1292 = vand.u32 %v105, 4294901760
    %1293 = vmatpush.msra.mxu0 %v1292
    %v1294 = vand.u32 %v117, 4294901760
    %v1295 = vsub.f32 %v117, %v1294
    %v1296 = vand.u32 %v1295, 4294901760
    %1297 = vmatmul.f32.gmra.mxu0 %v1296
    %v1298 = vpop.f32.mrf.mxu0
    %v1299 = vadd.f32 %v1270, %v1298
    %v1300 = vand.u32 %v120, 4294901760
    %v1301 = vsub.f32 %v120, %v1300
    %v1302 = vand.u32 %v1301, 4294901760
    %1303 = vmatmul.f32.gmra.mxu0 %v1302
    %v1304 = vpop.f32.mrf.mxu0
    %v1305 = vadd.f32 %v1275, %v1304
    %1306 = vdwg.mxu0
    %1307 = vmatpush.msra.mxu0 0.0
    %1308 = vmatpush.msra.mxu0 0.0
    %1309 = vmatpush.msra.mxu0 0.0
    %1310 = vmatpush.msra.mxu0 0.0
    %1311 = vmatpush.msra.mxu0 0.0
    %1312 = vmatpush.msra.mxu0 0.0
    %1313 = vmatpush.msra.mxu0 0.0
    %1314 = vmatpush.msra.mxu0 0.0
    %1315 = vmatpush.msra.mxu0 0.0
    %1316 = vmatpush.msra.mxu0 0.0
    %1317 = vmatpush.msra.mxu0 0.0
    %1318 = vmatpush.msra.mxu0 0.0
    %1319 = vmatpush.msra.mxu0 0.0
    %1320 = vmatpush.msra.mxu0 0.0
    %1321 = vmatpush.msra.mxu0 0.0
    %v1322 = vand.u32 %v105, 4294901760
    %v1323 = vsub.f32 %v105, %v1322
    %v1324 = vand.u32 %v1323, 4294901760
    %1325 = vmatpush.msra.mxu0 %v1324
    %v1326 = vand.u32 %v117, 4294901760
    %1327 = vmatmul.f32.gmra.mxu0 %v1326
    %v1328 = vpop.f32.mrf.mxu0
    %v1329 = vadd.f32 %v1299, %v1328
    %v1330 = vand.u32 %v120, 4294901760
    %1331 = vmatmul.f32.gmra.mxu0 %v1330
    %v1332 = vpop.f32.mrf.mxu0
    %v1333 = vadd.f32 %v1305, %v1332
    %1334 = vdwg.mxu0
    %1335 = vmatpush.msra.mxu0 0.0
    %1336 = vmatpush.msra.mxu0 0.0
    %1337 = vmatpush.msra.mxu0 0.0
    %1338 = vmatpush.msra.mxu0 0.0
    %1339 = vmatpush.msra.mxu0 0.0
    %1340 = vmatpush.msra.mxu0 0.0
    %1341 = vmatpush.msra.mxu0 0.0
    %1342 = vmatpush.msra.mxu0 0.0
    %1343 = vmatpush.msra.mxu0 0.0
    %1344 = vmatpush.msra.mxu0 0.0
    %1345 = vmatpush.msra.mxu0 0.0
    %1346 = vmatpush.msra.mxu0 0.0
    %1347 = vmatpush.msra.mxu0 0.0
    %1348 = vmatpush.msra.mxu0 0.0
    %1349 = vmatpush.msra.mxu0 0.0
    %v1350 = vand.u32 %v105, 4294901760
    %1351 = vmatpush.msra.mxu0 %v1350
    %v1352 = vand.u32 %v117, 4294901760
    %1353 = vmatmul.f32.gmra.mxu0 %v1352
    %v1354 = vpop.f32.mrf.mxu0
    %v1355 = vadd.f32 %v1329, %v1354
    %v1356 = vand.u32 %v120, 4294901760
    %1357 = vmatmul.f32.gmra.mxu0 %v1356
    %v1358 = vpop.f32.mrf.mxu0
    %v1359 = vadd.f32 %v1333, %v1358
    %1360 = vdwg.mxu0
    %1361 = vmatpush.msra.mxu0 0.0
    %1362 = vmatpush.msra.mxu0 0.0
    %1363 = vmatpush.msra.mxu0 0.0
    %1364 = vmatpush.msra.mxu0 0.0
    %1365 = vmatpush.msra.mxu0 0.0
    %1366 = vmatpush.msra.mxu0 0.0
    %1367 = vmatpush.msra.mxu0 0.0
    %1368 = vmatpush.msra.mxu0 0.0
    %1369 = vmatpush.msra.mxu0 0.0
    %1370 = vmatpush.msra.mxu0 0.0
    %1371 = vmatpush.msra.mxu0 0.0
    %1372 = vmatpush.msra.mxu0 0.0
    %1373 = vmatpush.msra.mxu0 0.0
    %1374 = vmatpush.msra.mxu0 0.0
    %1375 = vmatpush.msra.mxu0 0.0
    %v1376 = vand.u32 %v106, 4294901760
    %1377 = vmatpush.msra.mxu0 %v1376
    %v1378 = vand.u32 %v117, 4294901760
    %v1379 = vsub.f32 %v117, %v1378
    %v1380 = vand.u32 %v1379, 4294901760
    %v1381 = vsub.f32 %v1379, %v1380
    %v1382 = vand.u32 %v1381, 4294901760
    %1383 = vmatmul.f32.gmra.mxu0 %v1382
    %v1384 = vpop.f32.mrf.mxu0
    %v1385 = vadd.f32 0.0, %v1384
    %v1386 = vand.u32 %v120, 4294901760
    %v1387 = vsub.f32 %v120, %v1386
    %v1388 = vand.u32 %v1387, 4294901760
    %v1389 = vsub.f32 %v1387, %v1388
    %v1390 = vand.u32 %v1389, 4294901760
    %1391 = vmatmul.f32.gmra.mxu0 %v1390
    %v1392 = vpop.f32.mrf.mxu0
    %v1393 = vadd.f32 0.0, %v1392
    %1394 = vdwg.mxu0
    %1395 = vmatpush.msra.mxu0 0.0
    %1396 = vmatpush.msra.mxu0 0.0
    %1397 = vmatpush.msra.mxu0 0.0
    %1398 = vmatpush.msra.mxu0 0.0
    %1399 = vmatpush.msra.mxu0 0.0
    %1400 = vmatpush.msra.mxu0 0.0
    %1401 = vmatpush.msra.mxu0 0.0
    %1402 = vmatpush.msra.mxu0 0.0
    %1403 = vmatpush.msra.mxu0 0.0
    %1404 = vmatpush.msra.mxu0 0.0
    %1405 = vmatpush.msra.mxu0 0.0
    %1406 = vmatpush.msra.mxu0 0.0
    %1407 = vmatpush.msra.mxu0 0.0
    %1408 = vmatpush.msra.mxu0 0.0
    %1409 = vmatpush.msra.mxu0 0.0
    %v1410 = vand.u32 %v106, 4294901760
    %v1411 = vsub.f32 %v106, %v1410
    %v1412 = vand.u32 %v1411, 4294901760
    %v1413 = vsub.f32 %v1411, %v1412
    %v1414 = vand.u32 %v1413, 4294901760
    %1415 = vmatpush.msra.mxu0 %v1414
    %v1416 = vand.u32 %v117, 4294901760
    %1417 = vmatmul.f32.gmra.mxu0 %v1416
    %v1418 = vpop.f32.mrf.mxu0
    %v1419 = vadd.f32 %v1385, %v1418
    %v1420 = vand.u32 %v120, 4294901760
    %1421 = vmatmul.f32.gmra.mxu0 %v1420
    %v1422 = vpop.f32.mrf.mxu0
    %v1423 = vadd.f32 %v1393, %v1422
    %1424 = vdwg.mxu0
    %1425 = vmatpush.msra.mxu0 0.0
    %1426 = vmatpush.msra.mxu0 0.0
    %1427 = vmatpush.msra.mxu0 0.0
    %1428 = vmatpush.msra.mxu0 0.0
    %1429 = vmatpush.msra.mxu0 0.0
    %1430 = vmatpush.msra.mxu0 0.0
    %1431 = vmatpush.msra.mxu0 0.0
    %1432 = vmatpush.msra.mxu0 0.0
    %1433 = vmatpush.msra.mxu0 0.0
    %1434 = vmatpush.msra.mxu0 0.0
    %1435 = vmatpush.msra.mxu0 0.0
    %1436 = vmatpush.msra.mxu0 0.0
    %1437 = vmatpush.msra.mxu0 0.0
    %1438 = vmatpush.msra.mxu0 0.0
    %1439 = vmatpush.msra.mxu0 0.0
    %v1440 = vand.u32 %v106, 4294901760
    %v1441 = vsub.f32 %v106, %v1440
    %1442 = vmatpush.msra.mxu0 %v1441
    %v1443 = vand.u32 %v117, 4294901760
    %v1444 = vsub.f32 %v117, %v1443
    %1445 = vmatmul.f32.gmra.mxu0 %v1444
    %v1446 = vpop.f32.mrf.mxu0
    %v1447 = vadd.f32 %v1419, %v1446
    %v1448 = vand.u32 %v120, 4294901760
    %v1449 = vsub.f32 %v120, %v1448
    %1450 = vmatmul.f32.gmra.mxu0 %v1449
    %v1451 = vpop.f32.mrf.mxu0
    %v1452 = vadd.f32 %v1423, %v1451
    %1453 = vdwg.mxu0
    %1454 = vmatpush.msra.mxu0 0.0
    %1455 = vmatpush.msra.mxu0 0.0
    %1456 = vmatpush.msra.mxu0 0.0
    %1457 = vmatpush.msra.mxu0 0.0
    %1458 = vmatpush.msra.mxu0 0.0
    %1459 = vmatpush.msra.mxu0 0.0
    %1460 = vmatpush.msra.mxu0 0.0
    %1461 = vmatpush.msra.mxu0 0.0
    %1462 = vmatpush.msra.mxu0 0.0
    %1463 = vmatpush.msra.mxu0 0.0
    %1464 = vmatpush.msra.mxu0 0.0
    %1465 = vmatpush.msra.mxu0 0.0
    %1466 = vmatpush.msra.mxu0 0.0
    %1467 = vmatpush.msra.mxu0 0.0
    %1468 = vmatpush.msra.mxu0 0.0
    %v1469 = vand.u32 %v106, 4294901760
    %1470 = vmatpush.msra.mxu0 %v1469
    %v1471 = vand.u32 %v117, 4294901760
    %v1472 = vsub.f32 %v117, %v1471
    %v1473 = vand.u32 %v1472, 4294901760
    %1474 = vmatmul.f32.gmra.mxu0 %v1473
    %v1475 = vpop.f32.mrf.mxu0
    %v1476 = vadd.f32 %v1447, %v1475
    %v1477 = vand.u32 %v120, 4294901760
    %v1478 = vsub.f32 %v120, %v1477
    %v1479 = vand.u32 %v1478, 4294901760
    %1480 = vmatmul.f32.gmra.mxu0 %v1479
    %v1481 = vpop.f32.mrf.mxu0
    %v1482 = vadd.f32 %v1452, %v1481
    %1483 = vdwg.mxu0
    %1484 = vmatpush.msra.mxu0 0.0
    %1485 = vmatpush.msra.mxu0 0.0
    %1486 = vmatpush.msra.mxu0 0.0
    %1487 = vmatpush.msra.mxu0 0.0
    %1488 = vmatpush.msra.mxu0 0.0
    %1489 = vmatpush.msra.mxu0 0.0
    %1490 = vmatpush.msra.mxu0 0.0
    %1491 = vmatpush.msra.mxu0 0.0
    %1492 = vmatpush.msra.mxu0 0.0
    %1493 = vmatpush.msra.mxu0 0.0
    %1494 = vmatpush.msra.mxu0 0.0
    %1495 = vmatpush.msra.mxu0 0.0
    %1496 = vmatpush.msra.mxu0 0.0
    %1497 = vmatpush.msra.mxu0 0.0
    %1498 = vmatpush.msra.mxu0 0.0
    %v1499 = vand.u32 %v106, 4294901760
    %v1500 = vsub.f32 %v106, %v1499
    %v1501 = vand.u32 %v1500, 4294901760
    %1502 = vmatpush.msra.mxu0 %v1501
    %v1503 = vand.u32 %v117, 4294901760
    %1504 = vmatmul.f32.gmra.mxu0 %v1503
    %v1505 = vpop.f32.mrf.mxu0
    %v1506 = vadd.f32 %v1476, %v1505
    %v1507 = vand.u32 %v120, 4294901760
    %1508 = vmatmul.f32.gmra.mxu0 %v1507
    %v1509 = vpop.f32.mrf.mxu0
    %v1510 = vadd.f32 %v1482, %v1509
    %1511 = vdwg.mxu0
    %1512 = vmatpush.msra.mxu0 0.0
    %1513 = vmatpush.msra.mxu0 0.0
    %1514 = vmatpush.msra.mxu0 0.0
    %1515 = vmatpush.msra.mxu0 0.0
    %1516 = vmatpush.msra.mxu0 0.0
    %1517 = vmatpush.msra.mxu0 0.0
    %1518 = vmatpush.msra.mxu0 0.0
    %1519 = vmatpush.msra.mxu0 0.0
    %1520 = vmatpush.msra.mxu0 0.0
    %1521 = vmatpush.msra.mxu0 0.0
    %1522 = vmatpush.msra.mxu0 0.0
    %1523 = vmatpush.msra.mxu0 0.0
    %1524 = vmatpush.msra.mxu0 0.0
    %1525 = vmatpush.msra.mxu0 0.0
    %1526 = vmatpush.msra.mxu0 0.0
    %v1527 = vand.u32 %v106, 4294901760
    %1528 = vmatpush.msra.mxu0 %v1527
    %v1529 = vand.u32 %v117, 4294901760
    %1530 = vmatmul.f32.gmra.mxu0 %v1529
    %v1531 = vpop.f32.mrf.mxu0
    %v1532 = vadd.f32 %v1506, %v1531
    %v1533 = vand.u32 %v120, 4294901760
    %1534 = vmatmul.f32.gmra.mxu0 %v1533
    %v1535 = vpop.f32.mrf.mxu0
    %v1536 = vadd.f32 %v1510, %v1535
    %1537 = vdwg.mxu0
    %1538 = vmatpush.msra.mxu0 0.0
    %1539 = vmatpush.msra.mxu0 0.0
    %1540 = vmatpush.msra.mxu0 0.0
    %1541 = vmatpush.msra.mxu0 0.0
    %1542 = vmatpush.msra.mxu0 0.0
    %1543 = vmatpush.msra.mxu0 0.0
    %1544 = vmatpush.msra.mxu0 0.0
    %1545 = vmatpush.msra.mxu0 0.0
    %1546 = vmatpush.msra.mxu0 0.0
    %1547 = vmatpush.msra.mxu0 0.0
    %1548 = vmatpush.msra.mxu0 0.0
    %1549 = vmatpush.msra.mxu0 0.0
    %1550 = vmatpush.msra.mxu0 0.0
    %1551 = vmatpush.msra.mxu0 0.0
    %1552 = vmatpush.msra.mxu0 0.0
    %v1553 = vand.u32 %v107, 4294901760
    %1554 = vmatpush.msra.mxu0 %v1553
    %v1555 = vand.u32 %v117, 4294901760
    %v1556 = vsub.f32 %v117, %v1555
    %v1557 = vand.u32 %v1556, 4294901760
    %v1558 = vsub.f32 %v1556, %v1557
    %v1559 = vand.u32 %v1558, 4294901760
    %1560 = vmatmul.f32.gmra.mxu0 %v1559
    %v1561 = vpop.f32.mrf.mxu0
    %v1562 = vadd.f32 0.0, %v1561
    %v1563 = vand.u32 %v120, 4294901760
    %v1564 = vsub.f32 %v120, %v1563
    %v1565 = vand.u32 %v1564, 4294901760
    %v1566 = vsub.f32 %v1564, %v1565
    %v1567 = vand.u32 %v1566, 4294901760
    %1568 = vmatmul.f32.gmra.mxu0 %v1567
    %v1569 = vpop.f32.mrf.mxu0
    %v1570 = vadd.f32 0.0, %v1569
    %1571 = vdwg.mxu0
    %1572 = vmatpush.msra.mxu0 0.0
    %1573 = vmatpush.msra.mxu0 0.0
    %1574 = vmatpush.msra.mxu0 0.0
    %1575 = vmatpush.msra.mxu0 0.0
    %1576 = vmatpush.msra.mxu0 0.0
    %1577 = vmatpush.msra.mxu0 0.0
    %1578 = vmatpush.msra.mxu0 0.0
    %1579 = vmatpush.msra.mxu0 0.0
    %1580 = vmatpush.msra.mxu0 0.0
    %1581 = vmatpush.msra.mxu0 0.0
    %1582 = vmatpush.msra.mxu0 0.0
    %1583 = vmatpush.msra.mxu0 0.0
    %1584 = vmatpush.msra.mxu0 0.0
    %1585 = vmatpush.msra.mxu0 0.0
    %1586 = vmatpush.msra.mxu0 0.0
    %v1587 = vand.u32 %v107, 4294901760
    %v1588 = vsub.f32 %v107, %v1587
    %v1589 = vand.u32 %v1588, 4294901760
    %v1590 = vsub.f32 %v1588, %v1589
    %v1591 = vand.u32 %v1590, 4294901760
    %1592 = vmatpush.msra.mxu0 %v1591
    %v1593 = vand.u32 %v117, 4294901760
    %1594 = vmatmul.f32.gmra.mxu0 %v1593
    %v1595 = vpop.f32.mrf.mxu0
    %v1596 = vadd.f32 %v1562, %v1595
    %v1597 = vand.u32 %v120, 4294901760
    %1598 = vmatmul.f32.gmra.mxu0 %v1597
    %v1599 = vpop.f32.mrf.mxu0
    %v1600 = vadd.f32 %v1570, %v1599
    %1601 = vdwg.mxu0
    %1602 = vmatpush.msra.mxu0 0.0
    %1603 = vmatpush.msra.mxu0 0.0
    %1604 = vmatpush.msra.mxu0 0.0
    %1605 = vmatpush.msra.mxu0 0.0
    %1606 = vmatpush.msra.mxu0 0.0
    %1607 = vmatpush.msra.mxu0 0.0
    %1608 = vmatpush.msra.mxu0 0.0
    %1609 = vmatpush.msra.mxu0 0.0
    %1610 = vmatpush.msra.mxu0 0.0
    %1611 = vmatpush.msra.mxu0 0.0
    %1612 = vmatpush.msra.mxu0 0.0
    %1613 = vmatpush.msra.mxu0 0.0
    %1614 = vmatpush.msra.mxu0 0.0
    %1615 = vmatpush.msra.mxu0 0.0
    %1616 = vmatpush.msra.mxu0 0.0
    %v1617 = vand.u32 %v107, 4294901760
    %v1618 = vsub.f32 %v107, %v1617
    %1619 = vmatpush.msra.mxu0 %v1618
    %v1620 = vand.u32 %v117, 4294901760
    %v1621 = vsub.f32 %v117, %v1620
    %1622 = vmatmul.f32.gmra.mxu0 %v1621
    %v1623 = vpop.f32.mrf.mxu0
    %v1624 = vadd.f32 %v1596, %v1623
    %v1625 = vand.u32 %v120, 4294901760
    %v1626 = vsub.f32 %v120, %v1625
    %1627 = vmatmul.f32.gmra.mxu0 %v1626
    %v1628 = vpop.f32.mrf.mxu0
    %v1629 = vadd.f32 %v1600, %v1628
    %1630 = vdwg.mxu0
    %1631 = vmatpush.msra.mxu0 0.0
    %1632 = vmatpush.msra.mxu0 0.0
    %1633 = vmatpush.msra.mxu0 0.0
    %1634 = vmatpush.msra.mxu0 0.0
    %1635 = vmatpush.msra.mxu0 0.0
    %1636 = vmatpush.msra.mxu0 0.0
    %1637 = vmatpush.msra.mxu0 0.0
    %1638 = vmatpush.msra.mxu0 0.0
    %1639 = vmatpush.msra.mxu0 0.0
    %1640 = vmatpush.msra.mxu0 0.0
    %1641 = vmatpush.msra.mxu0 0.0
    %1642 = vmatpush.msra.mxu0 0.0
    %1643 = vmatpush.msra.mxu0 0.0
    %1644 = vmatpush.msra.mxu0 0.0
    %1645 = vmatpush.msra.mxu0 0.0
    %v1646 = vand.u32 %v107, 4294901760
    %1647 = vmatpush.msra.mxu0 %v1646
    %v1648 = vand.u32 %v117, 4294901760
    %v1649 = vsub.f32 %v117, %v1648
    %v1650 = vand.u32 %v1649, 4294901760
    %1651 = vmatmul.f32.gmra.mxu0 %v1650
    %v1652 = vpop.f32.mrf.mxu0
    %v1653 = vadd.f32 %v1624, %v1652
    %v1654 = vand.u32 %v120, 4294901760
    %v1655 = vsub.f32 %v120, %v1654
    %v1656 = vand.u32 %v1655, 4294901760
    %1657 = vmatmul.f32.gmra.mxu0 %v1656
    %v1658 = vpop.f32.mrf.mxu0
    %v1659 = vadd.f32 %v1629, %v1658
    %1660 = vdwg.mxu0
    %1661 = vmatpush.msra.mxu0 0.0
    %1662 = vmatpush.msra.mxu0 0.0
    %1663 = vmatpush.msra.mxu0 0.0
    %1664 = vmatpush.msra.mxu0 0.0
    %1665 = vmatpush.msra.mxu0 0.0
    %1666 = vmatpush.msra.mxu0 0.0
    %1667 = vmatpush.msra.mxu0 0.0
    %1668 = vmatpush.msra.mxu0 0.0
    %1669 = vmatpush.msra.mxu0 0.0
    %1670 = vmatpush.msra.mxu0 0.0
    %1671 = vmatpush.msra.mxu0 0.0
    %1672 = vmatpush.msra.mxu0 0.0
    %1673 = vmatpush.msra.mxu0 0.0
    %1674 = vmatpush.msra.mxu0 0.0
    %1675 = vmatpush.msra.mxu0 0.0
    %v1676 = vand.u32 %v107, 4294901760
    %v1677 = vsub.f32 %v107, %v1676
    %v1678 = vand.u32 %v1677, 4294901760
    %1679 = vmatpush.msra.mxu0 %v1678
    %v1680 = vand.u32 %v117, 4294901760
    %1681 = vmatmul.f32.gmra.mxu0 %v1680
    %v1682 = vpop.f32.mrf.mxu0
    %v1683 = vadd.f32 %v1653, %v1682
    %v1684 = vand.u32 %v120, 4294901760
    %1685 = vmatmul.f32.gmra.mxu0 %v1684
    %v1686 = vpop.f32.mrf.mxu0
    %v1687 = vadd.f32 %v1659, %v1686
    %1688 = vdwg.mxu0
    %1689 = vmatpush.msra.mxu0 0.0
    %1690 = vmatpush.msra.mxu0 0.0
    %1691 = vmatpush.msra.mxu0 0.0
    %1692 = vmatpush.msra.mxu0 0.0
    %1693 = vmatpush.msra.mxu0 0.0
    %1694 = vmatpush.msra.mxu0 0.0
    %1695 = vmatpush.msra.mxu0 0.0
    %1696 = vmatpush.msra.mxu0 0.0
    %1697 = vmatpush.msra.mxu0 0.0
    %1698 = vmatpush.msra.mxu0 0.0
    %1699 = vmatpush.msra.mxu0 0.0
    %1700 = vmatpush.msra.mxu0 0.0
    %1701 = vmatpush.msra.mxu0 0.0
    %1702 = vmatpush.msra.mxu0 0.0
    %1703 = vmatpush.msra.mxu0 0.0
    %v1704 = vand.u32 %v107, 4294901760
    %1705 = vmatpush.msra.mxu0 %v1704
    %v1706 = vand.u32 %v117, 4294901760
    %1707 = vmatmul.f32.gmra.mxu0 %v1706
    %v1708 = vpop.f32.mrf.mxu0
    %v1709 = vadd.f32 %v1683, %v1708
    %v1710 = vand.u32 %v120, 4294901760
    %1711 = vmatmul.f32.gmra.mxu0 %v1710
    %v1712 = vpop.f32.mrf.mxu0
    %v1713 = vadd.f32 %v1687, %v1712
    %1714 = vdwg.mxu0
    %1715 = vmatpush.msra.mxu0 0.0
    %1716 = vmatpush.msra.mxu0 0.0
    %1717 = vmatpush.msra.mxu0 0.0
    %1718 = vmatpush.msra.mxu0 0.0
    %1719 = vmatpush.msra.mxu0 0.0
    %1720 = vmatpush.msra.mxu0 0.0
    %1721 = vmatpush.msra.mxu0 0.0
    %1722 = vmatpush.msra.mxu0 0.0
    %1723 = vmatpush.msra.mxu0 0.0
    %1724 = vmatpush.msra.mxu0 0.0
    %1725 = vmatpush.msra.mxu0 0.0
    %1726 = vmatpush.msra.mxu0 0.0
    %1727 = vmatpush.msra.mxu0 0.0
    %1728 = vmatpush.msra.mxu0 0.0
    %1729 = vmatpush.msra.mxu0 0.0
    %v1730 = vand.u32 %v108, 4294901760
    %1731 = vmatpush.msra.mxu0 %v1730
    %v1732 = vand.u32 %v117, 4294901760
    %v1733 = vsub.f32 %v117, %v1732
    %v1734 = vand.u32 %v1733, 4294901760
    %v1735 = vsub.f32 %v1733, %v1734
    %v1736 = vand.u32 %v1735, 4294901760
    %1737 = vmatmul.f32.gmra.mxu0 %v1736
    %v1738 = vpop.f32.mrf.mxu0
    %v1739 = vadd.f32 0.0, %v1738
    %v1740 = vand.u32 %v120, 4294901760
    %v1741 = vsub.f32 %v120, %v1740
    %v1742 = vand.u32 %v1741, 4294901760
    %v1743 = vsub.f32 %v1741, %v1742
    %v1744 = vand.u32 %v1743, 4294901760
    %1745 = vmatmul.f32.gmra.mxu0 %v1744
    %v1746 = vpop.f32.mrf.mxu0
    %v1747 = vadd.f32 0.0, %v1746
    %1748 = vdwg.mxu0
    %1749 = vmatpush.msra.mxu0 0.0
    %1750 = vmatpush.msra.mxu0 0.0
    %1751 = vmatpush.msra.mxu0 0.0
    %1752 = vmatpush.msra.mxu0 0.0
    %1753 = vmatpush.msra.mxu0 0.0
    %1754 = vmatpush.msra.mxu0 0.0
    %1755 = vmatpush.msra.mxu0 0.0
    %1756 = vmatpush.msra.mxu0 0.0
    %1757 = vmatpush.msra.mxu0 0.0
    %1758 = vmatpush.msra.mxu0 0.0
    %1759 = vmatpush.msra.mxu0 0.0
    %1760 = vmatpush.msra.mxu0 0.0
    %1761 = vmatpush.msra.mxu0 0.0
    %1762 = vmatpush.msra.mxu0 0.0
    %1763 = vmatpush.msra.mxu0 0.0
    %v1764 = vand.u32 %v108, 4294901760
    %v1765 = vsub.f32 %v108, %v1764
    %v1766 = vand.u32 %v1765, 4294901760
    %v1767 = vsub.f32 %v1765, %v1766
    %v1768 = vand.u32 %v1767, 4294901760
    %1769 = vmatpush.msra.mxu0 %v1768
    %v1770 = vand.u32 %v117, 4294901760
    %1771 = vmatmul.f32.gmra.mxu0 %v1770
    %v1772 = vpop.f32.mrf.mxu0
    %v1773 = vadd.f32 %v1739, %v1772
    %v1774 = vand.u32 %v120, 4294901760
    %1775 = vmatmul.f32.gmra.mxu0 %v1774
    %v1776 = vpop.f32.mrf.mxu0
    %v1777 = vadd.f32 %v1747, %v1776
    %1778 = vdwg.mxu0
    %1779 = vmatpush.msra.mxu0 0.0
    %1780 = vmatpush.msra.mxu0 0.0
    %1781 = vmatpush.msra.mxu0 0.0
    %1782 = vmatpush.msra.mxu0 0.0
    %1783 = vmatpush.msra.mxu0 0.0
    %1784 = vmatpush.msra.mxu0 0.0
    %1785 = vmatpush.msra.mxu0 0.0
    %1786 = vmatpush.msra.mxu0 0.0
    %1787 = vmatpush.msra.mxu0 0.0
    %1788 = vmatpush.msra.mxu0 0.0
    %1789 = vmatpush.msra.mxu0 0.0
    %1790 = vmatpush.msra.mxu0 0.0
    %1791 = vmatpush.msra.mxu0 0.0
    %1792 = vmatpush.msra.mxu0 0.0
    %1793 = vmatpush.msra.mxu0 0.0
    %v1794 = vand.u32 %v108, 4294901760
    %v1795 = vsub.f32 %v108, %v1794
    %1796 = vmatpush.msra.mxu0 %v1795
    %v1797 = vand.u32 %v117, 4294901760
    %v1798 = vsub.f32 %v117, %v1797
    %1799 = vmatmul.f32.gmra.mxu0 %v1798
    %v1800 = vpop.f32.mrf.mxu0
    %v1801 = vadd.f32 %v1773, %v1800
    %v1802 = vand.u32 %v120, 4294901760
    %v1803 = vsub.f32 %v120, %v1802
    %1804 = vmatmul.f32.gmra.mxu0 %v1803
    %v1805 = vpop.f32.mrf.mxu0
    %v1806 = vadd.f32 %v1777, %v1805
    %1807 = vdwg.mxu0
    %1808 = vmatpush.msra.mxu0 0.0
    %1809 = vmatpush.msra.mxu0 0.0
    %1810 = vmatpush.msra.mxu0 0.0
    %1811 = vmatpush.msra.mxu0 0.0
    %1812 = vmatpush.msra.mxu0 0.0
    %1813 = vmatpush.msra.mxu0 0.0
    %1814 = vmatpush.msra.mxu0 0.0
    %1815 = vmatpush.msra.mxu0 0.0
    %1816 = vmatpush.msra.mxu0 0.0
    %1817 = vmatpush.msra.mxu0 0.0
    %1818 = vmatpush.msra.mxu0 0.0
    %1819 = vmatpush.msra.mxu0 0.0
    %1820 = vmatpush.msra.mxu0 0.0
    %1821 = vmatpush.msra.mxu0 0.0
    %1822 = vmatpush.msra.mxu0 0.0
    %v1823 = vand.u32 %v108, 4294901760
    %1824 = vmatpush.msra.mxu0 %v1823
    %v1825 = vand.u32 %v117, 4294901760
    %v1826 = vsub.f32 %v117, %v1825
    %v1827 = vand.u32 %v1826, 4294901760
    %1828 = vmatmul.f32.gmra.mxu0 %v1827
    %v1829 = vpop.f32.mrf.mxu0
    %v1830 = vadd.f32 %v1801, %v1829
    %v1831 = vand.u32 %v120, 4294901760
    %v1832 = vsub.f32 %v120, %v1831
    %v1833 = vand.u32 %v1832, 4294901760
    %1834 = vmatmul.f32.gmra.mxu0 %v1833
    %v1835 = vpop.f32.mrf.mxu0
    %v1836 = vadd.f32 %v1806, %v1835
    %1837 = vdwg.mxu0
    %1838 = vmatpush.msra.mxu0 0.0
    %1839 = vmatpush.msra.mxu0 0.0
    %1840 = vmatpush.msra.mxu0 0.0
    %1841 = vmatpush.msra.mxu0 0.0
    %1842 = vmatpush.msra.mxu0 0.0
    %1843 = vmatpush.msra.mxu0 0.0
    %1844 = vmatpush.msra.mxu0 0.0
    %1845 = vmatpush.msra.mxu0 0.0
    %1846 = vmatpush.msra.mxu0 0.0
    %1847 = vmatpush.msra.mxu0 0.0
    %1848 = vmatpush.msra.mxu0 0.0
    %1849 = vmatpush.msra.mxu0 0.0
    %1850 = vmatpush.msra.mxu0 0.0
    %1851 = vmatpush.msra.mxu0 0.0
    %1852 = vmatpush.msra.mxu0 0.0
    %v1853 = vand.u32 %v108, 4294901760
    %v1854 = vsub.f32 %v108, %v1853
    %v1855 = vand.u32 %v1854, 4294901760
    %1856 = vmatpush.msra.mxu0 %v1855
    %v1857 = vand.u32 %v117, 4294901760
    %1858 = vmatmul.f32.gmra.mxu0 %v1857
    %v1859 = vpop.f32.mrf.mxu0
    %v1860 = vadd.f32 %v1830, %v1859
    %v1861 = vand.u32 %v120, 4294901760
    %1862 = vmatmul.f32.gmra.mxu0 %v1861
    %v1863 = vpop.f32.mrf.mxu0
    %v1864 = vadd.f32 %v1836, %v1863
    %1865 = vdwg.mxu0
    %1866 = vmatpush.msra.mxu0 0.0
    %1867 = vmatpush.msra.mxu0 0.0
    %1868 = vmatpush.msra.mxu0 0.0
    %1869 = vmatpush.msra.mxu0 0.0
    %1870 = vmatpush.msra.mxu0 0.0
    %1871 = vmatpush.msra.mxu0 0.0
    %1872 = vmatpush.msra.mxu0 0.0
    %1873 = vmatpush.msra.mxu0 0.0
    %1874 = vmatpush.msra.mxu0 0.0
    %1875 = vmatpush.msra.mxu0 0.0
    %1876 = vmatpush.msra.mxu0 0.0
    %1877 = vmatpush.msra.mxu0 0.0
    %1878 = vmatpush.msra.mxu0 0.0
    %1879 = vmatpush.msra.mxu0 0.0
    %1880 = vmatpush.msra.mxu0 0.0
    %v1881 = vand.u32 %v108, 4294901760
    %1882 = vmatpush.msra.mxu0 %v1881
    %v1883 = vand.u32 %v117, 4294901760
    %1884 = vmatmul.f32.gmra.mxu0 %v1883
    %v1885 = vpop.f32.mrf.mxu0
    %v1886 = vadd.f32 %v1860, %v1885
    %v1887 = vand.u32 %v120, 4294901760
    %1888 = vmatmul.f32.gmra.mxu0 %v1887
    %v1889 = vpop.f32.mrf.mxu0
    %v1890 = vadd.f32 %v1864, %v1889
    %1891 = vdwg.mxu0
    %1892 = vmatpush.msra.mxu0 0.0
    %1893 = vmatpush.msra.mxu0 0.0
    %1894 = vmatpush.msra.mxu0 0.0
    %1895 = vmatpush.msra.mxu0 0.0
    %1896 = vmatpush.msra.mxu0 0.0
    %1897 = vmatpush.msra.mxu0 0.0
    %1898 = vmatpush.msra.mxu0 0.0
    %1899 = vmatpush.msra.mxu0 0.0
    %1900 = vmatpush.msra.mxu0 0.0
    %1901 = vmatpush.msra.mxu0 0.0
    %1902 = vmatpush.msra.mxu0 0.0
    %1903 = vmatpush.msra.mxu0 0.0
    %1904 = vmatpush.msra.mxu0 0.0
    %1905 = vmatpush.msra.mxu0 0.0
    %1906 = vmatpush.msra.mxu0 0.0
    %v1907 = vand.u32 %v109, 4294901760
    %1908 = vmatpush.msra.mxu0 %v1907
    %v1909 = vand.u32 %v117, 4294901760
    %v1910 = vsub.f32 %v117, %v1909
    %v1911 = vand.u32 %v1910, 4294901760
    %v1912 = vsub.f32 %v1910, %v1911
    %v1913 = vand.u32 %v1912, 4294901760
    %1914 = vmatmul.f32.gmra.mxu0 %v1913
    %v1915 = vpop.f32.mrf.mxu0
    %v1916 = vadd.f32 0.0, %v1915
    %v1917 = vand.u32 %v120, 4294901760
    %v1918 = vsub.f32 %v120, %v1917
    %v1919 = vand.u32 %v1918, 4294901760
    %v1920 = vsub.f32 %v1918, %v1919
    %v1921 = vand.u32 %v1920, 4294901760
    %1922 = vmatmul.f32.gmra.mxu0 %v1921
    %v1923 = vpop.f32.mrf.mxu0
    %v1924 = vadd.f32 0.0, %v1923
    %1925 = vdwg.mxu0
    %1926 = vmatpush.msra.mxu0 0.0
    %1927 = vmatpush.msra.mxu0 0.0
    %1928 = vmatpush.msra.mxu0 0.0
    %1929 = vmatpush.msra.mxu0 0.0
    %1930 = vmatpush.msra.mxu0 0.0
    %1931 = vmatpush.msra.mxu0 0.0
    %1932 = vmatpush.msra.mxu0 0.0
    %1933 = vmatpush.msra.mxu0 0.0
    %1934 = vmatpush.msra.mxu0 0.0
    %1935 = vmatpush.msra.mxu0 0.0
    %1936 = vmatpush.msra.mxu0 0.0
    %1937 = vmatpush.msra.mxu0 0.0
    %1938 = vmatpush.msra.mxu0 0.0
    %1939 = vmatpush.msra.mxu0 0.0
    %1940 = vmatpush.msra.mxu0 0.0
    %v1941 = vand.u32 %v109, 4294901760
    %v1942 = vsub.f32 %v109, %v1941
    %v1943 = vand.u32 %v1942, 4294901760
    %v1944 = vsub.f32 %v1942, %v1943
    %v1945 = vand.u32 %v1944, 4294901760
    %1946 = vmatpush.msra.mxu0 %v1945
    %v1947 = vand.u32 %v117, 4294901760
    %1948 = vmatmul.f32.gmra.mxu0 %v1947
    %v1949 = vpop.f32.mrf.mxu0
    %v1950 = vadd.f32 %v1916, %v1949
    %v1951 = vand.u32 %v120, 4294901760
    %1952 = vmatmul.f32.gmra.mxu0 %v1951
    %v1953 = vpop.f32.mrf.mxu0
    %v1954 = vadd.f32 %v1924, %v1953
    %1955 = vdwg.mxu0
    %1956 = vmatpush.msra.mxu0 0.0
    %1957 = vmatpush.msra.mxu0 0.0
    %1958 = vmatpush.msra.mxu0 0.0
    %1959 = vmatpush.msra.mxu0 0.0
    %1960 = vmatpush.msra.mxu0 0.0
    %1961 = vmatpush.msra.mxu0 0.0
    %1962 = vmatpush.msra.mxu0 0.0
    %1963 = vmatpush.msra.mxu0 0.0
    %1964 = vmatpush.msra.mxu0 0.0
    %1965 = vmatpush.msra.mxu0 0.0
    %1966 = vmatpush.msra.mxu0 0.0
    %1967 = vmatpush.msra.mxu0 0.0
    %1968 = vmatpush.msra.mxu0 0.0
    %1969 = vmatpush.msra.mxu0 0.0
    %1970 = vmatpush.msra.mxu0 0.0
    %v1971 = vand.u32 %v109, 4294901760
    %v1972 = vsub.f32 %v109, %v1971
    %1973 = vmatpush.msra.mxu0 %v1972
    %v1974 = vand.u32 %v117, 4294901760
    %v1975 = vsub.f32 %v117, %v1974
    %1976 = vmatmul.f32.gmra.mxu0 %v1975
    %v1977 = vpop.f32.mrf.mxu0
    %v1978 = vadd.f32 %v1950, %v1977
    %v1979 = vand.u32 %v120, 4294901760
    %v1980 = vsub.f32 %v120, %v1979
    %1981 = vmatmul.f32.gmra.mxu0 %v1980
    %v1982 = vpop.f32.mrf.mxu0
    %v1983 = vadd.f32 %v1954, %v1982
    %1984 = vdwg.mxu0
    %1985 = vmatpush.msra.mxu0 0.0
    %1986 = vmatpush.msra.mxu0 0.0
    %1987 = vmatpush.msra.mxu0 0.0
    %1988 = vmatpush.msra.mxu0 0.0
    %1989 = vmatpush.msra.mxu0 0.0
    %1990 = vmatpush.msra.mxu0 0.0
    %1991 = vmatpush.msra.mxu0 0.0
    %1992 = vmatpush.msra.mxu0 0.0
    %1993 = vmatpush.msra.mxu0 0.0
    %1994 = vmatpush.msra.mxu0 0.0
    %1995 = vmatpush.msra.mxu0 0.0
    %1996 = vmatpush.msra.mxu0 0.0
    %1997 = vmatpush.msra.mxu0 0.0
    %1998 = vmatpush.msra.mxu0 0.0
    %1999 = vmatpush.msra.mxu0 0.0
    %v2000 = vand.u32 %v109, 4294901760
    %2001 = vmatpush.msra.mxu0 %v2000
    %v2002 = vand.u32 %v117, 4294901760
    %v2003 = vsub.f32 %v117, %v2002
    %v2004 = vand.u32 %v2003, 4294901760
    %2005 = vmatmul.f32.gmra.mxu0 %v2004
    %v2006 = vpop.f32.mrf.mxu0
    %v2007 = vadd.f32 %v1978, %v2006
    %v2008 = vand.u32 %v120, 4294901760
    %v2009 = vsub.f32 %v120, %v2008
    %v2010 = vand.u32 %v2009, 4294901760
    %2011 = vmatmul.f32.gmra.mxu0 %v2010
    %v2012 = vpop.f32.mrf.mxu0
    %v2013 = vadd.f32 %v1983, %v2012
    %2014 = vdwg.mxu0
    %2015 = vmatpush.msra.mxu0 0.0
    %2016 = vmatpush.msra.mxu0 0.0
    %2017 = vmatpush.msra.mxu0 0.0
    %2018 = vmatpush.msra.mxu0 0.0
    %2019 = vmatpush.msra.mxu0 0.0
    %2020 = vmatpush.msra.mxu0 0.0
    %2021 = vmatpush.msra.mxu0 0.0
    %2022 = vmatpush.msra.mxu0 0.0
    %2023 = vmatpush.msra.mxu0 0.0
    %2024 = vmatpush.msra.mxu0 0.0
    %2025 = vmatpush.msra.mxu0 0.0
    %2026 = vmatpush.msra.mxu0 0.0
    %2027 = vmatpush.msra.mxu0 0.0
    %2028 = vmatpush.msra.mxu0 0.0
    %2029 = vmatpush.msra.mxu0 0.0
    %v2030 = vand.u32 %v109, 4294901760
    %v2031 = vsub.f32 %v109, %v2030
    %v2032 = vand.u32 %v2031, 4294901760
    %2033 = vmatpush.msra.mxu0 %v2032
    %v2034 = vand.u32 %v117, 4294901760
    %2035 = vmatmul.f32.gmra.mxu0 %v2034
    %v2036 = vpop.f32.mrf.mxu0
    %v2037 = vadd.f32 %v2007, %v2036
    %v2038 = vand.u32 %v120, 4294901760
    %2039 = vmatmul.f32.gmra.mxu0 %v2038
    %v2040 = vpop.f32.mrf.mxu0
    %v2041 = vadd.f32 %v2013, %v2040
    %2042 = vdwg.mxu0
    %2043 = vmatpush.msra.mxu0 0.0
    %2044 = vmatpush.msra.mxu0 0.0
    %2045 = vmatpush.msra.mxu0 0.0
    %2046 = vmatpush.msra.mxu0 0.0
    %2047 = vmatpush.msra.mxu0 0.0
    %2048 = vmatpush.msra.mxu0 0.0
    %2049 = vmatpush.msra.mxu0 0.0
    %2050 = vmatpush.msra.mxu0 0.0
    %2051 = vmatpush.msra.mxu0 0.0
    %2052 = vmatpush.msra.mxu0 0.0
    %2053 = vmatpush.msra.mxu0 0.0
    %2054 = vmatpush.msra.mxu0 0.0
    %2055 = vmatpush.msra.mxu0 0.0
    %2056 = vmatpush.msra.mxu0 0.0
    %2057 = vmatpush.msra.mxu0 0.0
    %v2058 = vand.u32 %v109, 4294901760
    %2059 = vmatpush.msra.mxu0 %v2058
    %v2060 = vand.u32 %v117, 4294901760
    %2061 = vmatmul.f32.gmra.mxu0 %v2060
    %v2062 = vpop.f32.mrf.mxu0
    %v2063 = vadd.f32 %v2037, %v2062
    %v2064 = vand.u32 %v120, 4294901760
    %2065 = vmatmul.f32.gmra.mxu0 %v2064
    %v2066 = vpop.f32.mrf.mxu0
    %v2067 = vadd.f32 %v2041, %v2066
    %2068 = vdwg.mxu0
    %2069 = vmatpush.msra.mxu0 0.0
    %2070 = vmatpush.msra.mxu0 0.0
    %2071 = vmatpush.msra.mxu0 0.0
    %2072 = vmatpush.msra.mxu0 0.0
    %2073 = vmatpush.msra.mxu0 0.0
    %2074 = vmatpush.msra.mxu0 0.0
    %2075 = vmatpush.msra.mxu0 0.0
    %2076 = vmatpush.msra.mxu0 0.0
    %2077 = vmatpush.msra.mxu0 0.0
    %2078 = vmatpush.msra.mxu0 0.0
    %2079 = vmatpush.msra.mxu0 0.0
    %2080 = vmatpush.msra.mxu0 0.0
    %2081 = vmatpush.msra.mxu0 0.0
    %2082 = vmatpush.msra.mxu0 0.0
    %2083 = vmatpush.msra.mxu0 0.0
    %v2084 = vand.u32 %v110, 4294901760
    %2085 = vmatpush.msra.mxu0 %v2084
    %v2086 = vand.u32 %v117, 4294901760
    %v2087 = vsub.f32 %v117, %v2086
    %v2088 = vand.u32 %v2087, 4294901760
    %v2089 = vsub.f32 %v2087, %v2088
    %v2090 = vand.u32 %v2089, 4294901760
    %2091 = vmatmul.f32.gmra.mxu0 %v2090
    %v2092 = vpop.f32.mrf.mxu0
    %v2093 = vadd.f32 0.0, %v2092
    %v2094 = vand.u32 %v120, 4294901760
    %v2095 = vsub.f32 %v120, %v2094
    %v2096 = vand.u32 %v2095, 4294901760
    %v2097 = vsub.f32 %v2095, %v2096
    %v2098 = vand.u32 %v2097, 4294901760
    %2099 = vmatmul.f32.gmra.mxu0 %v2098
    %v2100 = vpop.f32.mrf.mxu0
    %v2101 = vadd.f32 0.0, %v2100
    %2102 = vdwg.mxu0
    %2103 = vmatpush.msra.mxu0 0.0
    %2104 = vmatpush.msra.mxu0 0.0
    %2105 = vmatpush.msra.mxu0 0.0
    %2106 = vmatpush.msra.mxu0 0.0
    %2107 = vmatpush.msra.mxu0 0.0
    %2108 = vmatpush.msra.mxu0 0.0
    %2109 = vmatpush.msra.mxu0 0.0
    %2110 = vmatpush.msra.mxu0 0.0
    %2111 = vmatpush.msra.mxu0 0.0
    %2112 = vmatpush.msra.mxu0 0.0
    %2113 = vmatpush.msra.mxu0 0.0
    %2114 = vmatpush.msra.mxu0 0.0
    %2115 = vmatpush.msra.mxu0 0.0
    %2116 = vmatpush.msra.mxu0 0.0
    %2117 = vmatpush.msra.mxu0 0.0
    %v2118 = vand.u32 %v110, 4294901760
    %v2119 = vsub.f32 %v110, %v2118
    %v2120 = vand.u32 %v2119, 4294901760
    %v2121 = vsub.f32 %v2119, %v2120
    %v2122 = vand.u32 %v2121, 4294901760
    %2123 = vmatpush.msra.mxu0 %v2122
    %v2124 = vand.u32 %v117, 4294901760
    %2125 = vmatmul.f32.gmra.mxu0 %v2124
    %v2126 = vpop.f32.mrf.mxu0
    %v2127 = vadd.f32 %v2093, %v2126
    %v2128 = vand.u32 %v120, 4294901760
    %2129 = vmatmul.f32.gmra.mxu0 %v2128
    %v2130 = vpop.f32.mrf.mxu0
    %v2131 = vadd.f32 %v2101, %v2130
    %2132 = vdwg.mxu0
    %2133 = vmatpush.msra.mxu0 0.0
    %2134 = vmatpush.msra.mxu0 0.0
    %2135 = vmatpush.msra.mxu0 0.0
    %2136 = vmatpush.msra.mxu0 0.0
    %2137 = vmatpush.msra.mxu0 0.0
    %2138 = vmatpush.msra.mxu0 0.0
    %2139 = vmatpush.msra.mxu0 0.0
    %2140 = vmatpush.msra.mxu0 0.0
    %2141 = vmatpush.msra.mxu0 0.0
    %2142 = vmatpush.msra.mxu0 0.0
    %2143 = vmatpush.msra.mxu0 0.0
    %2144 = vmatpush.msra.mxu0 0.0
    %2145 = vmatpush.msra.mxu0 0.0
    %2146 = vmatpush.msra.mxu0 0.0
    %2147 = vmatpush.msra.mxu0 0.0
    %v2148 = vand.u32 %v110, 4294901760
    %v2149 = vsub.f32 %v110, %v2148
    %2150 = vmatpush.msra.mxu0 %v2149
    %v2151 = vand.u32 %v117, 4294901760
    %v2152 = vsub.f32 %v117, %v2151
    %2153 = vmatmul.f32.gmra.mxu0 %v2152
    %v2154 = vpop.f32.mrf.mxu0
    %v2155 = vadd.f32 %v2127, %v2154
    %v2156 = vand.u32 %v120, 4294901760
    %v2157 = vsub.f32 %v120, %v2156
    %2158 = vmatmul.f32.gmra.mxu0 %v2157
    %v2159 = vpop.f32.mrf.mxu0
    %v2160 = vadd.f32 %v2131, %v2159
    %2161 = vdwg.mxu0
    %2162 = vmatpush.msra.mxu0 0.0
    %2163 = vmatpush.msra.mxu0 0.0
    %2164 = vmatpush.msra.mxu0 0.0
    %2165 = vmatpush.msra.mxu0 0.0
    %2166 = vmatpush.msra.mxu0 0.0
    %2167 = vmatpush.msra.mxu0 0.0
    %2168 = vmatpush.msra.mxu0 0.0
    %2169 = vmatpush.msra.mxu0 0.0
    %2170 = vmatpush.msra.mxu0 0.0
    %2171 = vmatpush.msra.mxu0 0.0
    %2172 = vmatpush.msra.mxu0 0.0
    %2173 = vmatpush.msra.mxu0 0.0
    %2174 = vmatpush.msra.mxu0 0.0
    %2175 = vmatpush.msra.mxu0 0.0
    %2176 = vmatpush.msra.mxu0 0.0
    %v2177 = vand.u32 %v110, 4294901760
    %2178 = vmatpush.msra.mxu0 %v2177
    %v2179 = vand.u32 %v117, 4294901760
    %v2180 = vsub.f32 %v117, %v2179
    %v2181 = vand.u32 %v2180, 4294901760
    %2182 = vmatmul.f32.gmra.mxu0 %v2181
    %v2183 = vpop.f32.mrf.mxu0
    %v2184 = vadd.f32 %v2155, %v2183
    %v2185 = vand.u32 %v120, 4294901760
    %v2186 = vsub.f32 %v120, %v2185
    %v2187 = vand.u32 %v2186, 4294901760
    %2188 = vmatmul.f32.gmra.mxu0 %v2187
    %v2189 = vpop.f32.mrf.mxu0
    %v2190 = vadd.f32 %v2160, %v2189
    %2191 = vdwg.mxu0
    %2192 = vmatpush.msra.mxu0 0.0
    %2193 = vmatpush.msra.mxu0 0.0
    %2194 = vmatpush.msra.mxu0 0.0
    %2195 = vmatpush.msra.mxu0 0.0
    %2196 = vmatpush.msra.mxu0 0.0
    %2197 = vmatpush.msra.mxu0 0.0
    %2198 = vmatpush.msra.mxu0 0.0
    %2199 = vmatpush.msra.mxu0 0.0
    %2200 = vmatpush.msra.mxu0 0.0
    %2201 = vmatpush.msra.mxu0 0.0
    %2202 = vmatpush.msra.mxu0 0.0
    %2203 = vmatpush.msra.mxu0 0.0
    %2204 = vmatpush.msra.mxu0 0.0
    %2205 = vmatpush.msra.mxu0 0.0
    %2206 = vmatpush.msra.mxu0 0.0
    %v2207 = vand.u32 %v110, 4294901760
    %v2208 = vsub.f32 %v110, %v2207
    %v2209 = vand.u32 %v2208, 4294901760
    %2210 = vmatpush.msra.mxu0 %v2209
    %v2211 = vand.u32 %v117, 4294901760
    %2212 = vmatmul.f32.gmra.mxu0 %v2211
    %v2213 = vpop.f32.mrf.mxu0
    %v2214 = vadd.f32 %v2184, %v2213
    %v2215 = vand.u32 %v120, 4294901760
    %2216 = vmatmul.f32.gmra.mxu0 %v2215
    %v2217 = vpop.f32.mrf.mxu0
    %v2218 = vadd.f32 %v2190, %v2217
    %2219 = vdwg.mxu0
    %2220 = vmatpush.msra.mxu0 0.0
    %2221 = vmatpush.msra.mxu0 0.0
    %2222 = vmatpush.msra.mxu0 0.0
    %2223 = vmatpush.msra.mxu0 0.0
    %2224 = vmatpush.msra.mxu0 0.0
    %2225 = vmatpush.msra.mxu0 0.0
    %2226 = vmatpush.msra.mxu0 0.0
    %2227 = vmatpush.msra.mxu0 0.0
    %2228 = vmatpush.msra.mxu0 0.0
    %2229 = vmatpush.msra.mxu0 0.0
    %2230 = vmatpush.msra.mxu0 0.0
    %2231 = vmatpush.msra.mxu0 0.0
    %2232 = vmatpush.msra.mxu0 0.0
    %2233 = vmatpush.msra.mxu0 0.0
    %2234 = vmatpush.msra.mxu0 0.0
    %v2235 = vand.u32 %v110, 4294901760
    %2236 = vmatpush.msra.mxu0 %v2235
    %v2237 = vand.u32 %v117, 4294901760
    %2238 = vmatmul.f32.gmra.mxu0 %v2237
    %v2239 = vpop.f32.mrf.mxu0
    %v2240 = vadd.f32 %v2214, %v2239
    %v2241 = vand.u32 %v120, 4294901760
    %2242 = vmatmul.f32.gmra.mxu0 %v2241
    %v2243 = vpop.f32.mrf.mxu0
    %v2244 = vadd.f32 %v2218, %v2243
    %2245 = vdwg.mxu0
    %2246 = vmatpush.msra.mxu0 0.0
    %2247 = vmatpush.msra.mxu0 0.0
    %2248 = vmatpush.msra.mxu0 0.0
    %2249 = vmatpush.msra.mxu0 0.0
    %2250 = vmatpush.msra.mxu0 0.0
    %2251 = vmatpush.msra.mxu0 0.0
    %2252 = vmatpush.msra.mxu0 0.0
    %2253 = vmatpush.msra.mxu0 0.0
    %2254 = vmatpush.msra.mxu0 0.0
    %2255 = vmatpush.msra.mxu0 0.0
    %2256 = vmatpush.msra.mxu0 0.0
    %2257 = vmatpush.msra.mxu0 0.0
    %2258 = vmatpush.msra.mxu0 0.0
    %2259 = vmatpush.msra.mxu0 0.0
    %2260 = vmatpush.msra.mxu0 0.0
    %v2261 = vand.u32 %v111, 4294901760
    %2262 = vmatpush.msra.mxu0 %v2261
    %v2263 = vand.u32 %v117, 4294901760
    %v2264 = vsub.f32 %v117, %v2263
    %v2265 = vand.u32 %v2264, 4294901760
    %v2266 = vsub.f32 %v2264, %v2265
    %v2267 = vand.u32 %v2266, 4294901760
    %2268 = vmatmul.f32.gmra.mxu0 %v2267
    %v2269 = vpop.f32.mrf.mxu0
    %v2270 = vadd.f32 0.0, %v2269
    %v2271 = vand.u32 %v120, 4294901760
    %v2272 = vsub.f32 %v120, %v2271
    %v2273 = vand.u32 %v2272, 4294901760
    %v2274 = vsub.f32 %v2272, %v2273
    %v2275 = vand.u32 %v2274, 4294901760
    %2276 = vmatmul.f32.gmra.mxu0 %v2275
    %v2277 = vpop.f32.mrf.mxu0
    %v2278 = vadd.f32 0.0, %v2277
    %2279 = vdwg.mxu0
    %2280 = vmatpush.msra.mxu0 0.0
    %2281 = vmatpush.msra.mxu0 0.0
    %2282 = vmatpush.msra.mxu0 0.0
    %2283 = vmatpush.msra.mxu0 0.0
    %2284 = vmatpush.msra.mxu0 0.0
    %2285 = vmatpush.msra.mxu0 0.0
    %2286 = vmatpush.msra.mxu0 0.0
    %2287 = vmatpush.msra.mxu0 0.0
    %2288 = vmatpush.msra.mxu0 0.0
    %2289 = vmatpush.msra.mxu0 0.0
    %2290 = vmatpush.msra.mxu0 0.0
    %2291 = vmatpush.msra.mxu0 0.0
    %2292 = vmatpush.msra.mxu0 0.0
    %2293 = vmatpush.msra.mxu0 0.0
    %2294 = vmatpush.msra.mxu0 0.0
    %v2295 = vand.u32 %v111, 4294901760
    %v2296 = vsub.f32 %v111, %v2295
    %v2297 = vand.u32 %v2296, 4294901760
    %v2298 = vsub.f32 %v2296, %v2297
    %v2299 = vand.u32 %v2298, 4294901760
    %2300 = vmatpush.msra.mxu0 %v2299
    %v2301 = vand.u32 %v117, 4294901760
    %2302 = vmatmul.f32.gmra.mxu0 %v2301
    %v2303 = vpop.f32.mrf.mxu0
    %v2304 = vadd.f32 %v2270, %v2303
    %v2305 = vand.u32 %v120, 4294901760
    %2306 = vmatmul.f32.gmra.mxu0 %v2305
    %v2307 = vpop.f32.mrf.mxu0
    %v2308 = vadd.f32 %v2278, %v2307
    %2309 = vdwg.mxu0
    %2310 = vmatpush.msra.mxu0 0.0
    %2311 = vmatpush.msra.mxu0 0.0
    %2312 = vmatpush.msra.mxu0 0.0
    %2313 = vmatpush.msra.mxu0 0.0
    %2314 = vmatpush.msra.mxu0 0.0
    %2315 = vmatpush.msra.mxu0 0.0
    %2316 = vmatpush.msra.mxu0 0.0
    %2317 = vmatpush.msra.mxu0 0.0
    %2318 = vmatpush.msra.mxu0 0.0
    %2319 = vmatpush.msra.mxu0 0.0
    %2320 = vmatpush.msra.mxu0 0.0
    %2321 = vmatpush.msra.mxu0 0.0
    %2322 = vmatpush.msra.mxu0 0.0
    %2323 = vmatpush.msra.mxu0 0.0
    %2324 = vmatpush.msra.mxu0 0.0
    %v2325 = vand.u32 %v111, 4294901760
    %v2326 = vsub.f32 %v111, %v2325
    %2327 = vmatpush.msra.mxu0 %v2326
    %v2328 = vand.u32 %v117, 4294901760
    %v2329 = vsub.f32 %v117, %v2328
    %2330 = vmatmul.f32.gmra.mxu0 %v2329
    %v2331 = vpop.f32.mrf.mxu0
    %v2332 = vadd.f32 %v2304, %v2331
    %v2333 = vand.u32 %v120, 4294901760
    %v2334 = vsub.f32 %v120, %v2333
    %2335 = vmatmul.f32.gmra.mxu0 %v2334
    %v2336 = vpop.f32.mrf.mxu0
    %v2337 = vadd.f32 %v2308, %v2336
    %2338 = vdwg.mxu0
    %2339 = vmatpush.msra.mxu0 0.0
    %2340 = vmatpush.msra.mxu0 0.0
    %2341 = vmatpush.msra.mxu0 0.0
    %2342 = vmatpush.msra.mxu0 0.0
    %2343 = vmatpush.msra.mxu0 0.0
    %2344 = vmatpush.msra.mxu0 0.0
    %2345 = vmatpush.msra.mxu0 0.0
    %2346 = vmatpush.msra.mxu0 0.0
    %2347 = vmatpush.msra.mxu0 0.0
    %2348 = vmatpush.msra.mxu0 0.0
    %2349 = vmatpush.msra.mxu0 0.0
    %2350 = vmatpush.msra.mxu0 0.0
    %2351 = vmatpush.msra.mxu0 0.0
    %2352 = vmatpush.msra.mxu0 0.0
    %2353 = vmatpush.msra.mxu0 0.0
    %v2354 = vand.u32 %v111, 4294901760
    %2355 = vmatpush.msra.mxu0 %v2354
    %v2356 = vand.u32 %v117, 4294901760
    %v2357 = vsub.f32 %v117, %v2356
    %v2358 = vand.u32 %v2357, 4294901760
    %2359 = vmatmul.f32.gmra.mxu0 %v2358
    %v2360 = vpop.f32.mrf.mxu0
    %v2361 = vadd.f32 %v2332, %v2360
    %v2362 = vand.u32 %v120, 4294901760
    %v2363 = vsub.f32 %v120, %v2362
    %v2364 = vand.u32 %v2363, 4294901760
    %2365 = vmatmul.f32.gmra.mxu0 %v2364
    %v2366 = vpop.f32.mrf.mxu0
    %v2367 = vadd.f32 %v2337, %v2366
    %2368 = vdwg.mxu0
    %2369 = vmatpush.msra.mxu0 0.0
    %2370 = vmatpush.msra.mxu0 0.0
    %2371 = vmatpush.msra.mxu0 0.0
    %2372 = vmatpush.msra.mxu0 0.0
    %2373 = vmatpush.msra.mxu0 0.0
    %2374 = vmatpush.msra.mxu0 0.0
    %2375 = vmatpush.msra.mxu0 0.0
    %2376 = vmatpush.msra.mxu0 0.0
    %2377 = vmatpush.msra.mxu0 0.0
    %2378 = vmatpush.msra.mxu0 0.0
    %2379 = vmatpush.msra.mxu0 0.0
    %2380 = vmatpush.msra.mxu0 0.0
    %2381 = vmatpush.msra.mxu0 0.0
    %2382 = vmatpush.msra.mxu0 0.0
    %2383 = vmatpush.msra.mxu0 0.0
    %v2384 = vand.u32 %v111, 4294901760
    %v2385 = vsub.f32 %v111, %v2384
    %v2386 = vand.u32 %v2385, 4294901760
    %2387 = vmatpush.msra.mxu0 %v2386
    %v2388 = vand.u32 %v117, 4294901760
    %2389 = vmatmul.f32.gmra.mxu0 %v2388
    %v2390 = vpop.f32.mrf.mxu0
    %v2391 = vadd.f32 %v2361, %v2390
    %v2392 = vand.u32 %v120, 4294901760
    %2393 = vmatmul.f32.gmra.mxu0 %v2392
    %v2394 = vpop.f32.mrf.mxu0
    %v2395 = vadd.f32 %v2367, %v2394
    %2396 = vdwg.mxu0
    %2397 = vmatpush.msra.mxu0 0.0
    %2398 = vmatpush.msra.mxu0 0.0
    %2399 = vmatpush.msra.mxu0 0.0
    %2400 = vmatpush.msra.mxu0 0.0
    %2401 = vmatpush.msra.mxu0 0.0
    %2402 = vmatpush.msra.mxu0 0.0
    %2403 = vmatpush.msra.mxu0 0.0
    %2404 = vmatpush.msra.mxu0 0.0
    %2405 = vmatpush.msra.mxu0 0.0
    %2406 = vmatpush.msra.mxu0 0.0
    %2407 = vmatpush.msra.mxu0 0.0
    %2408 = vmatpush.msra.mxu0 0.0
    %2409 = vmatpush.msra.mxu0 0.0
    %2410 = vmatpush.msra.mxu0 0.0
    %2411 = vmatpush.msra.mxu0 0.0
    %v2412 = vand.u32 %v111, 4294901760
    %2413 = vmatpush.msra.mxu0 %v2412
    %v2414 = vand.u32 %v117, 4294901760
    %2415 = vmatmul.f32.gmra.mxu0 %v2414
    %v2416 = vpop.f32.mrf.mxu0
    %v2417 = vadd.f32 %v2391, %v2416
    %v2418 = vand.u32 %v120, 4294901760
    %2419 = vmatmul.f32.gmra.mxu0 %v2418
    %v2420 = vpop.f32.mrf.mxu0
    %v2421 = vadd.f32 %v2395, %v2420
    %2422 = vdwg.mxu0
    %2423 = vmatpush.msra.mxu0 0.0
    %2424 = vmatpush.msra.mxu0 0.0
    %2425 = vmatpush.msra.mxu0 0.0
    %2426 = vmatpush.msra.mxu0 0.0
    %2427 = vmatpush.msra.mxu0 0.0
    %2428 = vmatpush.msra.mxu0 0.0
    %2429 = vmatpush.msra.mxu0 0.0
    %2430 = vmatpush.msra.mxu0 0.0
    %2431 = vmatpush.msra.mxu0 0.0
    %2432 = vmatpush.msra.mxu0 0.0
    %2433 = vmatpush.msra.mxu0 0.0
    %2434 = vmatpush.msra.mxu0 0.0
    %2435 = vmatpush.msra.mxu0 0.0
    %2436 = vmatpush.msra.mxu0 0.0
    %2437 = vmatpush.msra.mxu0 0.0
    %v2438 = vand.u32 %v112, 4294901760
    %2439 = vmatpush.msra.mxu0 %v2438
    %v2440 = vand.u32 %v117, 4294901760
    %v2441 = vsub.f32 %v117, %v2440
    %v2442 = vand.u32 %v2441, 4294901760
    %v2443 = vsub.f32 %v2441, %v2442
    %v2444 = vand.u32 %v2443, 4294901760
    %2445 = vmatmul.f32.gmra.mxu0 %v2444
    %v2446 = vpop.f32.mrf.mxu0
    %v2447 = vadd.f32 0.0, %v2446
    %v2448 = vand.u32 %v120, 4294901760
    %v2449 = vsub.f32 %v120, %v2448
    %v2450 = vand.u32 %v2449, 4294901760
    %v2451 = vsub.f32 %v2449, %v2450
    %v2452 = vand.u32 %v2451, 4294901760
    %2453 = vmatmul.f32.gmra.mxu0 %v2452
    %v2454 = vpop.f32.mrf.mxu0
    %v2455 = vadd.f32 0.0, %v2454
    %2456 = vdwg.mxu0
    %2457 = vmatpush.msra.mxu0 0.0
    %2458 = vmatpush.msra.mxu0 0.0
    %2459 = vmatpush.msra.mxu0 0.0
    %2460 = vmatpush.msra.mxu0 0.0
    %2461 = vmatpush.msra.mxu0 0.0
    %2462 = vmatpush.msra.mxu0 0.0
    %2463 = vmatpush.msra.mxu0 0.0
    %2464 = vmatpush.msra.mxu0 0.0
    %2465 = vmatpush.msra.mxu0 0.0
    %2466 = vmatpush.msra.mxu0 0.0
    %2467 = vmatpush.msra.mxu0 0.0
    %2468 = vmatpush.msra.mxu0 0.0
    %2469 = vmatpush.msra.mxu0 0.0
    %2470 = vmatpush.msra.mxu0 0.0
    %2471 = vmatpush.msra.mxu0 0.0
    %v2472 = vand.u32 %v112, 4294901760
    %v2473 = vsub.f32 %v112, %v2472
    %v2474 = vand.u32 %v2473, 4294901760
    %v2475 = vsub.f32 %v2473, %v2474
    %v2476 = vand.u32 %v2475, 4294901760
    %2477 = vmatpush.msra.mxu0 %v2476
    %v2478 = vand.u32 %v117, 4294901760
    %2479 = vmatmul.f32.gmra.mxu0 %v2478
    %v2480 = vpop.f32.mrf.mxu0
    %v2481 = vadd.f32 %v2447, %v2480
    %v2482 = vand.u32 %v120, 4294901760
    %2483 = vmatmul.f32.gmra.mxu0 %v2482
    %v2484 = vpop.f32.mrf.mxu0
    %v2485 = vadd.f32 %v2455, %v2484
    %2486 = vdwg.mxu0
    %2487 = vmatpush.msra.mxu0 0.0
    %2488 = vmatpush.msra.mxu0 0.0
    %2489 = vmatpush.msra.mxu0 0.0
    %2490 = vmatpush.msra.mxu0 0.0
    %2491 = vmatpush.msra.mxu0 0.0
    %2492 = vmatpush.msra.mxu0 0.0
    %2493 = vmatpush.msra.mxu0 0.0
    %2494 = vmatpush.msra.mxu0 0.0
    %2495 = vmatpush.msra.mxu0 0.0
    %2496 = vmatpush.msra.mxu0 0.0
    %2497 = vmatpush.msra.mxu0 0.0
    %2498 = vmatpush.msra.mxu0 0.0
    %2499 = vmatpush.msra.mxu0 0.0
    %2500 = vmatpush.msra.mxu0 0.0
    %2501 = vmatpush.msra.mxu0 0.0
    %v2502 = vand.u32 %v112, 4294901760
    %v2503 = vsub.f32 %v112, %v2502
    %2504 = vmatpush.msra.mxu0 %v2503
    %v2505 = vand.u32 %v117, 4294901760
    %v2506 = vsub.f32 %v117, %v2505
    %2507 = vmatmul.f32.gmra.mxu0 %v2506
    %v2508 = vpop.f32.mrf.mxu0
    %v2509 = vadd.f32 %v2481, %v2508
    %v2510 = vand.u32 %v120, 4294901760
    %v2511 = vsub.f32 %v120, %v2510
    %2512 = vmatmul.f32.gmra.mxu0 %v2511
    %v2513 = vpop.f32.mrf.mxu0
    %v2514 = vadd.f32 %v2485, %v2513
    %2515 = vdwg.mxu0
    %2516 = vmatpush.msra.mxu0 0.0
    %2517 = vmatpush.msra.mxu0 0.0
    %2518 = vmatpush.msra.mxu0 0.0
    %2519 = vmatpush.msra.mxu0 0.0
    %2520 = vmatpush.msra.mxu0 0.0
    %2521 = vmatpush.msra.mxu0 0.0
    %2522 = vmatpush.msra.mxu0 0.0
    %2523 = vmatpush.msra.mxu0 0.0
    %2524 = vmatpush.msra.mxu0 0.0
    %2525 = vmatpush.msra.mxu0 0.0
    %2526 = vmatpush.msra.mxu0 0.0
    %2527 = vmatpush.msra.mxu0 0.0
    %2528 = vmatpush.msra.mxu0 0.0
    %2529 = vmatpush.msra.mxu0 0.0
    %2530 = vmatpush.msra.mxu0 0.0
    %v2531 = vand.u32 %v112, 4294901760
    %2532 = vmatpush.msra.mxu0 %v2531
    %v2533 = vand.u32 %v117, 4294901760
    %v2534 = vsub.f32 %v117, %v2533
    %v2535 = vand.u32 %v2534, 4294901760
    %2536 = vmatmul.f32.gmra.mxu0 %v2535
    %v2537 = vpop.f32.mrf.mxu0
    %v2538 = vadd.f32 %v2509, %v2537
    %v2539 = vand.u32 %v120, 4294901760
    %v2540 = vsub.f32 %v120, %v2539
    %v2541 = vand.u32 %v2540, 4294901760
    %2542 = vmatmul.f32.gmra.mxu0 %v2541
    %v2543 = vpop.f32.mrf.mxu0
    %v2544 = vadd.f32 %v2514, %v2543
    %2545 = vdwg.mxu0
    %2546 = vmatpush.msra.mxu0 0.0
    %2547 = vmatpush.msra.mxu0 0.0
    %2548 = vmatpush.msra.mxu0 0.0
    %2549 = vmatpush.msra.mxu0 0.0
    %2550 = vmatpush.msra.mxu0 0.0
    %2551 = vmatpush.msra.mxu0 0.0
    %2552 = vmatpush.msra.mxu0 0.0
    %2553 = vmatpush.msra.mxu0 0.0
    %2554 = vmatpush.msra.mxu0 0.0
    %2555 = vmatpush.msra.mxu0 0.0
    %2556 = vmatpush.msra.mxu0 0.0
    %2557 = vmatpush.msra.mxu0 0.0
    %2558 = vmatpush.msra.mxu0 0.0
    %2559 = vmatpush.msra.mxu0 0.0
    %2560 = vmatpush.msra.mxu0 0.0
    %v2561 = vand.u32 %v112, 4294901760
    %v2562 = vsub.f32 %v112, %v2561
    %v2563 = vand.u32 %v2562, 4294901760
    %2564 = vmatpush.msra.mxu0 %v2563
    %v2565 = vand.u32 %v117, 4294901760
    %2566 = vmatmul.f32.gmra.mxu0 %v2565
    %v2567 = vpop.f32.mrf.mxu0
    %v2568 = vadd.f32 %v2538, %v2567
    %v2569 = vand.u32 %v120, 4294901760
    %2570 = vmatmul.f32.gmra.mxu0 %v2569
    %v2571 = vpop.f32.mrf.mxu0
    %v2572 = vadd.f32 %v2544, %v2571
    %2573 = vdwg.mxu0
    %2574 = vmatpush.msra.mxu0 0.0
    %2575 = vmatpush.msra.mxu0 0.0
    %2576 = vmatpush.msra.mxu0 0.0
    %2577 = vmatpush.msra.mxu0 0.0
    %2578 = vmatpush.msra.mxu0 0.0
    %2579 = vmatpush.msra.mxu0 0.0
    %2580 = vmatpush.msra.mxu0 0.0
    %2581 = vmatpush.msra.mxu0 0.0
    %2582 = vmatpush.msra.mxu0 0.0
    %2583 = vmatpush.msra.mxu0 0.0
    %2584 = vmatpush.msra.mxu0 0.0
    %2585 = vmatpush.msra.mxu0 0.0
    %2586 = vmatpush.msra.mxu0 0.0
    %2587 = vmatpush.msra.mxu0 0.0
    %2588 = vmatpush.msra.mxu0 0.0
    %v2589 = vand.u32 %v112, 4294901760
    %2590 = vmatpush.msra.mxu0 %v2589
    %v2591 = vand.u32 %v117, 4294901760
    %2592 = vmatmul.f32.gmra.mxu0 %v2591
    %v2593 = vpop.f32.mrf.mxu0
    %v2594 = vadd.f32 %v2568, %v2593
    %v2595 = vand.u32 %v120, 4294901760
    %2596 = vmatmul.f32.gmra.mxu0 %v2595
    %v2597 = vpop.f32.mrf.mxu0
    %v2598 = vadd.f32 %v2572, %v2597
    %2599 = vdwg.mxu0
    %2600 = vmatpush.msra.mxu0 0.0
    %2601 = vmatpush.msra.mxu0 0.0
    %2602 = vmatpush.msra.mxu0 0.0
    %2603 = vmatpush.msra.mxu0 0.0
    %2604 = vmatpush.msra.mxu0 0.0
    %2605 = vmatpush.msra.mxu0 0.0
    %2606 = vmatpush.msra.mxu0 0.0
    %2607 = vmatpush.msra.mxu0 0.0
    %2608 = vmatpush.msra.mxu0 0.0
    %2609 = vmatpush.msra.mxu0 0.0
    %2610 = vmatpush.msra.mxu0 0.0
    %2611 = vmatpush.msra.mxu0 0.0
    %2612 = vmatpush.msra.mxu0 0.0
    %2613 = vmatpush.msra.mxu0 0.0
    %2614 = vmatpush.msra.mxu0 0.0
    %v2615 = vand.u32 %v113, 4294901760
    %2616 = vmatpush.msra.mxu0 %v2615
    %v2617 = vand.u32 %v117, 4294901760
    %v2618 = vsub.f32 %v117, %v2617
    %v2619 = vand.u32 %v2618, 4294901760
    %v2620 = vsub.f32 %v2618, %v2619
    %v2621 = vand.u32 %v2620, 4294901760
    %2622 = vmatmul.f32.gmra.mxu0 %v2621
    %v2623 = vpop.f32.mrf.mxu0
    %v2624 = vadd.f32 0.0, %v2623
    %v2625 = vand.u32 %v120, 4294901760
    %v2626 = vsub.f32 %v120, %v2625
    %v2627 = vand.u32 %v2626, 4294901760
    %v2628 = vsub.f32 %v2626, %v2627
    %v2629 = vand.u32 %v2628, 4294901760
    %2630 = vmatmul.f32.gmra.mxu0 %v2629
    %v2631 = vpop.f32.mrf.mxu0
    %v2632 = vadd.f32 0.0, %v2631
    %2633 = vdwg.mxu0
    %2634 = vmatpush.msra.mxu0 0.0
    %2635 = vmatpush.msra.mxu0 0.0
    %2636 = vmatpush.msra.mxu0 0.0
    %2637 = vmatpush.msra.mxu0 0.0
    %2638 = vmatpush.msra.mxu0 0.0
    %2639 = vmatpush.msra.mxu0 0.0
    %2640 = vmatpush.msra.mxu0 0.0
    %2641 = vmatpush.msra.mxu0 0.0
    %2642 = vmatpush.msra.mxu0 0.0
    %2643 = vmatpush.msra.mxu0 0.0
    %2644 = vmatpush.msra.mxu0 0.0
    %2645 = vmatpush.msra.mxu0 0.0
    %2646 = vmatpush.msra.mxu0 0.0
    %2647 = vmatpush.msra.mxu0 0.0
    %2648 = vmatpush.msra.mxu0 0.0
    %v2649 = vand.u32 %v113, 4294901760
    %v2650 = vsub.f32 %v113, %v2649
    %v2651 = vand.u32 %v2650, 4294901760
    %v2652 = vsub.f32 %v2650, %v2651
    %v2653 = vand.u32 %v2652, 4294901760
    %2654 = vmatpush.msra.mxu0 %v2653
    %v2655 = vand.u32 %v117, 4294901760
    %2656 = vmatmul.f32.gmra.mxu0 %v2655
    %v2657 = vpop.f32.mrf.mxu0
    %v2658 = vadd.f32 %v2624, %v2657
    %v2659 = vand.u32 %v120, 4294901760
    %2660 = vmatmul.f32.gmra.mxu0 %v2659
    %v2661 = vpop.f32.mrf.mxu0
    %v2662 = vadd.f32 %v2632, %v2661
    %2663 = vdwg.mxu0
    %2664 = vmatpush.msra.mxu0 0.0
    %2665 = vmatpush.msra.mxu0 0.0
    %2666 = vmatpush.msra.mxu0 0.0
    %2667 = vmatpush.msra.mxu0 0.0
    %2668 = vmatpush.msra.mxu0 0.0
    %2669 = vmatpush.msra.mxu0 0.0
    %2670 = vmatpush.msra.mxu0 0.0
    %2671 = vmatpush.msra.mxu0 0.0
    %2672 = vmatpush.msra.mxu0 0.0
    %2673 = vmatpush.msra.mxu0 0.0
    %2674 = vmatpush.msra.mxu0 0.0
    %2675 = vmatpush.msra.mxu0 0.0
    %2676 = vmatpush.msra.mxu0 0.0
    %2677 = vmatpush.msra.mxu0 0.0
    %2678 = vmatpush.msra.mxu0 0.0
    %v2679 = vand.u32 %v113, 4294901760
    %v2680 = vsub.f32 %v113, %v2679
    %2681 = vmatpush.msra.mxu0 %v2680
    %v2682 = vand.u32 %v117, 4294901760
    %v2683 = vsub.f32 %v117, %v2682
    %2684 = vmatmul.f32.gmra.mxu0 %v2683
    %v2685 = vpop.f32.mrf.mxu0
    %v2686 = vadd.f32 %v2658, %v2685
    %v2687 = vand.u32 %v120, 4294901760
    %v2688 = vsub.f32 %v120, %v2687
    %2689 = vmatmul.f32.gmra.mxu0 %v2688
    %v2690 = vpop.f32.mrf.mxu0
    %v2691 = vadd.f32 %v2662, %v2690
    %2692 = vdwg.mxu0
    %2693 = vmatpush.msra.mxu0 0.0
    %2694 = vmatpush.msra.mxu0 0.0
    %2695 = vmatpush.msra.mxu0 0.0
    %2696 = vmatpush.msra.mxu0 0.0
    %2697 = vmatpush.msra.mxu0 0.0
    %2698 = vmatpush.msra.mxu0 0.0
    %2699 = vmatpush.msra.mxu0 0.0
    %2700 = vmatpush.msra.mxu0 0.0
    %2701 = vmatpush.msra.mxu0 0.0
    %2702 = vmatpush.msra.mxu0 0.0
    %2703 = vmatpush.msra.mxu0 0.0
    %2704 = vmatpush.msra.mxu0 0.0
    %2705 = vmatpush.msra.mxu0 0.0
    %2706 = vmatpush.msra.mxu0 0.0
    %2707 = vmatpush.msra.mxu0 0.0
    %v2708 = vand.u32 %v113, 4294901760
    %2709 = vmatpush.msra.mxu0 %v2708
    %v2710 = vand.u32 %v117, 4294901760
    %v2711 = vsub.f32 %v117, %v2710
    %v2712 = vand.u32 %v2711, 4294901760
    %2713 = vmatmul.f32.gmra.mxu0 %v2712
    %v2714 = vpop.f32.mrf.mxu0
    %v2715 = vadd.f32 %v2686, %v2714
    %v2716 = vand.u32 %v120, 4294901760
    %v2717 = vsub.f32 %v120, %v2716
    %v2718 = vand.u32 %v2717, 4294901760
    %2719 = vmatmul.f32.gmra.mxu0 %v2718
    %v2720 = vpop.f32.mrf.mxu0
    %v2721 = vadd.f32 %v2691, %v2720
    %2722 = vdwg.mxu0
    %2723 = vmatpush.msra.mxu0 0.0
    %2724 = vmatpush.msra.mxu0 0.0
    %2725 = vmatpush.msra.mxu0 0.0
    %2726 = vmatpush.msra.mxu0 0.0
    %2727 = vmatpush.msra.mxu0 0.0
    %2728 = vmatpush.msra.mxu0 0.0
    %2729 = vmatpush.msra.mxu0 0.0
    %2730 = vmatpush.msra.mxu0 0.0
    %2731 = vmatpush.msra.mxu0 0.0
    %2732 = vmatpush.msra.mxu0 0.0
    %2733 = vmatpush.msra.mxu0 0.0
    %2734 = vmatpush.msra.mxu0 0.0
    %2735 = vmatpush.msra.mxu0 0.0
    %2736 = vmatpush.msra.mxu0 0.0
    %2737 = vmatpush.msra.mxu0 0.0
    %v2738 = vand.u32 %v113, 4294901760
    %v2739 = vsub.f32 %v113, %v2738
    %v2740 = vand.u32 %v2739, 4294901760
    %2741 = vmatpush.msra.mxu0 %v2740
    %v2742 = vand.u32 %v117, 4294901760
    %2743 = vmatmul.f32.gmra.mxu0 %v2742
    %v2744 = vpop.f32.mrf.mxu0
    %v2745 = vadd.f32 %v2715, %v2744
    %v2746 = vand.u32 %v120, 4294901760
    %2747 = vmatmul.f32.gmra.mxu0 %v2746
    %v2748 = vpop.f32.mrf.mxu0
    %v2749 = vadd.f32 %v2721, %v2748
    %2750 = vdwg.mxu0
    %2751 = vmatpush.msra.mxu0 0.0
    %2752 = vmatpush.msra.mxu0 0.0
    %2753 = vmatpush.msra.mxu0 0.0
    %2754 = vmatpush.msra.mxu0 0.0
    %2755 = vmatpush.msra.mxu0 0.0
    %2756 = vmatpush.msra.mxu0 0.0
    %2757 = vmatpush.msra.mxu0 0.0
    %2758 = vmatpush.msra.mxu0 0.0
    %2759 = vmatpush.msra.mxu0 0.0
    %2760 = vmatpush.msra.mxu0 0.0
    %2761 = vmatpush.msra.mxu0 0.0
    %2762 = vmatpush.msra.mxu0 0.0
    %2763 = vmatpush.msra.mxu0 0.0
    %2764 = vmatpush.msra.mxu0 0.0
    %2765 = vmatpush.msra.mxu0 0.0
    %v2766 = vand.u32 %v113, 4294901760
    %2767 = vmatpush.msra.mxu0 %v2766
    %v2768 = vand.u32 %v117, 4294901760
    %2769 = vmatmul.f32.gmra.mxu0 %v2768
    %v2770 = vpop.f32.mrf.mxu0
    %v2771 = vadd.f32 %v2745, %v2770
    %v2772 = vand.u32 %v120, 4294901760
    %2773 = vmatmul.f32.gmra.mxu0 %v2772
    %v2774 = vpop.f32.mrf.mxu0
    %v2775 = vadd.f32 %v2749, %v2774
    %2776 = vdwg.mxu0
    %2777 = vmatpush.msra.mxu0 0.0
    %2778 = vmatpush.msra.mxu0 0.0
    %2779 = vmatpush.msra.mxu0 0.0
    %2780 = vmatpush.msra.mxu0 0.0
    %2781 = vmatpush.msra.mxu0 0.0
    %2782 = vmatpush.msra.mxu0 0.0
    %2783 = vmatpush.msra.mxu0 0.0
    %2784 = vmatpush.msra.mxu0 0.0
    %2785 = vmatpush.msra.mxu0 0.0
    %2786 = vmatpush.msra.mxu0 0.0
    %2787 = vmatpush.msra.mxu0 0.0
    %2788 = vmatpush.msra.mxu0 0.0
    %2789 = vmatpush.msra.mxu0 0.0
    %2790 = vmatpush.msra.mxu0 0.0
    %2791 = vmatpush.msra.mxu0 0.0
    %v2792 = vand.u32 %v114, 4294901760
    %2793 = vmatpush.msra.mxu0 %v2792
    %v2794 = vand.u32 %v117, 4294901760
    %v2795 = vsub.f32 %v117, %v2794
    %v2796 = vand.u32 %v2795, 4294901760
    %v2797 = vsub.f32 %v2795, %v2796
    %v2798 = vand.u32 %v2797, 4294901760
    %2799 = vmatmul.f32.gmra.mxu0 %v2798
    %v2800 = vpop.f32.mrf.mxu0
    %v2801 = vadd.f32 0.0, %v2800
    %v2802 = vand.u32 %v120, 4294901760
    %v2803 = vsub.f32 %v120, %v2802
    %v2804 = vand.u32 %v2803, 4294901760
    %v2805 = vsub.f32 %v2803, %v2804
    %v2806 = vand.u32 %v2805, 4294901760
    %2807 = vmatmul.f32.gmra.mxu0 %v2806
    %v2808 = vpop.f32.mrf.mxu0
    %v2809 = vadd.f32 0.0, %v2808
    %2810 = vdwg.mxu0
    %2811 = vmatpush.msra.mxu0 0.0
    %2812 = vmatpush.msra.mxu0 0.0
    %2813 = vmatpush.msra.mxu0 0.0
    %2814 = vmatpush.msra.mxu0 0.0
    %2815 = vmatpush.msra.mxu0 0.0
    %2816 = vmatpush.msra.mxu0 0.0
    %2817 = vmatpush.msra.mxu0 0.0
    %2818 = vmatpush.msra.mxu0 0.0
    %2819 = vmatpush.msra.mxu0 0.0
    %2820 = vmatpush.msra.mxu0 0.0
    %2821 = vmatpush.msra.mxu0 0.0
    %2822 = vmatpush.msra.mxu0 0.0
    %2823 = vmatpush.msra.mxu0 0.0
    %2824 = vmatpush.msra.mxu0 0.0
    %2825 = vmatpush.msra.mxu0 0.0
    %v2826 = vand.u32 %v114, 4294901760
    %v2827 = vsub.f32 %v114, %v2826
    %v2828 = vand.u32 %v2827, 4294901760
    %v2829 = vsub.f32 %v2827, %v2828
    %v2830 = vand.u32 %v2829, 4294901760
    %2831 = vmatpush.msra.mxu0 %v2830
    %v2832 = vand.u32 %v117, 4294901760
    %2833 = vmatmul.f32.gmra.mxu0 %v2832
    %v2834 = vpop.f32.mrf.mxu0
    %v2835 = vadd.f32 %v2801, %v2834
    %v2836 = vand.u32 %v120, 4294901760
    %2837 = vmatmul.f32.gmra.mxu0 %v2836
    %v2838 = vpop.f32.mrf.mxu0
    %v2839 = vadd.f32 %v2809, %v2838
    %2840 = vdwg.mxu0
    %2841 = vmatpush.msra.mxu0 0.0
    %2842 = vmatpush.msra.mxu0 0.0
    %2843 = vmatpush.msra.mxu0 0.0
    %2844 = vmatpush.msra.mxu0 0.0
    %2845 = vmatpush.msra.mxu0 0.0
    %2846 = vmatpush.msra.mxu0 0.0
    %2847 = vmatpush.msra.mxu0 0.0
    %2848 = vmatpush.msra.mxu0 0.0
    %2849 = vmatpush.msra.mxu0 0.0
    %2850 = vmatpush.msra.mxu0 0.0
    %2851 = vmatpush.msra.mxu0 0.0
    %2852 = vmatpush.msra.mxu0 0.0
    %2853 = vmatpush.msra.mxu0 0.0
    %2854 = vmatpush.msra.mxu0 0.0
    %2855 = vmatpush.msra.mxu0 0.0
    %v2856 = vand.u32 %v114, 4294901760
    %v2857 = vsub.f32 %v114, %v2856
    %2858 = vmatpush.msra.mxu0 %v2857
    %v2859 = vand.u32 %v117, 4294901760
    %v2860 = vsub.f32 %v117, %v2859
    %2861 = vmatmul.f32.gmra.mxu0 %v2860
    %v2862 = vpop.f32.mrf.mxu0
    %v2863 = vadd.f32 %v2835, %v2862
    %v2864 = vand.u32 %v120, 4294901760
    %v2865 = vsub.f32 %v120, %v2864
    %2866 = vmatmul.f32.gmra.mxu0 %v2865
    %v2867 = vpop.f32.mrf.mxu0
    %v2868 = vadd.f32 %v2839, %v2867
    %2869 = vdwg.mxu0
    %2870 = vmatpush.msra.mxu0 0.0
    %2871 = vmatpush.msra.mxu0 0.0
    %2872 = vmatpush.msra.mxu0 0.0
    %2873 = vmatpush.msra.mxu0 0.0
    %2874 = vmatpush.msra.mxu0 0.0
    %2875 = vmatpush.msra.mxu0 0.0
    %2876 = vmatpush.msra.mxu0 0.0
    %2877 = vmatpush.msra.mxu0 0.0
    %2878 = vmatpush.msra.mxu0 0.0
    %2879 = vmatpush.msra.mxu0 0.0
    %2880 = vmatpush.msra.mxu0 0.0
    %2881 = vmatpush.msra.mxu0 0.0
    %2882 = vmatpush.msra.mxu0 0.0
    %2883 = vmatpush.msra.mxu0 0.0
    %2884 = vmatpush.msra.mxu0 0.0
    %v2885 = vand.u32 %v114, 4294901760
    %2886 = vmatpush.msra.mxu0 %v2885
    %v2887 = vand.u32 %v117, 4294901760
    %v2888 = vsub.f32 %v117, %v2887
    %v2889 = vand.u32 %v2888, 4294901760
    %2890 = vmatmul.f32.gmra.mxu0 %v2889
    %v2891 = vpop.f32.mrf.mxu0
    %v2892 = vadd.f32 %v2863, %v2891
    %v2893 = vand.u32 %v120, 4294901760
    %v2894 = vsub.f32 %v120, %v2893
    %v2895 = vand.u32 %v2894, 4294901760
    %2896 = vmatmul.f32.gmra.mxu0 %v2895
    %v2897 = vpop.f32.mrf.mxu0
    %v2898 = vadd.f32 %v2868, %v2897
    %2899 = vdwg.mxu0
    %2900 = vmatpush.msra.mxu0 0.0
    %2901 = vmatpush.msra.mxu0 0.0
    %2902 = vmatpush.msra.mxu0 0.0
    %2903 = vmatpush.msra.mxu0 0.0
    %2904 = vmatpush.msra.mxu0 0.0
    %2905 = vmatpush.msra.mxu0 0.0
    %2906 = vmatpush.msra.mxu0 0.0
    %2907 = vmatpush.msra.mxu0 0.0
    %2908 = vmatpush.msra.mxu0 0.0
    %2909 = vmatpush.msra.mxu0 0.0
    %2910 = vmatpush.msra.mxu0 0.0
    %2911 = vmatpush.msra.mxu0 0.0
    %2912 = vmatpush.msra.mxu0 0.0
    %2913 = vmatpush.msra.mxu0 0.0
    %2914 = vmatpush.msra.mxu0 0.0
    %v2915 = vand.u32 %v114, 4294901760
    %v2916 = vsub.f32 %v114, %v2915
    %v2917 = vand.u32 %v2916, 4294901760
    %2918 = vmatpush.msra.mxu0 %v2917
    %v2919 = vand.u32 %v117, 4294901760
    %2920 = vmatmul.f32.gmra.mxu0 %v2919
    %v2921 = vpop.f32.mrf.mxu0
    %v2922 = vadd.f32 %v2892, %v2921
    %v2923 = vand.u32 %v120, 4294901760
    %2924 = vmatmul.f32.gmra.mxu0 %v2923
    %v2925 = vpop.f32.mrf.mxu0
    %v2926 = vadd.f32 %v2898, %v2925
    %2927 = vdwg.mxu0
    %2928 = vmatpush.msra.mxu0 0.0
    %2929 = vmatpush.msra.mxu0 0.0
    %2930 = vmatpush.msra.mxu0 0.0
    %2931 = vmatpush.msra.mxu0 0.0
    %2932 = vmatpush.msra.mxu0 0.0
    %2933 = vmatpush.msra.mxu0 0.0
    %2934 = vmatpush.msra.mxu0 0.0
    %2935 = vmatpush.msra.mxu0 0.0
    %2936 = vmatpush.msra.mxu0 0.0
    %2937 = vmatpush.msra.mxu0 0.0
    %2938 = vmatpush.msra.mxu0 0.0
    %2939 = vmatpush.msra.mxu0 0.0
    %2940 = vmatpush.msra.mxu0 0.0
    %2941 = vmatpush.msra.mxu0 0.0
    %2942 = vmatpush.msra.mxu0 0.0
    %v2943 = vand.u32 %v114, 4294901760
    %2944 = vmatpush.msra.mxu0 %v2943
    %v2945 = vand.u32 %v117, 4294901760
    %2946 = vmatmul.f32.gmra.mxu0 %v2945
    %v2947 = vpop.f32.mrf.mxu0
    %v2948 = vadd.f32 %v2922, %v2947
    %v2949 = vand.u32 %v120, 4294901760
    %2950 = vmatmul.f32.gmra.mxu0 %v2949
    %v2951 = vpop.f32.mrf.mxu0
    %v2952 = vadd.f32 %v2926, %v2951
    %2953 = vdwg.mxu0
    %v2955 = vsel %vm115, %v81, 0
    %v2958 = vsel %vm115, %v82, 0
    %2960 = vmatpush.msra.mxu0 0.0
    %2961 = vmatpush.msra.mxu0 0.0
    %2962 = vmatpush.msra.mxu0 0.0
    %2963 = vmatpush.msra.mxu0 0.0
    %2964 = vmatpush.msra.mxu0 0.0
    %2965 = vmatpush.msra.mxu0 0.0
    %2966 = vmatpush.msra.mxu0 0.0
    %2967 = vmatpush.msra.mxu0 0.0
    %2968 = vmatpush.msra.mxu0 0.0
    %2969 = vmatpush.msra.mxu0 0.0
    %2970 = vmatpush.msra.mxu0 0.0
    %2971 = vmatpush.msra.mxu0 0.0
    %2972 = vmatpush.msra.mxu0 0.0
    %2973 = vmatpush.msra.mxu0 0.0
    %2974 = vmatpush.msra.mxu0 0.0
    %v2975 = vand.u32 %v83, 4294901760
    %2976 = vmatpush.msra.mxu0 %v2975
    %v2977 = vand.u32 %v2955, 4294901760
    %v2978 = vsub.f32 %v2955, %v2977
    %v2979 = vand.u32 %v2978, 4294901760
    %v2980 = vsub.f32 %v2978, %v2979
    %v2981 = vand.u32 %v2980, 4294901760
    %2982 = vmatmul.f32.gmra.mxu0 %v2981
    %v2983 = vpop.f32.mrf.mxu0
    %v2984 = vadd.f32 %v293, %v2983
    %v2985 = vand.u32 %v2958, 4294901760
    %v2986 = vsub.f32 %v2958, %v2985
    %v2987 = vand.u32 %v2986, 4294901760
    %v2988 = vsub.f32 %v2986, %v2987
    %v2989 = vand.u32 %v2988, 4294901760
    %2990 = vmatmul.f32.gmra.mxu0 %v2989
    %v2991 = vpop.f32.mrf.mxu0
    %v2992 = vadd.f32 %v297, %v2991
    %2993 = vdwg.mxu0
    %2994 = vmatpush.msra.mxu0 0.0
    %2995 = vmatpush.msra.mxu0 0.0
    %2996 = vmatpush.msra.mxu0 0.0
    %2997 = vmatpush.msra.mxu0 0.0
    %2998 = vmatpush.msra.mxu0 0.0
    %2999 = vmatpush.msra.mxu0 0.0
    %3000 = vmatpush.msra.mxu0 0.0
    %3001 = vmatpush.msra.mxu0 0.0
    %3002 = vmatpush.msra.mxu0 0.0
    %3003 = vmatpush.msra.mxu0 0.0
    %3004 = vmatpush.msra.mxu0 0.0
    %3005 = vmatpush.msra.mxu0 0.0
    %3006 = vmatpush.msra.mxu0 0.0
    %3007 = vmatpush.msra.mxu0 0.0
    %3008 = vmatpush.msra.mxu0 0.0
    %v3009 = vand.u32 %v83, 4294901760
    %v3010 = vsub.f32 %v83, %v3009
    %v3011 = vand.u32 %v3010, 4294901760
    %v3012 = vsub.f32 %v3010, %v3011
    %v3013 = vand.u32 %v3012, 4294901760
    %3014 = vmatpush.msra.mxu0 %v3013
    %v3015 = vand.u32 %v2955, 4294901760
    %3016 = vmatmul.f32.gmra.mxu0 %v3015
    %v3017 = vpop.f32.mrf.mxu0
    %v3018 = vadd.f32 %v2984, %v3017
    %v3019 = vand.u32 %v2958, 4294901760
    %3020 = vmatmul.f32.gmra.mxu0 %v3019
    %v3021 = vpop.f32.mrf.mxu0
    %v3022 = vadd.f32 %v2992, %v3021
    %3023 = vdwg.mxu0
    %3024 = vmatpush.msra.mxu0 0.0
    %3025 = vmatpush.msra.mxu0 0.0
    %3026 = vmatpush.msra.mxu0 0.0
    %3027 = vmatpush.msra.mxu0 0.0
    %3028 = vmatpush.msra.mxu0 0.0
    %3029 = vmatpush.msra.mxu0 0.0
    %3030 = vmatpush.msra.mxu0 0.0
    %3031 = vmatpush.msra.mxu0 0.0
    %3032 = vmatpush.msra.mxu0 0.0
    %3033 = vmatpush.msra.mxu0 0.0
    %3034 = vmatpush.msra.mxu0 0.0
    %3035 = vmatpush.msra.mxu0 0.0
    %3036 = vmatpush.msra.mxu0 0.0
    %3037 = vmatpush.msra.mxu0 0.0
    %3038 = vmatpush.msra.mxu0 0.0
    %v3039 = vand.u32 %v83, 4294901760
    %v3040 = vsub.f32 %v83, %v3039
    %3041 = vmatpush.msra.mxu0 %v3040
    %v3042 = vand.u32 %v2955, 4294901760
    %v3043 = vsub.f32 %v2955, %v3042
    %3044 = vmatmul.f32.gmra.mxu0 %v3043
    %v3045 = vpop.f32.mrf.mxu0
    %v3046 = vadd.f32 %v3018, %v3045
    %v3047 = vand.u32 %v2958, 4294901760
    %v3048 = vsub.f32 %v2958, %v3047
    %3049 = vmatmul.f32.gmra.mxu0 %v3048
    %v3050 = vpop.f32.mrf.mxu0
    %v3051 = vadd.f32 %v3022, %v3050
    %3052 = vdwg.mxu0
    %3053 = vmatpush.msra.mxu0 0.0
    %3054 = vmatpush.msra.mxu0 0.0
    %3055 = vmatpush.msra.mxu0 0.0
    %3056 = vmatpush.msra.mxu0 0.0
    %3057 = vmatpush.msra.mxu0 0.0
    %3058 = vmatpush.msra.mxu0 0.0
    %3059 = vmatpush.msra.mxu0 0.0
    %3060 = vmatpush.msra.mxu0 0.0
    %3061 = vmatpush.msra.mxu0 0.0
    %3062 = vmatpush.msra.mxu0 0.0
    %3063 = vmatpush.msra.mxu0 0.0
    %3064 = vmatpush.msra.mxu0 0.0
    %3065 = vmatpush.msra.mxu0 0.0
    %3066 = vmatpush.msra.mxu0 0.0
    %3067 = vmatpush.msra.mxu0 0.0
    %v3068 = vand.u32 %v83, 4294901760
    %3069 = vmatpush.msra.mxu0 %v3068
    %v3070 = vand.u32 %v2955, 4294901760
    %v3071 = vsub.f32 %v2955, %v3070
    %v3072 = vand.u32 %v3071, 4294901760
    %3073 = vmatmul.f32.gmra.mxu0 %v3072
    %v3074 = vpop.f32.mrf.mxu0
    %v3075 = vadd.f32 %v3046, %v3074
    %v3076 = vand.u32 %v2958, 4294901760
    %v3077 = vsub.f32 %v2958, %v3076
    %v3078 = vand.u32 %v3077, 4294901760
    %3079 = vmatmul.f32.gmra.mxu0 %v3078
    %v3080 = vpop.f32.mrf.mxu0
    %v3081 = vadd.f32 %v3051, %v3080
    %3082 = vdwg.mxu0
    %3083 = vmatpush.msra.mxu0 0.0
    %3084 = vmatpush.msra.mxu0 0.0
    %3085 = vmatpush.msra.mxu0 0.0
    %3086 = vmatpush.msra.mxu0 0.0
    %3087 = vmatpush.msra.mxu0 0.0
    %3088 = vmatpush.msra.mxu0 0.0
    %3089 = vmatpush.msra.mxu0 0.0
    %3090 = vmatpush.msra.mxu0 0.0
    %3091 = vmatpush.msra.mxu0 0.0
    %3092 = vmatpush.msra.mxu0 0.0
    %3093 = vmatpush.msra.mxu0 0.0
    %3094 = vmatpush.msra.mxu0 0.0
    %3095 = vmatpush.msra.mxu0 0.0
    %3096 = vmatpush.msra.mxu0 0.0
    %3097 = vmatpush.msra.mxu0 0.0
    %v3098 = vand.u32 %v83, 4294901760
    %v3099 = vsub.f32 %v83, %v3098
    %v3100 = vand.u32 %v3099, 4294901760
    %3101 = vmatpush.msra.mxu0 %v3100
    %v3102 = vand.u32 %v2955, 4294901760
    %3103 = vmatmul.f32.gmra.mxu0 %v3102
    %v3104 = vpop.f32.mrf.mxu0
    %v3105 = vadd.f32 %v3075, %v3104
    %v3106 = vand.u32 %v2958, 4294901760
    %3107 = vmatmul.f32.gmra.mxu0 %v3106
    %v3108 = vpop.f32.mrf.mxu0
    %v3109 = vadd.f32 %v3081, %v3108
    %3110 = vdwg.mxu0
    %3111 = vmatpush.msra.mxu0 0.0
    %3112 = vmatpush.msra.mxu0 0.0
    %3113 = vmatpush.msra.mxu0 0.0
    %3114 = vmatpush.msra.mxu0 0.0
    %3115 = vmatpush.msra.mxu0 0.0
    %3116 = vmatpush.msra.mxu0 0.0
    %3117 = vmatpush.msra.mxu0 0.0
    %3118 = vmatpush.msra.mxu0 0.0
    %3119 = vmatpush.msra.mxu0 0.0
    %3120 = vmatpush.msra.mxu0 0.0
    %3121 = vmatpush.msra.mxu0 0.0
    %3122 = vmatpush.msra.mxu0 0.0
    %3123 = vmatpush.msra.mxu0 0.0
    %3124 = vmatpush.msra.mxu0 0.0
    %3125 = vmatpush.msra.mxu0 0.0
    %v3126 = vand.u32 %v83, 4294901760
    %3127 = vmatpush.msra.mxu0 %v3126
    %v3128 = vand.u32 %v2955, 4294901760
    %3129 = vmatmul.f32.gmra.mxu0 %v3128
    %v3130 = vpop.f32.mrf.mxu0
    %v3131 = vadd.f32 %v3105, %v3130
    %v3132 = vand.u32 %v2958, 4294901760
    %3133 = vmatmul.f32.gmra.mxu0 %v3132
    %v3134 = vpop.f32.mrf.mxu0
    %v3135 = vadd.f32 %v3109, %v3134
    %3136 = vdwg.mxu0
    %3137 = vmatpush.msra.mxu0 0.0
    %3138 = vmatpush.msra.mxu0 0.0
    %3139 = vmatpush.msra.mxu0 0.0
    %3140 = vmatpush.msra.mxu0 0.0
    %3141 = vmatpush.msra.mxu0 0.0
    %3142 = vmatpush.msra.mxu0 0.0
    %3143 = vmatpush.msra.mxu0 0.0
    %3144 = vmatpush.msra.mxu0 0.0
    %3145 = vmatpush.msra.mxu0 0.0
    %3146 = vmatpush.msra.mxu0 0.0
    %3147 = vmatpush.msra.mxu0 0.0
    %3148 = vmatpush.msra.mxu0 0.0
    %3149 = vmatpush.msra.mxu0 0.0
    %3150 = vmatpush.msra.mxu0 0.0
    %3151 = vmatpush.msra.mxu0 0.0
    %v3152 = vand.u32 %v84, 4294901760
    %3153 = vmatpush.msra.mxu0 %v3152
    %v3154 = vand.u32 %v2955, 4294901760
    %v3155 = vsub.f32 %v2955, %v3154
    %v3156 = vand.u32 %v3155, 4294901760
    %v3157 = vsub.f32 %v3155, %v3156
    %v3158 = vand.u32 %v3157, 4294901760
    %3159 = vmatmul.f32.gmra.mxu0 %v3158
    %v3160 = vpop.f32.mrf.mxu0
    %v3161 = vadd.f32 %v470, %v3160
    %v3162 = vand.u32 %v2958, 4294901760
    %v3163 = vsub.f32 %v2958, %v3162
    %v3164 = vand.u32 %v3163, 4294901760
    %v3165 = vsub.f32 %v3163, %v3164
    %v3166 = vand.u32 %v3165, 4294901760
    %3167 = vmatmul.f32.gmra.mxu0 %v3166
    %v3168 = vpop.f32.mrf.mxu0
    %v3169 = vadd.f32 %v474, %v3168
    %3170 = vdwg.mxu0
    %3171 = vmatpush.msra.mxu0 0.0
    %3172 = vmatpush.msra.mxu0 0.0
    %3173 = vmatpush.msra.mxu0 0.0
    %3174 = vmatpush.msra.mxu0 0.0
    %3175 = vmatpush.msra.mxu0 0.0
    %3176 = vmatpush.msra.mxu0 0.0
    %3177 = vmatpush.msra.mxu0 0.0
    %3178 = vmatpush.msra.mxu0 0.0
    %3179 = vmatpush.msra.mxu0 0.0
    %3180 = vmatpush.msra.mxu0 0.0
    %3181 = vmatpush.msra.mxu0 0.0
    %3182 = vmatpush.msra.mxu0 0.0
    %3183 = vmatpush.msra.mxu0 0.0
    %3184 = vmatpush.msra.mxu0 0.0
    %3185 = vmatpush.msra.mxu0 0.0
    %v3186 = vand.u32 %v84, 4294901760
    %v3187 = vsub.f32 %v84, %v3186
    %v3188 = vand.u32 %v3187, 4294901760
    %v3189 = vsub.f32 %v3187, %v3188
    %v3190 = vand.u32 %v3189, 4294901760
    %3191 = vmatpush.msra.mxu0 %v3190
    %v3192 = vand.u32 %v2955, 4294901760
    %3193 = vmatmul.f32.gmra.mxu0 %v3192
    %v3194 = vpop.f32.mrf.mxu0
    %v3195 = vadd.f32 %v3161, %v3194
    %v3196 = vand.u32 %v2958, 4294901760
    %3197 = vmatmul.f32.gmra.mxu0 %v3196
    %v3198 = vpop.f32.mrf.mxu0
    %v3199 = vadd.f32 %v3169, %v3198
    %3200 = vdwg.mxu0
    %3201 = vmatpush.msra.mxu0 0.0
    %3202 = vmatpush.msra.mxu0 0.0
    %3203 = vmatpush.msra.mxu0 0.0
    %3204 = vmatpush.msra.mxu0 0.0
    %3205 = vmatpush.msra.mxu0 0.0
    %3206 = vmatpush.msra.mxu0 0.0
    %3207 = vmatpush.msra.mxu0 0.0
    %3208 = vmatpush.msra.mxu0 0.0
    %3209 = vmatpush.msra.mxu0 0.0
    %3210 = vmatpush.msra.mxu0 0.0
    %3211 = vmatpush.msra.mxu0 0.0
    %3212 = vmatpush.msra.mxu0 0.0
    %3213 = vmatpush.msra.mxu0 0.0
    %3214 = vmatpush.msra.mxu0 0.0
    %3215 = vmatpush.msra.mxu0 0.0
    %v3216 = vand.u32 %v84, 4294901760
    %v3217 = vsub.f32 %v84, %v3216
    %3218 = vmatpush.msra.mxu0 %v3217
    %v3219 = vand.u32 %v2955, 4294901760
    %v3220 = vsub.f32 %v2955, %v3219
    %3221 = vmatmul.f32.gmra.mxu0 %v3220
    %v3222 = vpop.f32.mrf.mxu0
    %v3223 = vadd.f32 %v3195, %v3222
    %v3224 = vand.u32 %v2958, 4294901760
    %v3225 = vsub.f32 %v2958, %v3224
    %3226 = vmatmul.f32.gmra.mxu0 %v3225
    %v3227 = vpop.f32.mrf.mxu0
    %v3228 = vadd.f32 %v3199, %v3227
    %3229 = vdwg.mxu0
    %3230 = vmatpush.msra.mxu0 0.0
    %3231 = vmatpush.msra.mxu0 0.0
    %3232 = vmatpush.msra.mxu0 0.0
    %3233 = vmatpush.msra.mxu0 0.0
    %3234 = vmatpush.msra.mxu0 0.0
    %3235 = vmatpush.msra.mxu0 0.0
    %3236 = vmatpush.msra.mxu0 0.0
    %3237 = vmatpush.msra.mxu0 0.0
    %3238 = vmatpush.msra.mxu0 0.0
    %3239 = vmatpush.msra.mxu0 0.0
    %3240 = vmatpush.msra.mxu0 0.0
    %3241 = vmatpush.msra.mxu0 0.0
    %3242 = vmatpush.msra.mxu0 0.0
    %3243 = vmatpush.msra.mxu0 0.0
    %3244 = vmatpush.msra.mxu0 0.0
    %v3245 = vand.u32 %v84, 4294901760
    %3246 = vmatpush.msra.mxu0 %v3245
    %v3247 = vand.u32 %v2955, 4294901760
    %v3248 = vsub.f32 %v2955, %v3247
    %v3249 = vand.u32 %v3248, 4294901760
    %3250 = vmatmul.f32.gmra.mxu0 %v3249
    %v3251 = vpop.f32.mrf.mxu0
    %v3252 = vadd.f32 %v3223, %v3251
    %v3253 = vand.u32 %v2958, 4294901760
    %v3254 = vsub.f32 %v2958, %v3253
    %v3255 = vand.u32 %v3254, 4294901760
    %3256 = vmatmul.f32.gmra.mxu0 %v3255
    %v3257 = vpop.f32.mrf.mxu0
    %v3258 = vadd.f32 %v3228, %v3257
    %3259 = vdwg.mxu0
    %3260 = vmatpush.msra.mxu0 0.0
    %3261 = vmatpush.msra.mxu0 0.0
    %3262 = vmatpush.msra.mxu0 0.0
    %3263 = vmatpush.msra.mxu0 0.0
    %3264 = vmatpush.msra.mxu0 0.0
    %3265 = vmatpush.msra.mxu0 0.0
    %3266 = vmatpush.msra.mxu0 0.0
    %3267 = vmatpush.msra.mxu0 0.0
    %3268 = vmatpush.msra.mxu0 0.0
    %3269 = vmatpush.msra.mxu0 0.0
    %3270 = vmatpush.msra.mxu0 0.0
    %3271 = vmatpush.msra.mxu0 0.0
    %3272 = vmatpush.msra.mxu0 0.0
    %3273 = vmatpush.msra.mxu0 0.0
    %3274 = vmatpush.msra.mxu0 0.0
    %v3275 = vand.u32 %v84, 4294901760
    %v3276 = vsub.f32 %v84, %v3275
    %v3277 = vand.u32 %v3276, 4294901760
    %3278 = vmatpush.msra.mxu0 %v3277
    %v3279 = vand.u32 %v2955, 4294901760
    %3280 = vmatmul.f32.gmra.mxu0 %v3279
    %v3281 = vpop.f32.mrf.mxu0
    %v3282 = vadd.f32 %v3252, %v3281
    %v3283 = vand.u32 %v2958, 4294901760
    %3284 = vmatmul.f32.gmra.mxu0 %v3283
    %v3285 = vpop.f32.mrf.mxu0
    %v3286 = vadd.f32 %v3258, %v3285
    %3287 = vdwg.mxu0
    %3288 = vmatpush.msra.mxu0 0.0
    %3289 = vmatpush.msra.mxu0 0.0
    %3290 = vmatpush.msra.mxu0 0.0
    %3291 = vmatpush.msra.mxu0 0.0
    %3292 = vmatpush.msra.mxu0 0.0
    %3293 = vmatpush.msra.mxu0 0.0
    %3294 = vmatpush.msra.mxu0 0.0
    %3295 = vmatpush.msra.mxu0 0.0
    %3296 = vmatpush.msra.mxu0 0.0
    %3297 = vmatpush.msra.mxu0 0.0
    %3298 = vmatpush.msra.mxu0 0.0
    %3299 = vmatpush.msra.mxu0 0.0
    %3300 = vmatpush.msra.mxu0 0.0
    %3301 = vmatpush.msra.mxu0 0.0
    %3302 = vmatpush.msra.mxu0 0.0
    %v3303 = vand.u32 %v84, 4294901760
    %3304 = vmatpush.msra.mxu0 %v3303
    %v3305 = vand.u32 %v2955, 4294901760
    %3306 = vmatmul.f32.gmra.mxu0 %v3305
    %v3307 = vpop.f32.mrf.mxu0
    %v3308 = vadd.f32 %v3282, %v3307
    %v3309 = vand.u32 %v2958, 4294901760
    %3310 = vmatmul.f32.gmra.mxu0 %v3309
    %v3311 = vpop.f32.mrf.mxu0
    %v3312 = vadd.f32 %v3286, %v3311
    %3313 = vdwg.mxu0
    %3314 = vmatpush.msra.mxu0 0.0
    %3315 = vmatpush.msra.mxu0 0.0
    %3316 = vmatpush.msra.mxu0 0.0
    %3317 = vmatpush.msra.mxu0 0.0
    %3318 = vmatpush.msra.mxu0 0.0
    %3319 = vmatpush.msra.mxu0 0.0
    %3320 = vmatpush.msra.mxu0 0.0
    %3321 = vmatpush.msra.mxu0 0.0
    %3322 = vmatpush.msra.mxu0 0.0
    %3323 = vmatpush.msra.mxu0 0.0
    %3324 = vmatpush.msra.mxu0 0.0
    %3325 = vmatpush.msra.mxu0 0.0
    %3326 = vmatpush.msra.mxu0 0.0
    %3327 = vmatpush.msra.mxu0 0.0
    %3328 = vmatpush.msra.mxu0 0.0
    %v3329 = vand.u32 %v85, 4294901760
    %3330 = vmatpush.msra.mxu0 %v3329
    %v3331 = vand.u32 %v2955, 4294901760
    %v3332 = vsub.f32 %v2955, %v3331
    %v3333 = vand.u32 %v3332, 4294901760
    %v3334 = vsub.f32 %v3332, %v3333
    %v3335 = vand.u32 %v3334, 4294901760
    %3336 = vmatmul.f32.gmra.mxu0 %v3335
    %v3337 = vpop.f32.mrf.mxu0
    %v3338 = vadd.f32 %v647, %v3337
    %v3339 = vand.u32 %v2958, 4294901760
    %v3340 = vsub.f32 %v2958, %v3339
    %v3341 = vand.u32 %v3340, 4294901760
    %v3342 = vsub.f32 %v3340, %v3341
    %v3343 = vand.u32 %v3342, 4294901760
    %3344 = vmatmul.f32.gmra.mxu0 %v3343
    %v3345 = vpop.f32.mrf.mxu0
    %v3346 = vadd.f32 %v651, %v3345
    %3347 = vdwg.mxu0
    %3348 = vmatpush.msra.mxu0 0.0
    %3349 = vmatpush.msra.mxu0 0.0
    %3350 = vmatpush.msra.mxu0 0.0
    %3351 = vmatpush.msra.mxu0 0.0
    %3352 = vmatpush.msra.mxu0 0.0
    %3353 = vmatpush.msra.mxu0 0.0
    %3354 = vmatpush.msra.mxu0 0.0
    %3355 = vmatpush.msra.mxu0 0.0
    %3356 = vmatpush.msra.mxu0 0.0
    %3357 = vmatpush.msra.mxu0 0.0
    %3358 = vmatpush.msra.mxu0 0.0
    %3359 = vmatpush.msra.mxu0 0.0
    %3360 = vmatpush.msra.mxu0 0.0
    %3361 = vmatpush.msra.mxu0 0.0
    %3362 = vmatpush.msra.mxu0 0.0
    %v3363 = vand.u32 %v85, 4294901760
    %v3364 = vsub.f32 %v85, %v3363
    %v3365 = vand.u32 %v3364, 4294901760
    %v3366 = vsub.f32 %v3364, %v3365
    %v3367 = vand.u32 %v3366, 4294901760
    %3368 = vmatpush.msra.mxu0 %v3367
    %v3369 = vand.u32 %v2955, 4294901760
    %3370 = vmatmul.f32.gmra.mxu0 %v3369
    %v3371 = vpop.f32.mrf.mxu0
    %v3372 = vadd.f32 %v3338, %v3371
    %v3373 = vand.u32 %v2958, 4294901760
    %3374 = vmatmul.f32.gmra.mxu0 %v3373
    %v3375 = vpop.f32.mrf.mxu0
    %v3376 = vadd.f32 %v3346, %v3375
    %3377 = vdwg.mxu0
    %3378 = vmatpush.msra.mxu0 0.0
    %3379 = vmatpush.msra.mxu0 0.0
    %3380 = vmatpush.msra.mxu0 0.0
    %3381 = vmatpush.msra.mxu0 0.0
    %3382 = vmatpush.msra.mxu0 0.0
    %3383 = vmatpush.msra.mxu0 0.0
    %3384 = vmatpush.msra.mxu0 0.0
    %3385 = vmatpush.msra.mxu0 0.0
    %3386 = vmatpush.msra.mxu0 0.0
    %3387 = vmatpush.msra.mxu0 0.0
    %3388 = vmatpush.msra.mxu0 0.0
    %3389 = vmatpush.msra.mxu0 0.0
    %3390 = vmatpush.msra.mxu0 0.0
    %3391 = vmatpush.msra.mxu0 0.0
    %3392 = vmatpush.msra.mxu0 0.0
    %v3393 = vand.u32 %v85, 4294901760
    %v3394 = vsub.f32 %v85, %v3393
    %3395 = vmatpush.msra.mxu0 %v3394
    %v3396 = vand.u32 %v2955, 4294901760
    %v3397 = vsub.f32 %v2955, %v3396
    %3398 = vmatmul.f32.gmra.mxu0 %v3397
    %v3399 = vpop.f32.mrf.mxu0
    %v3400 = vadd.f32 %v3372, %v3399
    %v3401 = vand.u32 %v2958, 4294901760
    %v3402 = vsub.f32 %v2958, %v3401
    %3403 = vmatmul.f32.gmra.mxu0 %v3402
    %v3404 = vpop.f32.mrf.mxu0
    %v3405 = vadd.f32 %v3376, %v3404
    %3406 = vdwg.mxu0
    %3407 = vmatpush.msra.mxu0 0.0
    %3408 = vmatpush.msra.mxu0 0.0
    %3409 = vmatpush.msra.mxu0 0.0
    %3410 = vmatpush.msra.mxu0 0.0
    %3411 = vmatpush.msra.mxu0 0.0
    %3412 = vmatpush.msra.mxu0 0.0
    %3413 = vmatpush.msra.mxu0 0.0
    %3414 = vmatpush.msra.mxu0 0.0
    %3415 = vmatpush.msra.mxu0 0.0
    %3416 = vmatpush.msra.mxu0 0.0
    %3417 = vmatpush.msra.mxu0 0.0
    %3418 = vmatpush.msra.mxu0 0.0
    %3419 = vmatpush.msra.mxu0 0.0
    %3420 = vmatpush.msra.mxu0 0.0
    %3421 = vmatpush.msra.mxu0 0.0
    %v3422 = vand.u32 %v85, 4294901760
    %3423 = vmatpush.msra.mxu0 %v3422
    %v3424 = vand.u32 %v2955, 4294901760
    %v3425 = vsub.f32 %v2955, %v3424
    %v3426 = vand.u32 %v3425, 4294901760
    %3427 = vmatmul.f32.gmra.mxu0 %v3426
    %v3428 = vpop.f32.mrf.mxu0
    %v3429 = vadd.f32 %v3400, %v3428
    %v3430 = vand.u32 %v2958, 4294901760
    %v3431 = vsub.f32 %v2958, %v3430
    %v3432 = vand.u32 %v3431, 4294901760
    %3433 = vmatmul.f32.gmra.mxu0 %v3432
    %v3434 = vpop.f32.mrf.mxu0
    %v3435 = vadd.f32 %v3405, %v3434
    %3436 = vdwg.mxu0
    %3437 = vmatpush.msra.mxu0 0.0
    %3438 = vmatpush.msra.mxu0 0.0
    %3439 = vmatpush.msra.mxu0 0.0
    %3440 = vmatpush.msra.mxu0 0.0
    %3441 = vmatpush.msra.mxu0 0.0
    %3442 = vmatpush.msra.mxu0 0.0
    %3443 = vmatpush.msra.mxu0 0.0
    %3444 = vmatpush.msra.mxu0 0.0
    %3445 = vmatpush.msra.mxu0 0.0
    %3446 = vmatpush.msra.mxu0 0.0
    %3447 = vmatpush.msra.mxu0 0.0
    %3448 = vmatpush.msra.mxu0 0.0
    %3449 = vmatpush.msra.mxu0 0.0
    %3450 = vmatpush.msra.mxu0 0.0
    %3451 = vmatpush.msra.mxu0 0.0
    %v3452 = vand.u32 %v85, 4294901760
    %v3453 = vsub.f32 %v85, %v3452
    %v3454 = vand.u32 %v3453, 4294901760
    %3455 = vmatpush.msra.mxu0 %v3454
    %v3456 = vand.u32 %v2955, 4294901760
    %3457 = vmatmul.f32.gmra.mxu0 %v3456
    %v3458 = vpop.f32.mrf.mxu0
    %v3459 = vadd.f32 %v3429, %v3458
    %v3460 = vand.u32 %v2958, 4294901760
    %3461 = vmatmul.f32.gmra.mxu0 %v3460
    %v3462 = vpop.f32.mrf.mxu0
    %v3463 = vadd.f32 %v3435, %v3462
    %3464 = vdwg.mxu0
    %3465 = vmatpush.msra.mxu0 0.0
    %3466 = vmatpush.msra.mxu0 0.0
    %3467 = vmatpush.msra.mxu0 0.0
    %3468 = vmatpush.msra.mxu0 0.0
    %3469 = vmatpush.msra.mxu0 0.0
    %3470 = vmatpush.msra.mxu0 0.0
    %3471 = vmatpush.msra.mxu0 0.0
    %3472 = vmatpush.msra.mxu0 0.0
    %3473 = vmatpush.msra.mxu0 0.0
    %3474 = vmatpush.msra.mxu0 0.0
    %3475 = vmatpush.msra.mxu0 0.0
    %3476 = vmatpush.msra.mxu0 0.0
    %3477 = vmatpush.msra.mxu0 0.0
    %3478 = vmatpush.msra.mxu0 0.0
    %3479 = vmatpush.msra.mxu0 0.0
    %v3480 = vand.u32 %v85, 4294901760
    %3481 = vmatpush.msra.mxu0 %v3480
    %v3482 = vand.u32 %v2955, 4294901760
    %3483 = vmatmul.f32.gmra.mxu0 %v3482
    %v3484 = vpop.f32.mrf.mxu0
    %v3485 = vadd.f32 %v3459, %v3484
    %v3486 = vand.u32 %v2958, 4294901760
    %3487 = vmatmul.f32.gmra.mxu0 %v3486
    %v3488 = vpop.f32.mrf.mxu0
    %v3489 = vadd.f32 %v3463, %v3488
    %3490 = vdwg.mxu0
    %3491 = vmatpush.msra.mxu0 0.0
    %3492 = vmatpush.msra.mxu0 0.0
    %3493 = vmatpush.msra.mxu0 0.0
    %3494 = vmatpush.msra.mxu0 0.0
    %3495 = vmatpush.msra.mxu0 0.0
    %3496 = vmatpush.msra.mxu0 0.0
    %3497 = vmatpush.msra.mxu0 0.0
    %3498 = vmatpush.msra.mxu0 0.0
    %3499 = vmatpush.msra.mxu0 0.0
    %3500 = vmatpush.msra.mxu0 0.0
    %3501 = vmatpush.msra.mxu0 0.0
    %3502 = vmatpush.msra.mxu0 0.0
    %3503 = vmatpush.msra.mxu0 0.0
    %3504 = vmatpush.msra.mxu0 0.0
    %3505 = vmatpush.msra.mxu0 0.0
    %v3506 = vand.u32 %v86, 4294901760
    %3507 = vmatpush.msra.mxu0 %v3506
    %v3508 = vand.u32 %v2955, 4294901760
    %v3509 = vsub.f32 %v2955, %v3508
    %v3510 = vand.u32 %v3509, 4294901760
    %v3511 = vsub.f32 %v3509, %v3510
    %v3512 = vand.u32 %v3511, 4294901760
    %3513 = vmatmul.f32.gmra.mxu0 %v3512
    %v3514 = vpop.f32.mrf.mxu0
    %v3515 = vadd.f32 %v824, %v3514
    %v3516 = vand.u32 %v2958, 4294901760
    %v3517 = vsub.f32 %v2958, %v3516
    %v3518 = vand.u32 %v3517, 4294901760
    %v3519 = vsub.f32 %v3517, %v3518
    %v3520 = vand.u32 %v3519, 4294901760
    %3521 = vmatmul.f32.gmra.mxu0 %v3520
    %v3522 = vpop.f32.mrf.mxu0
    %v3523 = vadd.f32 %v828, %v3522
    %3524 = vdwg.mxu0
    %3525 = vmatpush.msra.mxu0 0.0
    %3526 = vmatpush.msra.mxu0 0.0
    %3527 = vmatpush.msra.mxu0 0.0
    %3528 = vmatpush.msra.mxu0 0.0
    %3529 = vmatpush.msra.mxu0 0.0
    %3530 = vmatpush.msra.mxu0 0.0
    %3531 = vmatpush.msra.mxu0 0.0
    %3532 = vmatpush.msra.mxu0 0.0
    %3533 = vmatpush.msra.mxu0 0.0
    %3534 = vmatpush.msra.mxu0 0.0
    %3535 = vmatpush.msra.mxu0 0.0
    %3536 = vmatpush.msra.mxu0 0.0
    %3537 = vmatpush.msra.mxu0 0.0
    %3538 = vmatpush.msra.mxu0 0.0
    %3539 = vmatpush.msra.mxu0 0.0
    %v3540 = vand.u32 %v86, 4294901760
    %v3541 = vsub.f32 %v86, %v3540
    %v3542 = vand.u32 %v3541, 4294901760
    %v3543 = vsub.f32 %v3541, %v3542
    %v3544 = vand.u32 %v3543, 4294901760
    %3545 = vmatpush.msra.mxu0 %v3544
    %v3546 = vand.u32 %v2955, 4294901760
    %3547 = vmatmul.f32.gmra.mxu0 %v3546
    %v3548 = vpop.f32.mrf.mxu0
    %v3549 = vadd.f32 %v3515, %v3548
    %v3550 = vand.u32 %v2958, 4294901760
    %3551 = vmatmul.f32.gmra.mxu0 %v3550
    %v3552 = vpop.f32.mrf.mxu0
    %v3553 = vadd.f32 %v3523, %v3552
    %3554 = vdwg.mxu0
    %3555 = vmatpush.msra.mxu0 0.0
    %3556 = vmatpush.msra.mxu0 0.0
    %3557 = vmatpush.msra.mxu0 0.0
    %3558 = vmatpush.msra.mxu0 0.0
    %3559 = vmatpush.msra.mxu0 0.0
    %3560 = vmatpush.msra.mxu0 0.0
    %3561 = vmatpush.msra.mxu0 0.0
    %3562 = vmatpush.msra.mxu0 0.0
    %3563 = vmatpush.msra.mxu0 0.0
    %3564 = vmatpush.msra.mxu0 0.0
    %3565 = vmatpush.msra.mxu0 0.0
    %3566 = vmatpush.msra.mxu0 0.0
    %3567 = vmatpush.msra.mxu0 0.0
    %3568 = vmatpush.msra.mxu0 0.0
    %3569 = vmatpush.msra.mxu0 0.0
    %v3570 = vand.u32 %v86, 4294901760
    %v3571 = vsub.f32 %v86, %v3570
    %3572 = vmatpush.msra.mxu0 %v3571
    %v3573 = vand.u32 %v2955, 4294901760
    %v3574 = vsub.f32 %v2955, %v3573
    %3575 = vmatmul.f32.gmra.mxu0 %v3574
    %v3576 = vpop.f32.mrf.mxu0
    %v3577 = vadd.f32 %v3549, %v3576
    %v3578 = vand.u32 %v2958, 4294901760
    %v3579 = vsub.f32 %v2958, %v3578
    %3580 = vmatmul.f32.gmra.mxu0 %v3579
    %v3581 = vpop.f32.mrf.mxu0
    %v3582 = vadd.f32 %v3553, %v3581
    %3583 = vdwg.mxu0
    %3584 = vmatpush.msra.mxu0 0.0
    %3585 = vmatpush.msra.mxu0 0.0
    %3586 = vmatpush.msra.mxu0 0.0
    %3587 = vmatpush.msra.mxu0 0.0
    %3588 = vmatpush.msra.mxu0 0.0
    %3589 = vmatpush.msra.mxu0 0.0
    %3590 = vmatpush.msra.mxu0 0.0
    %3591 = vmatpush.msra.mxu0 0.0
    %3592 = vmatpush.msra.mxu0 0.0
    %3593 = vmatpush.msra.mxu0 0.0
    %3594 = vmatpush.msra.mxu0 0.0
    %3595 = vmatpush.msra.mxu0 0.0
    %3596 = vmatpush.msra.mxu0 0.0
    %3597 = vmatpush.msra.mxu0 0.0
    %3598 = vmatpush.msra.mxu0 0.0
    %v3599 = vand.u32 %v86, 4294901760
    %3600 = vmatpush.msra.mxu0 %v3599
    %v3601 = vand.u32 %v2955, 4294901760
    %v3602 = vsub.f32 %v2955, %v3601
    %v3603 = vand.u32 %v3602, 4294901760
    %3604 = vmatmul.f32.gmra.mxu0 %v3603
    %v3605 = vpop.f32.mrf.mxu0
    %v3606 = vadd.f32 %v3577, %v3605
    %v3607 = vand.u32 %v2958, 4294901760
    %v3608 = vsub.f32 %v2958, %v3607
    %v3609 = vand.u32 %v3608, 4294901760
    %3610 = vmatmul.f32.gmra.mxu0 %v3609
    %v3611 = vpop.f32.mrf.mxu0
    %v3612 = vadd.f32 %v3582, %v3611
    %3613 = vdwg.mxu0
    %3614 = vmatpush.msra.mxu0 0.0
    %3615 = vmatpush.msra.mxu0 0.0
    %3616 = vmatpush.msra.mxu0 0.0
    %3617 = vmatpush.msra.mxu0 0.0
    %3618 = vmatpush.msra.mxu0 0.0
    %3619 = vmatpush.msra.mxu0 0.0
    %3620 = vmatpush.msra.mxu0 0.0
    %3621 = vmatpush.msra.mxu0 0.0
    %3622 = vmatpush.msra.mxu0 0.0
    %3623 = vmatpush.msra.mxu0 0.0
    %3624 = vmatpush.msra.mxu0 0.0
    %3625 = vmatpush.msra.mxu0 0.0
    %3626 = vmatpush.msra.mxu0 0.0
    %3627 = vmatpush.msra.mxu0 0.0
    %3628 = vmatpush.msra.mxu0 0.0
    %v3629 = vand.u32 %v86, 4294901760
    %v3630 = vsub.f32 %v86, %v3629
    %v3631 = vand.u32 %v3630, 4294901760
    %3632 = vmatpush.msra.mxu0 %v3631
    %v3633 = vand.u32 %v2955, 4294901760
    %3634 = vmatmul.f32.gmra.mxu0 %v3633
    %v3635 = vpop.f32.mrf.mxu0
    %v3636 = vadd.f32 %v3606, %v3635
    %v3637 = vand.u32 %v2958, 4294901760
    %3638 = vmatmul.f32.gmra.mxu0 %v3637
    %v3639 = vpop.f32.mrf.mxu0
    %v3640 = vadd.f32 %v3612, %v3639
    %3641 = vdwg.mxu0
    %3642 = vmatpush.msra.mxu0 0.0
    %3643 = vmatpush.msra.mxu0 0.0
    %3644 = vmatpush.msra.mxu0 0.0
    %3645 = vmatpush.msra.mxu0 0.0
    %3646 = vmatpush.msra.mxu0 0.0
    %3647 = vmatpush.msra.mxu0 0.0
    %3648 = vmatpush.msra.mxu0 0.0
    %3649 = vmatpush.msra.mxu0 0.0
    %3650 = vmatpush.msra.mxu0 0.0
    %3651 = vmatpush.msra.mxu0 0.0
    %3652 = vmatpush.msra.mxu0 0.0
    %3653 = vmatpush.msra.mxu0 0.0
    %3654 = vmatpush.msra.mxu0 0.0
    %3655 = vmatpush.msra.mxu0 0.0
    %3656 = vmatpush.msra.mxu0 0.0
    %v3657 = vand.u32 %v86, 4294901760
    %3658 = vmatpush.msra.mxu0 %v3657
    %v3659 = vand.u32 %v2955, 4294901760
    %3660 = vmatmul.f32.gmra.mxu0 %v3659
    %v3661 = vpop.f32.mrf.mxu0
    %v3662 = vadd.f32 %v3636, %v3661
    %v3663 = vand.u32 %v2958, 4294901760
    %3664 = vmatmul.f32.gmra.mxu0 %v3663
    %v3665 = vpop.f32.mrf.mxu0
    %v3666 = vadd.f32 %v3640, %v3665
    %3667 = vdwg.mxu0
    %3668 = vmatpush.msra.mxu0 0.0
    %3669 = vmatpush.msra.mxu0 0.0
    %3670 = vmatpush.msra.mxu0 0.0
    %3671 = vmatpush.msra.mxu0 0.0
    %3672 = vmatpush.msra.mxu0 0.0
    %3673 = vmatpush.msra.mxu0 0.0
    %3674 = vmatpush.msra.mxu0 0.0
    %3675 = vmatpush.msra.mxu0 0.0
    %3676 = vmatpush.msra.mxu0 0.0
    %3677 = vmatpush.msra.mxu0 0.0
    %3678 = vmatpush.msra.mxu0 0.0
    %3679 = vmatpush.msra.mxu0 0.0
    %3680 = vmatpush.msra.mxu0 0.0
    %3681 = vmatpush.msra.mxu0 0.0
    %3682 = vmatpush.msra.mxu0 0.0
    %v3683 = vand.u32 %v87, 4294901760
    %3684 = vmatpush.msra.mxu0 %v3683
    %v3685 = vand.u32 %v2955, 4294901760
    %v3686 = vsub.f32 %v2955, %v3685
    %v3687 = vand.u32 %v3686, 4294901760
    %v3688 = vsub.f32 %v3686, %v3687
    %v3689 = vand.u32 %v3688, 4294901760
    %3690 = vmatmul.f32.gmra.mxu0 %v3689
    %v3691 = vpop.f32.mrf.mxu0
    %v3692 = vadd.f32 %v1001, %v3691
    %v3693 = vand.u32 %v2958, 4294901760
    %v3694 = vsub.f32 %v2958, %v3693
    %v3695 = vand.u32 %v3694, 4294901760
    %v3696 = vsub.f32 %v3694, %v3695
    %v3697 = vand.u32 %v3696, 4294901760
    %3698 = vmatmul.f32.gmra.mxu0 %v3697
    %v3699 = vpop.f32.mrf.mxu0
    %v3700 = vadd.f32 %v1005, %v3699
    %3701 = vdwg.mxu0
    %3702 = vmatpush.msra.mxu0 0.0
    %3703 = vmatpush.msra.mxu0 0.0
    %3704 = vmatpush.msra.mxu0 0.0
    %3705 = vmatpush.msra.mxu0 0.0
    %3706 = vmatpush.msra.mxu0 0.0
    %3707 = vmatpush.msra.mxu0 0.0
    %3708 = vmatpush.msra.mxu0 0.0
    %3709 = vmatpush.msra.mxu0 0.0
    %3710 = vmatpush.msra.mxu0 0.0
    %3711 = vmatpush.msra.mxu0 0.0
    %3712 = vmatpush.msra.mxu0 0.0
    %3713 = vmatpush.msra.mxu0 0.0
    %3714 = vmatpush.msra.mxu0 0.0
    %3715 = vmatpush.msra.mxu0 0.0
    %3716 = vmatpush.msra.mxu0 0.0
    %v3717 = vand.u32 %v87, 4294901760
    %v3718 = vsub.f32 %v87, %v3717
    %v3719 = vand.u32 %v3718, 4294901760
    %v3720 = vsub.f32 %v3718, %v3719
    %v3721 = vand.u32 %v3720, 4294901760
    %3722 = vmatpush.msra.mxu0 %v3721
    %v3723 = vand.u32 %v2955, 4294901760
    %3724 = vmatmul.f32.gmra.mxu0 %v3723
    %v3725 = vpop.f32.mrf.mxu0
    %v3726 = vadd.f32 %v3692, %v3725
    %v3727 = vand.u32 %v2958, 4294901760
    %3728 = vmatmul.f32.gmra.mxu0 %v3727
    %v3729 = vpop.f32.mrf.mxu0
    %v3730 = vadd.f32 %v3700, %v3729
    %3731 = vdwg.mxu0
    %3732 = vmatpush.msra.mxu0 0.0
    %3733 = vmatpush.msra.mxu0 0.0
    %3734 = vmatpush.msra.mxu0 0.0
    %3735 = vmatpush.msra.mxu0 0.0
    %3736 = vmatpush.msra.mxu0 0.0
    %3737 = vmatpush.msra.mxu0 0.0
    %3738 = vmatpush.msra.mxu0 0.0
    %3739 = vmatpush.msra.mxu0 0.0
    %3740 = vmatpush.msra.mxu0 0.0
    %3741 = vmatpush.msra.mxu0 0.0
    %3742 = vmatpush.msra.mxu0 0.0
    %3743 = vmatpush.msra.mxu0 0.0
    %3744 = vmatpush.msra.mxu0 0.0
    %3745 = vmatpush.msra.mxu0 0.0
    %3746 = vmatpush.msra.mxu0 0.0
    %v3747 = vand.u32 %v87, 4294901760
    %v3748 = vsub.f32 %v87, %v3747
    %3749 = vmatpush.msra.mxu0 %v3748
    %v3750 = vand.u32 %v2955, 4294901760
    %v3751 = vsub.f32 %v2955, %v3750
    %3752 = vmatmul.f32.gmra.mxu0 %v3751
    %v3753 = vpop.f32.mrf.mxu0
    %v3754 = vadd.f32 %v3726, %v3753
    %v3755 = vand.u32 %v2958, 4294901760
    %v3756 = vsub.f32 %v2958, %v3755
    %3757 = vmatmul.f32.gmra.mxu0 %v3756
    %v3758 = vpop.f32.mrf.mxu0
    %v3759 = vadd.f32 %v3730, %v3758
    %3760 = vdwg.mxu0
    %3761 = vmatpush.msra.mxu0 0.0
    %3762 = vmatpush.msra.mxu0 0.0
    %3763 = vmatpush.msra.mxu0 0.0
    %3764 = vmatpush.msra.mxu0 0.0
    %3765 = vmatpush.msra.mxu0 0.0
    %3766 = vmatpush.msra.mxu0 0.0
    %3767 = vmatpush.msra.mxu0 0.0
    %3768 = vmatpush.msra.mxu0 0.0
    %3769 = vmatpush.msra.mxu0 0.0
    %3770 = vmatpush.msra.mxu0 0.0
    %3771 = vmatpush.msra.mxu0 0.0
    %3772 = vmatpush.msra.mxu0 0.0
    %3773 = vmatpush.msra.mxu0 0.0
    %3774 = vmatpush.msra.mxu0 0.0
    %3775 = vmatpush.msra.mxu0 0.0
    %v3776 = vand.u32 %v87, 4294901760
    %3777 = vmatpush.msra.mxu0 %v3776
    %v3778 = vand.u32 %v2955, 4294901760
    %v3779 = vsub.f32 %v2955, %v3778
    %v3780 = vand.u32 %v3779, 4294901760
    %3781 = vmatmul.f32.gmra.mxu0 %v3780
    %v3782 = vpop.f32.mrf.mxu0
    %v3783 = vadd.f32 %v3754, %v3782
    %v3784 = vand.u32 %v2958, 4294901760
    %v3785 = vsub.f32 %v2958, %v3784
    %v3786 = vand.u32 %v3785, 4294901760
    %3787 = vmatmul.f32.gmra.mxu0 %v3786
    %v3788 = vpop.f32.mrf.mxu0
    %v3789 = vadd.f32 %v3759, %v3788
    %3790 = vdwg.mxu0
    %3791 = vmatpush.msra.mxu0 0.0
    %3792 = vmatpush.msra.mxu0 0.0
    %3793 = vmatpush.msra.mxu0 0.0
    %3794 = vmatpush.msra.mxu0 0.0
    %3795 = vmatpush.msra.mxu0 0.0
    %3796 = vmatpush.msra.mxu0 0.0
    %3797 = vmatpush.msra.mxu0 0.0
    %3798 = vmatpush.msra.mxu0 0.0
    %3799 = vmatpush.msra.mxu0 0.0
    %3800 = vmatpush.msra.mxu0 0.0
    %3801 = vmatpush.msra.mxu0 0.0
    %3802 = vmatpush.msra.mxu0 0.0
    %3803 = vmatpush.msra.mxu0 0.0
    %3804 = vmatpush.msra.mxu0 0.0
    %3805 = vmatpush.msra.mxu0 0.0
    %v3806 = vand.u32 %v87, 4294901760
    %v3807 = vsub.f32 %v87, %v3806
    %v3808 = vand.u32 %v3807, 4294901760
    %3809 = vmatpush.msra.mxu0 %v3808
    %v3810 = vand.u32 %v2955, 4294901760
    %3811 = vmatmul.f32.gmra.mxu0 %v3810
    %v3812 = vpop.f32.mrf.mxu0
    %v3813 = vadd.f32 %v3783, %v3812
    %v3814 = vand.u32 %v2958, 4294901760
    %3815 = vmatmul.f32.gmra.mxu0 %v3814
    %v3816 = vpop.f32.mrf.mxu0
    %v3817 = vadd.f32 %v3789, %v3816
    %3818 = vdwg.mxu0
    %3819 = vmatpush.msra.mxu0 0.0
    %3820 = vmatpush.msra.mxu0 0.0
    %3821 = vmatpush.msra.mxu0 0.0
    %3822 = vmatpush.msra.mxu0 0.0
    %3823 = vmatpush.msra.mxu0 0.0
    %3824 = vmatpush.msra.mxu0 0.0
    %3825 = vmatpush.msra.mxu0 0.0
    %3826 = vmatpush.msra.mxu0 0.0
    %3827 = vmatpush.msra.mxu0 0.0
    %3828 = vmatpush.msra.mxu0 0.0
    %3829 = vmatpush.msra.mxu0 0.0
    %3830 = vmatpush.msra.mxu0 0.0
    %3831 = vmatpush.msra.mxu0 0.0
    %3832 = vmatpush.msra.mxu0 0.0
    %3833 = vmatpush.msra.mxu0 0.0
    %v3834 = vand.u32 %v87, 4294901760
    %3835 = vmatpush.msra.mxu0 %v3834
    %v3836 = vand.u32 %v2955, 4294901760
    %3837 = vmatmul.f32.gmra.mxu0 %v3836
    %v3838 = vpop.f32.mrf.mxu0
    %v3839 = vadd.f32 %v3813, %v3838
    %v3840 = vand.u32 %v2958, 4294901760
    %3841 = vmatmul.f32.gmra.mxu0 %v3840
    %v3842 = vpop.f32.mrf.mxu0
    %v3843 = vadd.f32 %v3817, %v3842
    %3844 = vdwg.mxu0
    %3845 = vmatpush.msra.mxu0 0.0
    %3846 = vmatpush.msra.mxu0 0.0
    %3847 = vmatpush.msra.mxu0 0.0
    %3848 = vmatpush.msra.mxu0 0.0
    %3849 = vmatpush.msra.mxu0 0.0
    %3850 = vmatpush.msra.mxu0 0.0
    %3851 = vmatpush.msra.mxu0 0.0
    %3852 = vmatpush.msra.mxu0 0.0
    %3853 = vmatpush.msra.mxu0 0.0
    %3854 = vmatpush.msra.mxu0 0.0
    %3855 = vmatpush.msra.mxu0 0.0
    %3856 = vmatpush.msra.mxu0 0.0
    %3857 = vmatpush.msra.mxu0 0.0
    %3858 = vmatpush.msra.mxu0 0.0
    %3859 = vmatpush.msra.mxu0 0.0
    %v3860 = vand.u32 %v88, 4294901760
    %3861 = vmatpush.msra.mxu0 %v3860
    %v3862 = vand.u32 %v2955, 4294901760
    %v3863 = vsub.f32 %v2955, %v3862
    %v3864 = vand.u32 %v3863, 4294901760
    %v3865 = vsub.f32 %v3863, %v3864
    %v3866 = vand.u32 %v3865, 4294901760
    %3867 = vmatmul.f32.gmra.mxu0 %v3866
    %v3868 = vpop.f32.mrf.mxu0
    %v3869 = vadd.f32 %v1178, %v3868
    %v3870 = vand.u32 %v2958, 4294901760
    %v3871 = vsub.f32 %v2958, %v3870
    %v3872 = vand.u32 %v3871, 4294901760
    %v3873 = vsub.f32 %v3871, %v3872
    %v3874 = vand.u32 %v3873, 4294901760
    %3875 = vmatmul.f32.gmra.mxu0 %v3874
    %v3876 = vpop.f32.mrf.mxu0
    %v3877 = vadd.f32 %v1182, %v3876
    %3878 = vdwg.mxu0
    %3879 = vmatpush.msra.mxu0 0.0
    %3880 = vmatpush.msra.mxu0 0.0
    %3881 = vmatpush.msra.mxu0 0.0
    %3882 = vmatpush.msra.mxu0 0.0
    %3883 = vmatpush.msra.mxu0 0.0
    %3884 = vmatpush.msra.mxu0 0.0
    %3885 = vmatpush.msra.mxu0 0.0
    %3886 = vmatpush.msra.mxu0 0.0
    %3887 = vmatpush.msra.mxu0 0.0
    %3888 = vmatpush.msra.mxu0 0.0
    %3889 = vmatpush.msra.mxu0 0.0
    %3890 = vmatpush.msra.mxu0 0.0
    %3891 = vmatpush.msra.mxu0 0.0
    %3892 = vmatpush.msra.mxu0 0.0
    %3893 = vmatpush.msra.mxu0 0.0
    %v3894 = vand.u32 %v88, 4294901760
    %v3895 = vsub.f32 %v88, %v3894
    %v3896 = vand.u32 %v3895, 4294901760
    %v3897 = vsub.f32 %v3895, %v3896
    %v3898 = vand.u32 %v3897, 4294901760
    %3899 = vmatpush.msra.mxu0 %v3898
    %v3900 = vand.u32 %v2955, 4294901760
    %3901 = vmatmul.f32.gmra.mxu0 %v3900
    %v3902 = vpop.f32.mrf.mxu0
    %v3903 = vadd.f32 %v3869, %v3902
    %v3904 = vand.u32 %v2958, 4294901760
    %3905 = vmatmul.f32.gmra.mxu0 %v3904
    %v3906 = vpop.f32.mrf.mxu0
    %v3907 = vadd.f32 %v3877, %v3906
    %3908 = vdwg.mxu0
    %3909 = vmatpush.msra.mxu0 0.0
    %3910 = vmatpush.msra.mxu0 0.0
    %3911 = vmatpush.msra.mxu0 0.0
    %3912 = vmatpush.msra.mxu0 0.0
    %3913 = vmatpush.msra.mxu0 0.0
    %3914 = vmatpush.msra.mxu0 0.0
    %3915 = vmatpush.msra.mxu0 0.0
    %3916 = vmatpush.msra.mxu0 0.0
    %3917 = vmatpush.msra.mxu0 0.0
    %3918 = vmatpush.msra.mxu0 0.0
    %3919 = vmatpush.msra.mxu0 0.0
    %3920 = vmatpush.msra.mxu0 0.0
    %3921 = vmatpush.msra.mxu0 0.0
    %3922 = vmatpush.msra.mxu0 0.0
    %3923 = vmatpush.msra.mxu0 0.0
    %v3924 = vand.u32 %v88, 4294901760
    %v3925 = vsub.f32 %v88, %v3924
    %3926 = vmatpush.msra.mxu0 %v3925
    %v3927 = vand.u32 %v2955, 4294901760
    %v3928 = vsub.f32 %v2955, %v3927
    %3929 = vmatmul.f32.gmra.mxu0 %v3928
    %v3930 = vpop.f32.mrf.mxu0
    %v3931 = vadd.f32 %v3903, %v3930
    %v3932 = vand.u32 %v2958, 4294901760
    %v3933 = vsub.f32 %v2958, %v3932
    %3934 = vmatmul.f32.gmra.mxu0 %v3933
    %v3935 = vpop.f32.mrf.mxu0
    %v3936 = vadd.f32 %v3907, %v3935
    %3937 = vdwg.mxu0
    %3938 = vmatpush.msra.mxu0 0.0
    %3939 = vmatpush.msra.mxu0 0.0
    %3940 = vmatpush.msra.mxu0 0.0
    %3941 = vmatpush.msra.mxu0 0.0
    %3942 = vmatpush.msra.mxu0 0.0
    %3943 = vmatpush.msra.mxu0 0.0
    %3944 = vmatpush.msra.mxu0 0.0
    %3945 = vmatpush.msra.mxu0 0.0
    %3946 = vmatpush.msra.mxu0 0.0
    %3947 = vmatpush.msra.mxu0 0.0
    %3948 = vmatpush.msra.mxu0 0.0
    %3949 = vmatpush.msra.mxu0 0.0
    %3950 = vmatpush.msra.mxu0 0.0
    %3951 = vmatpush.msra.mxu0 0.0
    %3952 = vmatpush.msra.mxu0 0.0
    %v3953 = vand.u32 %v88, 4294901760
    %3954 = vmatpush.msra.mxu0 %v3953
    %v3955 = vand.u32 %v2955, 4294901760
    %v3956 = vsub.f32 %v2955, %v3955
    %v3957 = vand.u32 %v3956, 4294901760
    %3958 = vmatmul.f32.gmra.mxu0 %v3957
    %v3959 = vpop.f32.mrf.mxu0
    %v3960 = vadd.f32 %v3931, %v3959
    %v3961 = vand.u32 %v2958, 4294901760
    %v3962 = vsub.f32 %v2958, %v3961
    %v3963 = vand.u32 %v3962, 4294901760
    %3964 = vmatmul.f32.gmra.mxu0 %v3963
    %v3965 = vpop.f32.mrf.mxu0
    %v3966 = vadd.f32 %v3936, %v3965
    %3967 = vdwg.mxu0
    %3968 = vmatpush.msra.mxu0 0.0
    %3969 = vmatpush.msra.mxu0 0.0
    %3970 = vmatpush.msra.mxu0 0.0
    %3971 = vmatpush.msra.mxu0 0.0
    %3972 = vmatpush.msra.mxu0 0.0
    %3973 = vmatpush.msra.mxu0 0.0
    %3974 = vmatpush.msra.mxu0 0.0
    %3975 = vmatpush.msra.mxu0 0.0
    %3976 = vmatpush.msra.mxu0 0.0
    %3977 = vmatpush.msra.mxu0 0.0
    %3978 = vmatpush.msra.mxu0 0.0
    %3979 = vmatpush.msra.mxu0 0.0
    %3980 = vmatpush.msra.mxu0 0.0
    %3981 = vmatpush.msra.mxu0 0.0
    %3982 = vmatpush.msra.mxu0 0.0
    %v3983 = vand.u32 %v88, 4294901760
    %v3984 = vsub.f32 %v88, %v3983
    %v3985 = vand.u32 %v3984, 4294901760
    %3986 = vmatpush.msra.mxu0 %v3985
    %v3987 = vand.u32 %v2955, 4294901760
    %3988 = vmatmul.f32.gmra.mxu0 %v3987
    %v3989 = vpop.f32.mrf.mxu0
    %v3990 = vadd.f32 %v3960, %v3989
    %v3991 = vand.u32 %v2958, 4294901760
    %3992 = vmatmul.f32.gmra.mxu0 %v3991
    %v3993 = vpop.f32.mrf.mxu0
    %v3994 = vadd.f32 %v3966, %v3993
    %3995 = vdwg.mxu0
    %3996 = vmatpush.msra.mxu0 0.0
    %3997 = vmatpush.msra.mxu0 0.0
    %3998 = vmatpush.msra.mxu0 0.0
    %3999 = vmatpush.msra.mxu0 0.0
    %4000 = vmatpush.msra.mxu0 0.0
    %4001 = vmatpush.msra.mxu0 0.0
    %4002 = vmatpush.msra.mxu0 0.0
    %4003 = vmatpush.msra.mxu0 0.0
    %4004 = vmatpush.msra.mxu0 0.0
    %4005 = vmatpush.msra.mxu0 0.0
    %4006 = vmatpush.msra.mxu0 0.0
    %4007 = vmatpush.msra.mxu0 0.0
    %4008 = vmatpush.msra.mxu0 0.0
    %4009 = vmatpush.msra.mxu0 0.0
    %4010 = vmatpush.msra.mxu0 0.0
    %v4011 = vand.u32 %v88, 4294901760
    %4012 = vmatpush.msra.mxu0 %v4011
    %v4013 = vand.u32 %v2955, 4294901760
    %4014 = vmatmul.f32.gmra.mxu0 %v4013
    %v4015 = vpop.f32.mrf.mxu0
    %v4016 = vadd.f32 %v3990, %v4015
    %v4017 = vand.u32 %v2958, 4294901760
    %4018 = vmatmul.f32.gmra.mxu0 %v4017
    %v4019 = vpop.f32.mrf.mxu0
    %v4020 = vadd.f32 %v3994, %v4019
    %4021 = vdwg.mxu0
    %4022 = vmatpush.msra.mxu0 0.0
    %4023 = vmatpush.msra.mxu0 0.0
    %4024 = vmatpush.msra.mxu0 0.0
    %4025 = vmatpush.msra.mxu0 0.0
    %4026 = vmatpush.msra.mxu0 0.0
    %4027 = vmatpush.msra.mxu0 0.0
    %4028 = vmatpush.msra.mxu0 0.0
    %4029 = vmatpush.msra.mxu0 0.0
    %4030 = vmatpush.msra.mxu0 0.0
    %4031 = vmatpush.msra.mxu0 0.0
    %4032 = vmatpush.msra.mxu0 0.0
    %4033 = vmatpush.msra.mxu0 0.0
    %4034 = vmatpush.msra.mxu0 0.0
    %4035 = vmatpush.msra.mxu0 0.0
    %4036 = vmatpush.msra.mxu0 0.0
    %v4037 = vand.u32 %v89, 4294901760
    %4038 = vmatpush.msra.mxu0 %v4037
    %v4039 = vand.u32 %v2955, 4294901760
    %v4040 = vsub.f32 %v2955, %v4039
    %v4041 = vand.u32 %v4040, 4294901760
    %v4042 = vsub.f32 %v4040, %v4041
    %v4043 = vand.u32 %v4042, 4294901760
    %4044 = vmatmul.f32.gmra.mxu0 %v4043
    %v4045 = vpop.f32.mrf.mxu0
    %v4046 = vadd.f32 %v1355, %v4045
    %v4047 = vand.u32 %v2958, 4294901760
    %v4048 = vsub.f32 %v2958, %v4047
    %v4049 = vand.u32 %v4048, 4294901760
    %v4050 = vsub.f32 %v4048, %v4049
    %v4051 = vand.u32 %v4050, 4294901760
    %4052 = vmatmul.f32.gmra.mxu0 %v4051
    %v4053 = vpop.f32.mrf.mxu0
    %v4054 = vadd.f32 %v1359, %v4053
    %4055 = vdwg.mxu0
    %4056 = vmatpush.msra.mxu0 0.0
    %4057 = vmatpush.msra.mxu0 0.0
    %4058 = vmatpush.msra.mxu0 0.0
    %4059 = vmatpush.msra.mxu0 0.0
    %4060 = vmatpush.msra.mxu0 0.0
    %4061 = vmatpush.msra.mxu0 0.0
    %4062 = vmatpush.msra.mxu0 0.0
    %4063 = vmatpush.msra.mxu0 0.0
    %4064 = vmatpush.msra.mxu0 0.0
    %4065 = vmatpush.msra.mxu0 0.0
    %4066 = vmatpush.msra.mxu0 0.0
    %4067 = vmatpush.msra.mxu0 0.0
    %4068 = vmatpush.msra.mxu0 0.0
    %4069 = vmatpush.msra.mxu0 0.0
    %4070 = vmatpush.msra.mxu0 0.0
    %v4071 = vand.u32 %v89, 4294901760
    %v4072 = vsub.f32 %v89, %v4071
    %v4073 = vand.u32 %v4072, 4294901760
    %v4074 = vsub.f32 %v4072, %v4073
    %v4075 = vand.u32 %v4074, 4294901760
    %4076 = vmatpush.msra.mxu0 %v4075
    %v4077 = vand.u32 %v2955, 4294901760
    %4078 = vmatmul.f32.gmra.mxu0 %v4077
    %v4079 = vpop.f32.mrf.mxu0
    %v4080 = vadd.f32 %v4046, %v4079
    %v4081 = vand.u32 %v2958, 4294901760
    %4082 = vmatmul.f32.gmra.mxu0 %v4081
    %v4083 = vpop.f32.mrf.mxu0
    %v4084 = vadd.f32 %v4054, %v4083
    %4085 = vdwg.mxu0
    %4086 = vmatpush.msra.mxu0 0.0
    %4087 = vmatpush.msra.mxu0 0.0
    %4088 = vmatpush.msra.mxu0 0.0
    %4089 = vmatpush.msra.mxu0 0.0
    %4090 = vmatpush.msra.mxu0 0.0
    %4091 = vmatpush.msra.mxu0 0.0
    %4092 = vmatpush.msra.mxu0 0.0
    %4093 = vmatpush.msra.mxu0 0.0
    %4094 = vmatpush.msra.mxu0 0.0
    %4095 = vmatpush.msra.mxu0 0.0
    %4096 = vmatpush.msra.mxu0 0.0
    %4097 = vmatpush.msra.mxu0 0.0
    %4098 = vmatpush.msra.mxu0 0.0
    %4099 = vmatpush.msra.mxu0 0.0
    %4100 = vmatpush.msra.mxu0 0.0
    %v4101 = vand.u32 %v89, 4294901760
    %v4102 = vsub.f32 %v89, %v4101
    %4103 = vmatpush.msra.mxu0 %v4102
    %v4104 = vand.u32 %v2955, 4294901760
    %v4105 = vsub.f32 %v2955, %v4104
    %4106 = vmatmul.f32.gmra.mxu0 %v4105
    %v4107 = vpop.f32.mrf.mxu0
    %v4108 = vadd.f32 %v4080, %v4107
    %v4109 = vand.u32 %v2958, 4294901760
    %v4110 = vsub.f32 %v2958, %v4109
    %4111 = vmatmul.f32.gmra.mxu0 %v4110
    %v4112 = vpop.f32.mrf.mxu0
    %v4113 = vadd.f32 %v4084, %v4112
    %4114 = vdwg.mxu0
    %4115 = vmatpush.msra.mxu0 0.0
    %4116 = vmatpush.msra.mxu0 0.0
    %4117 = vmatpush.msra.mxu0 0.0
    %4118 = vmatpush.msra.mxu0 0.0
    %4119 = vmatpush.msra.mxu0 0.0
    %4120 = vmatpush.msra.mxu0 0.0
    %4121 = vmatpush.msra.mxu0 0.0
    %4122 = vmatpush.msra.mxu0 0.0
    %4123 = vmatpush.msra.mxu0 0.0
    %4124 = vmatpush.msra.mxu0 0.0
    %4125 = vmatpush.msra.mxu0 0.0
    %4126 = vmatpush.msra.mxu0 0.0
    %4127 = vmatpush.msra.mxu0 0.0
    %4128 = vmatpush.msra.mxu0 0.0
    %4129 = vmatpush.msra.mxu0 0.0
    %v4130 = vand.u32 %v89, 4294901760
    %4131 = vmatpush.msra.mxu0 %v4130
    %v4132 = vand.u32 %v2955, 4294901760
    %v4133 = vsub.f32 %v2955, %v4132
    %v4134 = vand.u32 %v4133, 4294901760
    %4135 = vmatmul.f32.gmra.mxu0 %v4134
    %v4136 = vpop.f32.mrf.mxu0
    %v4137 = vadd.f32 %v4108, %v4136
    %v4138 = vand.u32 %v2958, 4294901760
    %v4139 = vsub.f32 %v2958, %v4138
    %v4140 = vand.u32 %v4139, 4294901760
    %4141 = vmatmul.f32.gmra.mxu0 %v4140
    %v4142 = vpop.f32.mrf.mxu0
    %v4143 = vadd.f32 %v4113, %v4142
    %4144 = vdwg.mxu0
    %4145 = vmatpush.msra.mxu0 0.0
    %4146 = vmatpush.msra.mxu0 0.0
    %4147 = vmatpush.msra.mxu0 0.0
    %4148 = vmatpush.msra.mxu0 0.0
    %4149 = vmatpush.msra.mxu0 0.0
    %4150 = vmatpush.msra.mxu0 0.0
    %4151 = vmatpush.msra.mxu0 0.0
    %4152 = vmatpush.msra.mxu0 0.0
    %4153 = vmatpush.msra.mxu0 0.0
    %4154 = vmatpush.msra.mxu0 0.0
    %4155 = vmatpush.msra.mxu0 0.0
    %4156 = vmatpush.msra.mxu0 0.0
    %4157 = vmatpush.msra.mxu0 0.0
    %4158 = vmatpush.msra.mxu0 0.0
    %4159 = vmatpush.msra.mxu0 0.0
    %v4160 = vand.u32 %v89, 4294901760
    %v4161 = vsub.f32 %v89, %v4160
    %v4162 = vand.u32 %v4161, 4294901760
    %4163 = vmatpush.msra.mxu0 %v4162
    %v4164 = vand.u32 %v2955, 4294901760
    %4165 = vmatmul.f32.gmra.mxu0 %v4164
    %v4166 = vpop.f32.mrf.mxu0
    %v4167 = vadd.f32 %v4137, %v4166
    %v4168 = vand.u32 %v2958, 4294901760
    %4169 = vmatmul.f32.gmra.mxu0 %v4168
    %v4170 = vpop.f32.mrf.mxu0
    %v4171 = vadd.f32 %v4143, %v4170
    %4172 = vdwg.mxu0
    %4173 = vmatpush.msra.mxu0 0.0
    %4174 = vmatpush.msra.mxu0 0.0
    %4175 = vmatpush.msra.mxu0 0.0
    %4176 = vmatpush.msra.mxu0 0.0
    %4177 = vmatpush.msra.mxu0 0.0
    %4178 = vmatpush.msra.mxu0 0.0
    %4179 = vmatpush.msra.mxu0 0.0
    %4180 = vmatpush.msra.mxu0 0.0
    %4181 = vmatpush.msra.mxu0 0.0
    %4182 = vmatpush.msra.mxu0 0.0
    %4183 = vmatpush.msra.mxu0 0.0
    %4184 = vmatpush.msra.mxu0 0.0
    %4185 = vmatpush.msra.mxu0 0.0
    %4186 = vmatpush.msra.mxu0 0.0
    %4187 = vmatpush.msra.mxu0 0.0
    %v4188 = vand.u32 %v89, 4294901760
    %4189 = vmatpush.msra.mxu0 %v4188
    %v4190 = vand.u32 %v2955, 4294901760
    %4191 = vmatmul.f32.gmra.mxu0 %v4190
    %v4192 = vpop.f32.mrf.mxu0
    %v4193 = vadd.f32 %v4167, %v4192
    %v4194 = vand.u32 %v2958, 4294901760
    %4195 = vmatmul.f32.gmra.mxu0 %v4194
    %v4196 = vpop.f32.mrf.mxu0
    %v4197 = vadd.f32 %v4171, %v4196
    %4198 = vdwg.mxu0
    %4199 = vmatpush.msra.mxu0 0.0
    %4200 = vmatpush.msra.mxu0 0.0
    %4201 = vmatpush.msra.mxu0 0.0
    %4202 = vmatpush.msra.mxu0 0.0
    %4203 = vmatpush.msra.mxu0 0.0
    %4204 = vmatpush.msra.mxu0 0.0
    %4205 = vmatpush.msra.mxu0 0.0
    %4206 = vmatpush.msra.mxu0 0.0
    %4207 = vmatpush.msra.mxu0 0.0
    %4208 = vmatpush.msra.mxu0 0.0
    %4209 = vmatpush.msra.mxu0 0.0
    %4210 = vmatpush.msra.mxu0 0.0
    %4211 = vmatpush.msra.mxu0 0.0
    %4212 = vmatpush.msra.mxu0 0.0
    %4213 = vmatpush.msra.mxu0 0.0
    %v4214 = vand.u32 %v90, 4294901760
    %4215 = vmatpush.msra.mxu0 %v4214
    %v4216 = vand.u32 %v2955, 4294901760
    %v4217 = vsub.f32 %v2955, %v4216
    %v4218 = vand.u32 %v4217, 4294901760
    %v4219 = vsub.f32 %v4217, %v4218
    %v4220 = vand.u32 %v4219, 4294901760
    %4221 = vmatmul.f32.gmra.mxu0 %v4220
    %v4222 = vpop.f32.mrf.mxu0
    %v4223 = vadd.f32 %v1532, %v4222
    %v4224 = vand.u32 %v2958, 4294901760
    %v4225 = vsub.f32 %v2958, %v4224
    %v4226 = vand.u32 %v4225, 4294901760
    %v4227 = vsub.f32 %v4225, %v4226
    %v4228 = vand.u32 %v4227, 4294901760
    %4229 = vmatmul.f32.gmra.mxu0 %v4228
    %v4230 = vpop.f32.mrf.mxu0
    %v4231 = vadd.f32 %v1536, %v4230
    %4232 = vdwg.mxu0
    %4233 = vmatpush.msra.mxu0 0.0
    %4234 = vmatpush.msra.mxu0 0.0
    %4235 = vmatpush.msra.mxu0 0.0
    %4236 = vmatpush.msra.mxu0 0.0
    %4237 = vmatpush.msra.mxu0 0.0
    %4238 = vmatpush.msra.mxu0 0.0
    %4239 = vmatpush.msra.mxu0 0.0
    %4240 = vmatpush.msra.mxu0 0.0
    %4241 = vmatpush.msra.mxu0 0.0
    %4242 = vmatpush.msra.mxu0 0.0
    %4243 = vmatpush.msra.mxu0 0.0
    %4244 = vmatpush.msra.mxu0 0.0
    %4245 = vmatpush.msra.mxu0 0.0
    %4246 = vmatpush.msra.mxu0 0.0
    %4247 = vmatpush.msra.mxu0 0.0
    %v4248 = vand.u32 %v90, 4294901760
    %v4249 = vsub.f32 %v90, %v4248
    %v4250 = vand.u32 %v4249, 4294901760
    %v4251 = vsub.f32 %v4249, %v4250
    %v4252 = vand.u32 %v4251, 4294901760
    %4253 = vmatpush.msra.mxu0 %v4252
    %v4254 = vand.u32 %v2955, 4294901760
    %4255 = vmatmul.f32.gmra.mxu0 %v4254
    %v4256 = vpop.f32.mrf.mxu0
    %v4257 = vadd.f32 %v4223, %v4256
    %v4258 = vand.u32 %v2958, 4294901760
    %4259 = vmatmul.f32.gmra.mxu0 %v4258
    %v4260 = vpop.f32.mrf.mxu0
    %v4261 = vadd.f32 %v4231, %v4260
    %4262 = vdwg.mxu0
    %4263 = vmatpush.msra.mxu0 0.0
    %4264 = vmatpush.msra.mxu0 0.0
    %4265 = vmatpush.msra.mxu0 0.0
    %4266 = vmatpush.msra.mxu0 0.0
    %4267 = vmatpush.msra.mxu0 0.0
    %4268 = vmatpush.msra.mxu0 0.0
    %4269 = vmatpush.msra.mxu0 0.0
    %4270 = vmatpush.msra.mxu0 0.0
    %4271 = vmatpush.msra.mxu0 0.0
    %4272 = vmatpush.msra.mxu0 0.0
    %4273 = vmatpush.msra.mxu0 0.0
    %4274 = vmatpush.msra.mxu0 0.0
    %4275 = vmatpush.msra.mxu0 0.0
    %4276 = vmatpush.msra.mxu0 0.0
    %4277 = vmatpush.msra.mxu0 0.0
    %v4278 = vand.u32 %v90, 4294901760
    %v4279 = vsub.f32 %v90, %v4278
    %4280 = vmatpush.msra.mxu0 %v4279
    %v4281 = vand.u32 %v2955, 4294901760
    %v4282 = vsub.f32 %v2955, %v4281
    %4283 = vmatmul.f32.gmra.mxu0 %v4282
    %v4284 = vpop.f32.mrf.mxu0
    %v4285 = vadd.f32 %v4257, %v4284
    %v4286 = vand.u32 %v2958, 4294901760
    %v4287 = vsub.f32 %v2958, %v4286
    %4288 = vmatmul.f32.gmra.mxu0 %v4287
    %v4289 = vpop.f32.mrf.mxu0
    %v4290 = vadd.f32 %v4261, %v4289
    %4291 = vdwg.mxu0
    %4292 = vmatpush.msra.mxu0 0.0
    %4293 = vmatpush.msra.mxu0 0.0
    %4294 = vmatpush.msra.mxu0 0.0
    %4295 = vmatpush.msra.mxu0 0.0
    %4296 = vmatpush.msra.mxu0 0.0
    %4297 = vmatpush.msra.mxu0 0.0
    %4298 = vmatpush.msra.mxu0 0.0
    %4299 = vmatpush.msra.mxu0 0.0
    %4300 = vmatpush.msra.mxu0 0.0
    %4301 = vmatpush.msra.mxu0 0.0
    %4302 = vmatpush.msra.mxu0 0.0
    %4303 = vmatpush.msra.mxu0 0.0
    %4304 = vmatpush.msra.mxu0 0.0
    %4305 = vmatpush.msra.mxu0 0.0
    %4306 = vmatpush.msra.mxu0 0.0
    %v4307 = vand.u32 %v90, 4294901760
    %4308 = vmatpush.msra.mxu0 %v4307
    %v4309 = vand.u32 %v2955, 4294901760
    %v4310 = vsub.f32 %v2955, %v4309
    %v4311 = vand.u32 %v4310, 4294901760
    %4312 = vmatmul.f32.gmra.mxu0 %v4311
    %v4313 = vpop.f32.mrf.mxu0
    %v4314 = vadd.f32 %v4285, %v4313
    %v4315 = vand.u32 %v2958, 4294901760
    %v4316 = vsub.f32 %v2958, %v4315
    %v4317 = vand.u32 %v4316, 4294901760
    %4318 = vmatmul.f32.gmra.mxu0 %v4317
    %v4319 = vpop.f32.mrf.mxu0
    %v4320 = vadd.f32 %v4290, %v4319
    %4321 = vdwg.mxu0
    %4322 = vmatpush.msra.mxu0 0.0
    %4323 = vmatpush.msra.mxu0 0.0
    %4324 = vmatpush.msra.mxu0 0.0
    %4325 = vmatpush.msra.mxu0 0.0
    %4326 = vmatpush.msra.mxu0 0.0
    %4327 = vmatpush.msra.mxu0 0.0
    %4328 = vmatpush.msra.mxu0 0.0
    %4329 = vmatpush.msra.mxu0 0.0
    %4330 = vmatpush.msra.mxu0 0.0
    %4331 = vmatpush.msra.mxu0 0.0
    %4332 = vmatpush.msra.mxu0 0.0
    %4333 = vmatpush.msra.mxu0 0.0
    %4334 = vmatpush.msra.mxu0 0.0
    %4335 = vmatpush.msra.mxu0 0.0
    %4336 = vmatpush.msra.mxu0 0.0
    %v4337 = vand.u32 %v90, 4294901760
    %v4338 = vsub.f32 %v90, %v4337
    %v4339 = vand.u32 %v4338, 4294901760
    %4340 = vmatpush.msra.mxu0 %v4339
    %v4341 = vand.u32 %v2955, 4294901760
    %4342 = vmatmul.f32.gmra.mxu0 %v4341
    %v4343 = vpop.f32.mrf.mxu0
    %v4344 = vadd.f32 %v4314, %v4343
    %v4345 = vand.u32 %v2958, 4294901760
    %4346 = vmatmul.f32.gmra.mxu0 %v4345
    %v4347 = vpop.f32.mrf.mxu0
    %v4348 = vadd.f32 %v4320, %v4347
    %4349 = vdwg.mxu0
    %4350 = vmatpush.msra.mxu0 0.0
    %4351 = vmatpush.msra.mxu0 0.0
    %4352 = vmatpush.msra.mxu0 0.0
    %4353 = vmatpush.msra.mxu0 0.0
    %4354 = vmatpush.msra.mxu0 0.0
    %4355 = vmatpush.msra.mxu0 0.0
    %4356 = vmatpush.msra.mxu0 0.0
    %4357 = vmatpush.msra.mxu0 0.0
    %4358 = vmatpush.msra.mxu0 0.0
    %4359 = vmatpush.msra.mxu0 0.0
    %4360 = vmatpush.msra.mxu0 0.0
    %4361 = vmatpush.msra.mxu0 0.0
    %4362 = vmatpush.msra.mxu0 0.0
    %4363 = vmatpush.msra.mxu0 0.0
    %4364 = vmatpush.msra.mxu0 0.0
    %v4365 = vand.u32 %v90, 4294901760
    %4366 = vmatpush.msra.mxu0 %v4365
    %v4367 = vand.u32 %v2955, 4294901760
    %4368 = vmatmul.f32.gmra.mxu0 %v4367
    %v4369 = vpop.f32.mrf.mxu0
    %v4370 = vadd.f32 %v4344, %v4369
    %v4371 = vand.u32 %v2958, 4294901760
    %4372 = vmatmul.f32.gmra.mxu0 %v4371
    %v4373 = vpop.f32.mrf.mxu0
    %v4374 = vadd.f32 %v4348, %v4373
    %4375 = vdwg.mxu0
    %4376 = vmatpush.msra.mxu0 0.0
    %4377 = vmatpush.msra.mxu0 0.0
    %4378 = vmatpush.msra.mxu0 0.0
    %4379 = vmatpush.msra.mxu0 0.0
    %4380 = vmatpush.msra.mxu0 0.0
    %4381 = vmatpush.msra.mxu0 0.0
    %4382 = vmatpush.msra.mxu0 0.0
    %4383 = vmatpush.msra.mxu0 0.0
    %4384 = vmatpush.msra.mxu0 0.0
    %4385 = vmatpush.msra.mxu0 0.0
    %4386 = vmatpush.msra.mxu0 0.0
    %4387 = vmatpush.msra.mxu0 0.0
    %4388 = vmatpush.msra.mxu0 0.0
    %4389 = vmatpush.msra.mxu0 0.0
    %4390 = vmatpush.msra.mxu0 0.0
    %v4391 = vand.u32 %v91, 4294901760
    %4392 = vmatpush.msra.mxu0 %v4391
    %v4393 = vand.u32 %v2955, 4294901760
    %v4394 = vsub.f32 %v2955, %v4393
    %v4395 = vand.u32 %v4394, 4294901760
    %v4396 = vsub.f32 %v4394, %v4395
    %v4397 = vand.u32 %v4396, 4294901760
    %4398 = vmatmul.f32.gmra.mxu0 %v4397
    %v4399 = vpop.f32.mrf.mxu0
    %v4400 = vadd.f32 %v1709, %v4399
    %v4401 = vand.u32 %v2958, 4294901760
    %v4402 = vsub.f32 %v2958, %v4401
    %v4403 = vand.u32 %v4402, 4294901760
    %v4404 = vsub.f32 %v4402, %v4403
    %v4405 = vand.u32 %v4404, 4294901760
    %4406 = vmatmul.f32.gmra.mxu0 %v4405
    %v4407 = vpop.f32.mrf.mxu0
    %v4408 = vadd.f32 %v1713, %v4407
    %4409 = vdwg.mxu0
    %4410 = vmatpush.msra.mxu0 0.0
    %4411 = vmatpush.msra.mxu0 0.0
    %4412 = vmatpush.msra.mxu0 0.0
    %4413 = vmatpush.msra.mxu0 0.0
    %4414 = vmatpush.msra.mxu0 0.0
    %4415 = vmatpush.msra.mxu0 0.0
    %4416 = vmatpush.msra.mxu0 0.0
    %4417 = vmatpush.msra.mxu0 0.0
    %4418 = vmatpush.msra.mxu0 0.0
    %4419 = vmatpush.msra.mxu0 0.0
    %4420 = vmatpush.msra.mxu0 0.0
    %4421 = vmatpush.msra.mxu0 0.0
    %4422 = vmatpush.msra.mxu0 0.0
    %4423 = vmatpush.msra.mxu0 0.0
    %4424 = vmatpush.msra.mxu0 0.0
    %v4425 = vand.u32 %v91, 4294901760
    %v4426 = vsub.f32 %v91, %v4425
    %v4427 = vand.u32 %v4426, 4294901760
    %v4428 = vsub.f32 %v4426, %v4427
    %v4429 = vand.u32 %v4428, 4294901760
    %4430 = vmatpush.msra.mxu0 %v4429
    %v4431 = vand.u32 %v2955, 4294901760
    %4432 = vmatmul.f32.gmra.mxu0 %v4431
    %v4433 = vpop.f32.mrf.mxu0
    %v4434 = vadd.f32 %v4400, %v4433
    %v4435 = vand.u32 %v2958, 4294901760
    %4436 = vmatmul.f32.gmra.mxu0 %v4435
    %v4437 = vpop.f32.mrf.mxu0
    %v4438 = vadd.f32 %v4408, %v4437
    %4439 = vdwg.mxu0
    %4440 = vmatpush.msra.mxu0 0.0
    %4441 = vmatpush.msra.mxu0 0.0
    %4442 = vmatpush.msra.mxu0 0.0
    %4443 = vmatpush.msra.mxu0 0.0
    %4444 = vmatpush.msra.mxu0 0.0
    %4445 = vmatpush.msra.mxu0 0.0
    %4446 = vmatpush.msra.mxu0 0.0
    %4447 = vmatpush.msra.mxu0 0.0
    %4448 = vmatpush.msra.mxu0 0.0
    %4449 = vmatpush.msra.mxu0 0.0
    %4450 = vmatpush.msra.mxu0 0.0
    %4451 = vmatpush.msra.mxu0 0.0
    %4452 = vmatpush.msra.mxu0 0.0
    %4453 = vmatpush.msra.mxu0 0.0
    %4454 = vmatpush.msra.mxu0 0.0
    %v4455 = vand.u32 %v91, 4294901760
    %v4456 = vsub.f32 %v91, %v4455
    %4457 = vmatpush.msra.mxu0 %v4456
    %v4458 = vand.u32 %v2955, 4294901760
    %v4459 = vsub.f32 %v2955, %v4458
    %4460 = vmatmul.f32.gmra.mxu0 %v4459
    %v4461 = vpop.f32.mrf.mxu0
    %v4462 = vadd.f32 %v4434, %v4461
    %v4463 = vand.u32 %v2958, 4294901760
    %v4464 = vsub.f32 %v2958, %v4463
    %4465 = vmatmul.f32.gmra.mxu0 %v4464
    %v4466 = vpop.f32.mrf.mxu0
    %v4467 = vadd.f32 %v4438, %v4466
    %4468 = vdwg.mxu0
    %4469 = vmatpush.msra.mxu0 0.0
    %4470 = vmatpush.msra.mxu0 0.0
    %4471 = vmatpush.msra.mxu0 0.0
    %4472 = vmatpush.msra.mxu0 0.0
    %4473 = vmatpush.msra.mxu0 0.0
    %4474 = vmatpush.msra.mxu0 0.0
    %4475 = vmatpush.msra.mxu0 0.0
    %4476 = vmatpush.msra.mxu0 0.0
    %4477 = vmatpush.msra.mxu0 0.0
    %4478 = vmatpush.msra.mxu0 0.0
    %4479 = vmatpush.msra.mxu0 0.0
    %4480 = vmatpush.msra.mxu0 0.0
    %4481 = vmatpush.msra.mxu0 0.0
    %4482 = vmatpush.msra.mxu0 0.0
    %4483 = vmatpush.msra.mxu0 0.0
    %v4484 = vand.u32 %v91, 4294901760
    %4485 = vmatpush.msra.mxu0 %v4484
    %v4486 = vand.u32 %v2955, 4294901760
    %v4487 = vsub.f32 %v2955, %v4486
    %v4488 = vand.u32 %v4487, 4294901760
    %4489 = vmatmul.f32.gmra.mxu0 %v4488
    %v4490 = vpop.f32.mrf.mxu0
    %v4491 = vadd.f32 %v4462, %v4490
    %v4492 = vand.u32 %v2958, 4294901760
    %v4493 = vsub.f32 %v2958, %v4492
    %v4494 = vand.u32 %v4493, 4294901760
    %4495 = vmatmul.f32.gmra.mxu0 %v4494
    %v4496 = vpop.f32.mrf.mxu0
    %v4497 = vadd.f32 %v4467, %v4496
    %4498 = vdwg.mxu0
    %4499 = vmatpush.msra.mxu0 0.0
    %4500 = vmatpush.msra.mxu0 0.0
    %4501 = vmatpush.msra.mxu0 0.0
    %4502 = vmatpush.msra.mxu0 0.0
    %4503 = vmatpush.msra.mxu0 0.0
    %4504 = vmatpush.msra.mxu0 0.0
    %4505 = vmatpush.msra.mxu0 0.0
    %4506 = vmatpush.msra.mxu0 0.0
    %4507 = vmatpush.msra.mxu0 0.0
    %4508 = vmatpush.msra.mxu0 0.0
    %4509 = vmatpush.msra.mxu0 0.0
    %4510 = vmatpush.msra.mxu0 0.0
    %4511 = vmatpush.msra.mxu0 0.0
    %4512 = vmatpush.msra.mxu0 0.0
    %4513 = vmatpush.msra.mxu0 0.0
    %v4514 = vand.u32 %v91, 4294901760
    %v4515 = vsub.f32 %v91, %v4514
    %v4516 = vand.u32 %v4515, 4294901760
    %4517 = vmatpush.msra.mxu0 %v4516
    %v4518 = vand.u32 %v2955, 4294901760
    %4519 = vmatmul.f32.gmra.mxu0 %v4518
    %v4520 = vpop.f32.mrf.mxu0
    %v4521 = vadd.f32 %v4491, %v4520
    %v4522 = vand.u32 %v2958, 4294901760
    %4523 = vmatmul.f32.gmra.mxu0 %v4522
    %v4524 = vpop.f32.mrf.mxu0
    %v4525 = vadd.f32 %v4497, %v4524
    %4526 = vdwg.mxu0
    %4527 = vmatpush.msra.mxu0 0.0
    %4528 = vmatpush.msra.mxu0 0.0
    %4529 = vmatpush.msra.mxu0 0.0
    %4530 = vmatpush.msra.mxu0 0.0
    %4531 = vmatpush.msra.mxu0 0.0
    %4532 = vmatpush.msra.mxu0 0.0
    %4533 = vmatpush.msra.mxu0 0.0
    %4534 = vmatpush.msra.mxu0 0.0
    %4535 = vmatpush.msra.mxu0 0.0
    %4536 = vmatpush.msra.mxu0 0.0
    %4537 = vmatpush.msra.mxu0 0.0
    %4538 = vmatpush.msra.mxu0 0.0
    %4539 = vmatpush.msra.mxu0 0.0
    %4540 = vmatpush.msra.mxu0 0.0
    %4541 = vmatpush.msra.mxu0 0.0
    %v4542 = vand.u32 %v91, 4294901760
    %4543 = vmatpush.msra.mxu0 %v4542
    %v4544 = vand.u32 %v2955, 4294901760
    %4545 = vmatmul.f32.gmra.mxu0 %v4544
    %v4546 = vpop.f32.mrf.mxu0
    %v4547 = vadd.f32 %v4521, %v4546
    %v4548 = vand.u32 %v2958, 4294901760
    %4549 = vmatmul.f32.gmra.mxu0 %v4548
    %v4550 = vpop.f32.mrf.mxu0
    %v4551 = vadd.f32 %v4525, %v4550
    %4552 = vdwg.mxu0
    %4553 = vmatpush.msra.mxu0 0.0
    %4554 = vmatpush.msra.mxu0 0.0
    %4555 = vmatpush.msra.mxu0 0.0
    %4556 = vmatpush.msra.mxu0 0.0
    %4557 = vmatpush.msra.mxu0 0.0
    %4558 = vmatpush.msra.mxu0 0.0
    %4559 = vmatpush.msra.mxu0 0.0
    %4560 = vmatpush.msra.mxu0 0.0
    %4561 = vmatpush.msra.mxu0 0.0
    %4562 = vmatpush.msra.mxu0 0.0
    %4563 = vmatpush.msra.mxu0 0.0
    %4564 = vmatpush.msra.mxu0 0.0
    %4565 = vmatpush.msra.mxu0 0.0
    %4566 = vmatpush.msra.mxu0 0.0
    %4567 = vmatpush.msra.mxu0 0.0
    %v4568 = vand.u32 %v92, 4294901760
    %4569 = vmatpush.msra.mxu0 %v4568
    %v4570 = vand.u32 %v2955, 4294901760
    %v4571 = vsub.f32 %v2955, %v4570
    %v4572 = vand.u32 %v4571, 4294901760
    %v4573 = vsub.f32 %v4571, %v4572
    %v4574 = vand.u32 %v4573, 4294901760
    %4575 = vmatmul.f32.gmra.mxu0 %v4574
    %v4576 = vpop.f32.mrf.mxu0
    %v4577 = vadd.f32 %v1886, %v4576
    %v4578 = vand.u32 %v2958, 4294901760
    %v4579 = vsub.f32 %v2958, %v4578
    %v4580 = vand.u32 %v4579, 4294901760
    %v4581 = vsub.f32 %v4579, %v4580
    %v4582 = vand.u32 %v4581, 4294901760
    %4583 = vmatmul.f32.gmra.mxu0 %v4582
    %v4584 = vpop.f32.mrf.mxu0
    %v4585 = vadd.f32 %v1890, %v4584
    %4586 = vdwg.mxu0
    %4587 = vmatpush.msra.mxu0 0.0
    %4588 = vmatpush.msra.mxu0 0.0
    %4589 = vmatpush.msra.mxu0 0.0
    %4590 = vmatpush.msra.mxu0 0.0
    %4591 = vmatpush.msra.mxu0 0.0
    %4592 = vmatpush.msra.mxu0 0.0
    %4593 = vmatpush.msra.mxu0 0.0
    %4594 = vmatpush.msra.mxu0 0.0
    %4595 = vmatpush.msra.mxu0 0.0
    %4596 = vmatpush.msra.mxu0 0.0
    %4597 = vmatpush.msra.mxu0 0.0
    %4598 = vmatpush.msra.mxu0 0.0
    %4599 = vmatpush.msra.mxu0 0.0
    %4600 = vmatpush.msra.mxu0 0.0
    %4601 = vmatpush.msra.mxu0 0.0
    %v4602 = vand.u32 %v92, 4294901760
    %v4603 = vsub.f32 %v92, %v4602
    %v4604 = vand.u32 %v4603, 4294901760
    %v4605 = vsub.f32 %v4603, %v4604
    %v4606 = vand.u32 %v4605, 4294901760
    %4607 = vmatpush.msra.mxu0 %v4606
    %v4608 = vand.u32 %v2955, 4294901760
    %4609 = vmatmul.f32.gmra.mxu0 %v4608
    %v4610 = vpop.f32.mrf.mxu0
    %v4611 = vadd.f32 %v4577, %v4610
    %v4612 = vand.u32 %v2958, 4294901760
    %4613 = vmatmul.f32.gmra.mxu0 %v4612
    %v4614 = vpop.f32.mrf.mxu0
    %v4615 = vadd.f32 %v4585, %v4614
    %4616 = vdwg.mxu0
    %4617 = vmatpush.msra.mxu0 0.0
    %4618 = vmatpush.msra.mxu0 0.0
    %4619 = vmatpush.msra.mxu0 0.0
    %4620 = vmatpush.msra.mxu0 0.0
    %4621 = vmatpush.msra.mxu0 0.0
    %4622 = vmatpush.msra.mxu0 0.0
    %4623 = vmatpush.msra.mxu0 0.0
    %4624 = vmatpush.msra.mxu0 0.0
    %4625 = vmatpush.msra.mxu0 0.0
    %4626 = vmatpush.msra.mxu0 0.0
    %4627 = vmatpush.msra.mxu0 0.0
    %4628 = vmatpush.msra.mxu0 0.0
    %4629 = vmatpush.msra.mxu0 0.0
    %4630 = vmatpush.msra.mxu0 0.0
    %4631 = vmatpush.msra.mxu0 0.0
    %v4632 = vand.u32 %v92, 4294901760
    %v4633 = vsub.f32 %v92, %v4632
    %4634 = vmatpush.msra.mxu0 %v4633
    %v4635 = vand.u32 %v2955, 4294901760
    %v4636 = vsub.f32 %v2955, %v4635
    %4637 = vmatmul.f32.gmra.mxu0 %v4636
    %v4638 = vpop.f32.mrf.mxu0
    %v4639 = vadd.f32 %v4611, %v4638
    %v4640 = vand.u32 %v2958, 4294901760
    %v4641 = vsub.f32 %v2958, %v4640
    %4642 = vmatmul.f32.gmra.mxu0 %v4641
    %v4643 = vpop.f32.mrf.mxu0
    %v4644 = vadd.f32 %v4615, %v4643
    %4645 = vdwg.mxu0
    %4646 = vmatpush.msra.mxu0 0.0
    %4647 = vmatpush.msra.mxu0 0.0
    %4648 = vmatpush.msra.mxu0 0.0
    %4649 = vmatpush.msra.mxu0 0.0
    %4650 = vmatpush.msra.mxu0 0.0
    %4651 = vmatpush.msra.mxu0 0.0
    %4652 = vmatpush.msra.mxu0 0.0
    %4653 = vmatpush.msra.mxu0 0.0
    %4654 = vmatpush.msra.mxu0 0.0
    %4655 = vmatpush.msra.mxu0 0.0
    %4656 = vmatpush.msra.mxu0 0.0
    %4657 = vmatpush.msra.mxu0 0.0
    %4658 = vmatpush.msra.mxu0 0.0
    %4659 = vmatpush.msra.mxu0 0.0
    %4660 = vmatpush.msra.mxu0 0.0
    %v4661 = vand.u32 %v92, 4294901760
    %4662 = vmatpush.msra.mxu0 %v4661
    %v4663 = vand.u32 %v2955, 4294901760
    %v4664 = vsub.f32 %v2955, %v4663
    %v4665 = vand.u32 %v4664, 4294901760
    %4666 = vmatmul.f32.gmra.mxu0 %v4665
    %v4667 = vpop.f32.mrf.mxu0
    %v4668 = vadd.f32 %v4639, %v4667
    %v4669 = vand.u32 %v2958, 4294901760
    %v4670 = vsub.f32 %v2958, %v4669
    %v4671 = vand.u32 %v4670, 4294901760
    %4672 = vmatmul.f32.gmra.mxu0 %v4671
    %v4673 = vpop.f32.mrf.mxu0
    %v4674 = vadd.f32 %v4644, %v4673
    %4675 = vdwg.mxu0
    %4676 = vmatpush.msra.mxu0 0.0
    %4677 = vmatpush.msra.mxu0 0.0
    %4678 = vmatpush.msra.mxu0 0.0
    %4679 = vmatpush.msra.mxu0 0.0
    %4680 = vmatpush.msra.mxu0 0.0
    %4681 = vmatpush.msra.mxu0 0.0
    %4682 = vmatpush.msra.mxu0 0.0
    %4683 = vmatpush.msra.mxu0 0.0
    %4684 = vmatpush.msra.mxu0 0.0
    %4685 = vmatpush.msra.mxu0 0.0
    %4686 = vmatpush.msra.mxu0 0.0
    %4687 = vmatpush.msra.mxu0 0.0
    %4688 = vmatpush.msra.mxu0 0.0
    %4689 = vmatpush.msra.mxu0 0.0
    %4690 = vmatpush.msra.mxu0 0.0
    %v4691 = vand.u32 %v92, 4294901760
    %v4692 = vsub.f32 %v92, %v4691
    %v4693 = vand.u32 %v4692, 4294901760
    %4694 = vmatpush.msra.mxu0 %v4693
    %v4695 = vand.u32 %v2955, 4294901760
    %4696 = vmatmul.f32.gmra.mxu0 %v4695
    %v4697 = vpop.f32.mrf.mxu0
    %v4698 = vadd.f32 %v4668, %v4697
    %v4699 = vand.u32 %v2958, 4294901760
    %4700 = vmatmul.f32.gmra.mxu0 %v4699
    %v4701 = vpop.f32.mrf.mxu0
    %v4702 = vadd.f32 %v4674, %v4701
    %4703 = vdwg.mxu0
    %4704 = vmatpush.msra.mxu0 0.0
    %4705 = vmatpush.msra.mxu0 0.0
    %4706 = vmatpush.msra.mxu0 0.0
    %4707 = vmatpush.msra.mxu0 0.0
    %4708 = vmatpush.msra.mxu0 0.0
    %4709 = vmatpush.msra.mxu0 0.0
    %4710 = vmatpush.msra.mxu0 0.0
    %4711 = vmatpush.msra.mxu0 0.0
    %4712 = vmatpush.msra.mxu0 0.0
    %4713 = vmatpush.msra.mxu0 0.0
    %4714 = vmatpush.msra.mxu0 0.0
    %4715 = vmatpush.msra.mxu0 0.0
    %4716 = vmatpush.msra.mxu0 0.0
    %4717 = vmatpush.msra.mxu0 0.0
    %4718 = vmatpush.msra.mxu0 0.0
    %v4719 = vand.u32 %v92, 4294901760
    %4720 = vmatpush.msra.mxu0 %v4719
    %v4721 = vand.u32 %v2955, 4294901760
    %4722 = vmatmul.f32.gmra.mxu0 %v4721
    %v4723 = vpop.f32.mrf.mxu0
    %v4724 = vadd.f32 %v4698, %v4723
    %v4725 = vand.u32 %v2958, 4294901760
    %4726 = vmatmul.f32.gmra.mxu0 %v4725
    %v4727 = vpop.f32.mrf.mxu0
    %v4728 = vadd.f32 %v4702, %v4727
    %4729 = vdwg.mxu0
    %4730 = vmatpush.msra.mxu0 0.0
    %4731 = vmatpush.msra.mxu0 0.0
    %4732 = vmatpush.msra.mxu0 0.0
    %4733 = vmatpush.msra.mxu0 0.0
    %4734 = vmatpush.msra.mxu0 0.0
    %4735 = vmatpush.msra.mxu0 0.0
    %4736 = vmatpush.msra.mxu0 0.0
    %4737 = vmatpush.msra.mxu0 0.0
    %4738 = vmatpush.msra.mxu0 0.0
    %4739 = vmatpush.msra.mxu0 0.0
    %4740 = vmatpush.msra.mxu0 0.0
    %4741 = vmatpush.msra.mxu0 0.0
    %4742 = vmatpush.msra.mxu0 0.0
    %4743 = vmatpush.msra.mxu0 0.0
    %4744 = vmatpush.msra.mxu0 0.0
    %v4745 = vand.u32 %v93, 4294901760
    %4746 = vmatpush.msra.mxu0 %v4745
    %v4747 = vand.u32 %v2955, 4294901760
    %v4748 = vsub.f32 %v2955, %v4747
    %v4749 = vand.u32 %v4748, 4294901760
    %v4750 = vsub.f32 %v4748, %v4749
    %v4751 = vand.u32 %v4750, 4294901760
    %4752 = vmatmul.f32.gmra.mxu0 %v4751
    %v4753 = vpop.f32.mrf.mxu0
    %v4754 = vadd.f32 %v2063, %v4753
    %v4755 = vand.u32 %v2958, 4294901760
    %v4756 = vsub.f32 %v2958, %v4755
    %v4757 = vand.u32 %v4756, 4294901760
    %v4758 = vsub.f32 %v4756, %v4757
    %v4759 = vand.u32 %v4758, 4294901760
    %4760 = vmatmul.f32.gmra.mxu0 %v4759
    %v4761 = vpop.f32.mrf.mxu0
    %v4762 = vadd.f32 %v2067, %v4761
    %4763 = vdwg.mxu0
    %4764 = vmatpush.msra.mxu0 0.0
    %4765 = vmatpush.msra.mxu0 0.0
    %4766 = vmatpush.msra.mxu0 0.0
    %4767 = vmatpush.msra.mxu0 0.0
    %4768 = vmatpush.msra.mxu0 0.0
    %4769 = vmatpush.msra.mxu0 0.0
    %4770 = vmatpush.msra.mxu0 0.0
    %4771 = vmatpush.msra.mxu0 0.0
    %4772 = vmatpush.msra.mxu0 0.0
    %4773 = vmatpush.msra.mxu0 0.0
    %4774 = vmatpush.msra.mxu0 0.0
    %4775 = vmatpush.msra.mxu0 0.0
    %4776 = vmatpush.msra.mxu0 0.0
    %4777 = vmatpush.msra.mxu0 0.0
    %4778 = vmatpush.msra.mxu0 0.0
    %v4779 = vand.u32 %v93, 4294901760
    %v4780 = vsub.f32 %v93, %v4779
    %v4781 = vand.u32 %v4780, 4294901760
    %v4782 = vsub.f32 %v4780, %v4781
    %v4783 = vand.u32 %v4782, 4294901760
    %4784 = vmatpush.msra.mxu0 %v4783
    %v4785 = vand.u32 %v2955, 4294901760
    %4786 = vmatmul.f32.gmra.mxu0 %v4785
    %v4787 = vpop.f32.mrf.mxu0
    %v4788 = vadd.f32 %v4754, %v4787
    %v4789 = vand.u32 %v2958, 4294901760
    %4790 = vmatmul.f32.gmra.mxu0 %v4789
    %v4791 = vpop.f32.mrf.mxu0
    %v4792 = vadd.f32 %v4762, %v4791
    %4793 = vdwg.mxu0
    %4794 = vmatpush.msra.mxu0 0.0
    %4795 = vmatpush.msra.mxu0 0.0
    %4796 = vmatpush.msra.mxu0 0.0
    %4797 = vmatpush.msra.mxu0 0.0
    %4798 = vmatpush.msra.mxu0 0.0
    %4799 = vmatpush.msra.mxu0 0.0
    %4800 = vmatpush.msra.mxu0 0.0
    %4801 = vmatpush.msra.mxu0 0.0
    %4802 = vmatpush.msra.mxu0 0.0
    %4803 = vmatpush.msra.mxu0 0.0
    %4804 = vmatpush.msra.mxu0 0.0
    %4805 = vmatpush.msra.mxu0 0.0
    %4806 = vmatpush.msra.mxu0 0.0
    %4807 = vmatpush.msra.mxu0 0.0
    %4808 = vmatpush.msra.mxu0 0.0
    %v4809 = vand.u32 %v93, 4294901760
    %v4810 = vsub.f32 %v93, %v4809
    %4811 = vmatpush.msra.mxu0 %v4810
    %v4812 = vand.u32 %v2955, 4294901760
    %v4813 = vsub.f32 %v2955, %v4812
    %4814 = vmatmul.f32.gmra.mxu0 %v4813
    %v4815 = vpop.f32.mrf.mxu0
    %v4816 = vadd.f32 %v4788, %v4815
    %v4817 = vand.u32 %v2958, 4294901760
    %v4818 = vsub.f32 %v2958, %v4817
    %4819 = vmatmul.f32.gmra.mxu0 %v4818
    %v4820 = vpop.f32.mrf.mxu0
    %v4821 = vadd.f32 %v4792, %v4820
    %4822 = vdwg.mxu0
    %4823 = vmatpush.msra.mxu0 0.0
    %4824 = vmatpush.msra.mxu0 0.0
    %4825 = vmatpush.msra.mxu0 0.0
    %4826 = vmatpush.msra.mxu0 0.0
    %4827 = vmatpush.msra.mxu0 0.0
    %4828 = vmatpush.msra.mxu0 0.0
    %4829 = vmatpush.msra.mxu0 0.0
    %4830 = vmatpush.msra.mxu0 0.0
    %4831 = vmatpush.msra.mxu0 0.0
    %4832 = vmatpush.msra.mxu0 0.0
    %4833 = vmatpush.msra.mxu0 0.0
    %4834 = vmatpush.msra.mxu0 0.0
    %4835 = vmatpush.msra.mxu0 0.0
    %4836 = vmatpush.msra.mxu0 0.0
    %4837 = vmatpush.msra.mxu0 0.0
    %v4838 = vand.u32 %v93, 4294901760
    %4839 = vmatpush.msra.mxu0 %v4838
    %v4840 = vand.u32 %v2955, 4294901760
    %v4841 = vsub.f32 %v2955, %v4840
    %v4842 = vand.u32 %v4841, 4294901760
    %4843 = vmatmul.f32.gmra.mxu0 %v4842
    %v4844 = vpop.f32.mrf.mxu0
    %v4845 = vadd.f32 %v4816, %v4844
    %v4846 = vand.u32 %v2958, 4294901760
    %v4847 = vsub.f32 %v2958, %v4846
    %v4848 = vand.u32 %v4847, 4294901760
    %4849 = vmatmul.f32.gmra.mxu0 %v4848
    %v4850 = vpop.f32.mrf.mxu0
    %v4851 = vadd.f32 %v4821, %v4850
    %4852 = vdwg.mxu0
    %4853 = vmatpush.msra.mxu0 0.0
    %4854 = vmatpush.msra.mxu0 0.0
    %4855 = vmatpush.msra.mxu0 0.0
    %4856 = vmatpush.msra.mxu0 0.0
    %4857 = vmatpush.msra.mxu0 0.0
    %4858 = vmatpush.msra.mxu0 0.0
    %4859 = vmatpush.msra.mxu0 0.0
    %4860 = vmatpush.msra.mxu0 0.0
    %4861 = vmatpush.msra.mxu0 0.0
    %4862 = vmatpush.msra.mxu0 0.0
    %4863 = vmatpush.msra.mxu0 0.0
    %4864 = vmatpush.msra.mxu0 0.0
    %4865 = vmatpush.msra.mxu0 0.0
    %4866 = vmatpush.msra.mxu0 0.0
    %4867 = vmatpush.msra.mxu0 0.0
    %v4868 = vand.u32 %v93, 4294901760
    %v4869 = vsub.f32 %v93, %v4868
    %v4870 = vand.u32 %v4869, 4294901760
    %4871 = vmatpush.msra.mxu0 %v4870
    %v4872 = vand.u32 %v2955, 4294901760
    %4873 = vmatmul.f32.gmra.mxu0 %v4872
    %v4874 = vpop.f32.mrf.mxu0
    %v4875 = vadd.f32 %v4845, %v4874
    %v4876 = vand.u32 %v2958, 4294901760
    %4877 = vmatmul.f32.gmra.mxu0 %v4876
    %v4878 = vpop.f32.mrf.mxu0
    %v4879 = vadd.f32 %v4851, %v4878
    %4880 = vdwg.mxu0
    %4881 = vmatpush.msra.mxu0 0.0
    %4882 = vmatpush.msra.mxu0 0.0
    %4883 = vmatpush.msra.mxu0 0.0
    %4884 = vmatpush.msra.mxu0 0.0
    %4885 = vmatpush.msra.mxu0 0.0
    %4886 = vmatpush.msra.mxu0 0.0
    %4887 = vmatpush.msra.mxu0 0.0
    %4888 = vmatpush.msra.mxu0 0.0
    %4889 = vmatpush.msra.mxu0 0.0
    %4890 = vmatpush.msra.mxu0 0.0
    %4891 = vmatpush.msra.mxu0 0.0
    %4892 = vmatpush.msra.mxu0 0.0
    %4893 = vmatpush.msra.mxu0 0.0
    %4894 = vmatpush.msra.mxu0 0.0
    %4895 = vmatpush.msra.mxu0 0.0
    %v4896 = vand.u32 %v93, 4294901760
    %4897 = vmatpush.msra.mxu0 %v4896
    %v4898 = vand.u32 %v2955, 4294901760
    %4899 = vmatmul.f32.gmra.mxu0 %v4898
    %v4900 = vpop.f32.mrf.mxu0
    %v4901 = vadd.f32 %v4875, %v4900
    %v4902 = vand.u32 %v2958, 4294901760
    %4903 = vmatmul.f32.gmra.mxu0 %v4902
    %v4904 = vpop.f32.mrf.mxu0
    %v4905 = vadd.f32 %v4879, %v4904
    %4906 = vdwg.mxu0
    %4907 = vmatpush.msra.mxu0 0.0
    %4908 = vmatpush.msra.mxu0 0.0
    %4909 = vmatpush.msra.mxu0 0.0
    %4910 = vmatpush.msra.mxu0 0.0
    %4911 = vmatpush.msra.mxu0 0.0
    %4912 = vmatpush.msra.mxu0 0.0
    %4913 = vmatpush.msra.mxu0 0.0
    %4914 = vmatpush.msra.mxu0 0.0
    %4915 = vmatpush.msra.mxu0 0.0
    %4916 = vmatpush.msra.mxu0 0.0
    %4917 = vmatpush.msra.mxu0 0.0
    %4918 = vmatpush.msra.mxu0 0.0
    %4919 = vmatpush.msra.mxu0 0.0
    %4920 = vmatpush.msra.mxu0 0.0
    %4921 = vmatpush.msra.mxu0 0.0
    %v4922 = vand.u32 %v94, 4294901760
    %4923 = vmatpush.msra.mxu0 %v4922
    %v4924 = vand.u32 %v2955, 4294901760
    %v4925 = vsub.f32 %v2955, %v4924
    %v4926 = vand.u32 %v4925, 4294901760
    %v4927 = vsub.f32 %v4925, %v4926
    %v4928 = vand.u32 %v4927, 4294901760
    %4929 = vmatmul.f32.gmra.mxu0 %v4928
    %v4930 = vpop.f32.mrf.mxu0
    %v4931 = vadd.f32 %v2240, %v4930
    %v4932 = vand.u32 %v2958, 4294901760
    %v4933 = vsub.f32 %v2958, %v4932
    %v4934 = vand.u32 %v4933, 4294901760
    %v4935 = vsub.f32 %v4933, %v4934
    %v4936 = vand.u32 %v4935, 4294901760
    %4937 = vmatmul.f32.gmra.mxu0 %v4936
    %v4938 = vpop.f32.mrf.mxu0
    %v4939 = vadd.f32 %v2244, %v4938
    %4940 = vdwg.mxu0
    %4941 = vmatpush.msra.mxu0 0.0
    %4942 = vmatpush.msra.mxu0 0.0
    %4943 = vmatpush.msra.mxu0 0.0
    %4944 = vmatpush.msra.mxu0 0.0
    %4945 = vmatpush.msra.mxu0 0.0
    %4946 = vmatpush.msra.mxu0 0.0
    %4947 = vmatpush.msra.mxu0 0.0
    %4948 = vmatpush.msra.mxu0 0.0
    %4949 = vmatpush.msra.mxu0 0.0
    %4950 = vmatpush.msra.mxu0 0.0
    %4951 = vmatpush.msra.mxu0 0.0
    %4952 = vmatpush.msra.mxu0 0.0
    %4953 = vmatpush.msra.mxu0 0.0
    %4954 = vmatpush.msra.mxu0 0.0
    %4955 = vmatpush.msra.mxu0 0.0
    %v4956 = vand.u32 %v94, 4294901760
    %v4957 = vsub.f32 %v94, %v4956
    %v4958 = vand.u32 %v4957, 4294901760
    %v4959 = vsub.f32 %v4957, %v4958
    %v4960 = vand.u32 %v4959, 4294901760
    %4961 = vmatpush.msra.mxu0 %v4960
    %v4962 = vand.u32 %v2955, 4294901760
    %4963 = vmatmul.f32.gmra.mxu0 %v4962
    %v4964 = vpop.f32.mrf.mxu0
    %v4965 = vadd.f32 %v4931, %v4964
    %v4966 = vand.u32 %v2958, 4294901760
    %4967 = vmatmul.f32.gmra.mxu0 %v4966
    %v4968 = vpop.f32.mrf.mxu0
    %v4969 = vadd.f32 %v4939, %v4968
    %4970 = vdwg.mxu0
    %4971 = vmatpush.msra.mxu0 0.0
    %4972 = vmatpush.msra.mxu0 0.0
    %4973 = vmatpush.msra.mxu0 0.0
    %4974 = vmatpush.msra.mxu0 0.0
    %4975 = vmatpush.msra.mxu0 0.0
    %4976 = vmatpush.msra.mxu0 0.0
    %4977 = vmatpush.msra.mxu0 0.0
    %4978 = vmatpush.msra.mxu0 0.0
    %4979 = vmatpush.msra.mxu0 0.0
    %4980 = vmatpush.msra.mxu0 0.0
    %4981 = vmatpush.msra.mxu0 0.0
    %4982 = vmatpush.msra.mxu0 0.0
    %4983 = vmatpush.msra.mxu0 0.0
    %4984 = vmatpush.msra.mxu0 0.0
    %4985 = vmatpush.msra.mxu0 0.0
    %v4986 = vand.u32 %v94, 4294901760
    %v4987 = vsub.f32 %v94, %v4986
    %4988 = vmatpush.msra.mxu0 %v4987
    %v4989 = vand.u32 %v2955, 4294901760
    %v4990 = vsub.f32 %v2955, %v4989
    %4991 = vmatmul.f32.gmra.mxu0 %v4990
    %v4992 = vpop.f32.mrf.mxu0
    %v4993 = vadd.f32 %v4965, %v4992
    %v4994 = vand.u32 %v2958, 4294901760
    %v4995 = vsub.f32 %v2958, %v4994
    %4996 = vmatmul.f32.gmra.mxu0 %v4995
    %v4997 = vpop.f32.mrf.mxu0
    %v4998 = vadd.f32 %v4969, %v4997
    %4999 = vdwg.mxu0
    %5000 = vmatpush.msra.mxu0 0.0
    %5001 = vmatpush.msra.mxu0 0.0
    %5002 = vmatpush.msra.mxu0 0.0
    %5003 = vmatpush.msra.mxu0 0.0
    %5004 = vmatpush.msra.mxu0 0.0
    %5005 = vmatpush.msra.mxu0 0.0
    %5006 = vmatpush.msra.mxu0 0.0
    %5007 = vmatpush.msra.mxu0 0.0
    %5008 = vmatpush.msra.mxu0 0.0
    %5009 = vmatpush.msra.mxu0 0.0
    %5010 = vmatpush.msra.mxu0 0.0
    %5011 = vmatpush.msra.mxu0 0.0
    %5012 = vmatpush.msra.mxu0 0.0
    %5013 = vmatpush.msra.mxu0 0.0
    %5014 = vmatpush.msra.mxu0 0.0
    %v5015 = vand.u32 %v94, 4294901760
    %5016 = vmatpush.msra.mxu0 %v5015
    %v5017 = vand.u32 %v2955, 4294901760
    %v5018 = vsub.f32 %v2955, %v5017
    %v5019 = vand.u32 %v5018, 4294901760
    %5020 = vmatmul.f32.gmra.mxu0 %v5019
    %v5021 = vpop.f32.mrf.mxu0
    %v5022 = vadd.f32 %v4993, %v5021
    %v5023 = vand.u32 %v2958, 4294901760
    %v5024 = vsub.f32 %v2958, %v5023
    %v5025 = vand.u32 %v5024, 4294901760
    %5026 = vmatmul.f32.gmra.mxu0 %v5025
    %v5027 = vpop.f32.mrf.mxu0
    %v5028 = vadd.f32 %v4998, %v5027
    %5029 = vdwg.mxu0
    %5030 = vmatpush.msra.mxu0 0.0
    %5031 = vmatpush.msra.mxu0 0.0
    %5032 = vmatpush.msra.mxu0 0.0
    %5033 = vmatpush.msra.mxu0 0.0
    %5034 = vmatpush.msra.mxu0 0.0
    %5035 = vmatpush.msra.mxu0 0.0
    %5036 = vmatpush.msra.mxu0 0.0
    %5037 = vmatpush.msra.mxu0 0.0
    %5038 = vmatpush.msra.mxu0 0.0
    %5039 = vmatpush.msra.mxu0 0.0
    %5040 = vmatpush.msra.mxu0 0.0
    %5041 = vmatpush.msra.mxu0 0.0
    %5042 = vmatpush.msra.mxu0 0.0
    %5043 = vmatpush.msra.mxu0 0.0
    %5044 = vmatpush.msra.mxu0 0.0
    %v5045 = vand.u32 %v94, 4294901760
    %v5046 = vsub.f32 %v94, %v5045
    %v5047 = vand.u32 %v5046, 4294901760
    %5048 = vmatpush.msra.mxu0 %v5047
    %v5049 = vand.u32 %v2955, 4294901760
    %5050 = vmatmul.f32.gmra.mxu0 %v5049
    %v5051 = vpop.f32.mrf.mxu0
    %v5052 = vadd.f32 %v5022, %v5051
    %v5053 = vand.u32 %v2958, 4294901760
    %5054 = vmatmul.f32.gmra.mxu0 %v5053
    %v5055 = vpop.f32.mrf.mxu0
    %v5056 = vadd.f32 %v5028, %v5055
    %5057 = vdwg.mxu0
    %5058 = vmatpush.msra.mxu0 0.0
    %5059 = vmatpush.msra.mxu0 0.0
    %5060 = vmatpush.msra.mxu0 0.0
    %5061 = vmatpush.msra.mxu0 0.0
    %5062 = vmatpush.msra.mxu0 0.0
    %5063 = vmatpush.msra.mxu0 0.0
    %5064 = vmatpush.msra.mxu0 0.0
    %5065 = vmatpush.msra.mxu0 0.0
    %5066 = vmatpush.msra.mxu0 0.0
    %5067 = vmatpush.msra.mxu0 0.0
    %5068 = vmatpush.msra.mxu0 0.0
    %5069 = vmatpush.msra.mxu0 0.0
    %5070 = vmatpush.msra.mxu0 0.0
    %5071 = vmatpush.msra.mxu0 0.0
    %5072 = vmatpush.msra.mxu0 0.0
    %v5073 = vand.u32 %v94, 4294901760
    %5074 = vmatpush.msra.mxu0 %v5073
    %v5075 = vand.u32 %v2955, 4294901760
    %5076 = vmatmul.f32.gmra.mxu0 %v5075
    %v5077 = vpop.f32.mrf.mxu0
    %v5078 = vadd.f32 %v5052, %v5077
    %v5079 = vand.u32 %v2958, 4294901760
    %5080 = vmatmul.f32.gmra.mxu0 %v5079
    %v5081 = vpop.f32.mrf.mxu0
    %v5082 = vadd.f32 %v5056, %v5081
    %5083 = vdwg.mxu0
    %5084 = vmatpush.msra.mxu0 0.0
    %5085 = vmatpush.msra.mxu0 0.0
    %5086 = vmatpush.msra.mxu0 0.0
    %5087 = vmatpush.msra.mxu0 0.0
    %5088 = vmatpush.msra.mxu0 0.0
    %5089 = vmatpush.msra.mxu0 0.0
    %5090 = vmatpush.msra.mxu0 0.0
    %5091 = vmatpush.msra.mxu0 0.0
    %5092 = vmatpush.msra.mxu0 0.0
    %5093 = vmatpush.msra.mxu0 0.0
    %5094 = vmatpush.msra.mxu0 0.0
    %5095 = vmatpush.msra.mxu0 0.0
    %5096 = vmatpush.msra.mxu0 0.0
    %5097 = vmatpush.msra.mxu0 0.0
    %5098 = vmatpush.msra.mxu0 0.0
    %v5099 = vand.u32 %v95, 4294901760
    %5100 = vmatpush.msra.mxu0 %v5099
    %v5101 = vand.u32 %v2955, 4294901760
    %v5102 = vsub.f32 %v2955, %v5101
    %v5103 = vand.u32 %v5102, 4294901760
    %v5104 = vsub.f32 %v5102, %v5103
    %v5105 = vand.u32 %v5104, 4294901760
    %5106 = vmatmul.f32.gmra.mxu0 %v5105
    %v5107 = vpop.f32.mrf.mxu0
    %v5108 = vadd.f32 %v2417, %v5107
    %v5109 = vand.u32 %v2958, 4294901760
    %v5110 = vsub.f32 %v2958, %v5109
    %v5111 = vand.u32 %v5110, 4294901760
    %v5112 = vsub.f32 %v5110, %v5111
    %v5113 = vand.u32 %v5112, 4294901760
    %5114 = vmatmul.f32.gmra.mxu0 %v5113
    %v5115 = vpop.f32.mrf.mxu0
    %v5116 = vadd.f32 %v2421, %v5115
    %5117 = vdwg.mxu0
    %5118 = vmatpush.msra.mxu0 0.0
    %5119 = vmatpush.msra.mxu0 0.0
    %5120 = vmatpush.msra.mxu0 0.0
    %5121 = vmatpush.msra.mxu0 0.0
    %5122 = vmatpush.msra.mxu0 0.0
    %5123 = vmatpush.msra.mxu0 0.0
    %5124 = vmatpush.msra.mxu0 0.0
    %5125 = vmatpush.msra.mxu0 0.0
    %5126 = vmatpush.msra.mxu0 0.0
    %5127 = vmatpush.msra.mxu0 0.0
    %5128 = vmatpush.msra.mxu0 0.0
    %5129 = vmatpush.msra.mxu0 0.0
    %5130 = vmatpush.msra.mxu0 0.0
    %5131 = vmatpush.msra.mxu0 0.0
    %5132 = vmatpush.msra.mxu0 0.0
    %v5133 = vand.u32 %v95, 4294901760
    %v5134 = vsub.f32 %v95, %v5133
    %v5135 = vand.u32 %v5134, 4294901760
    %v5136 = vsub.f32 %v5134, %v5135
    %v5137 = vand.u32 %v5136, 4294901760
    %5138 = vmatpush.msra.mxu0 %v5137
    %v5139 = vand.u32 %v2955, 4294901760
    %5140 = vmatmul.f32.gmra.mxu0 %v5139
    %v5141 = vpop.f32.mrf.mxu0
    %v5142 = vadd.f32 %v5108, %v5141
    %v5143 = vand.u32 %v2958, 4294901760
    %5144 = vmatmul.f32.gmra.mxu0 %v5143
    %v5145 = vpop.f32.mrf.mxu0
    %v5146 = vadd.f32 %v5116, %v5145
    %5147 = vdwg.mxu0
    %5148 = vmatpush.msra.mxu0 0.0
    %5149 = vmatpush.msra.mxu0 0.0
    %5150 = vmatpush.msra.mxu0 0.0
    %5151 = vmatpush.msra.mxu0 0.0
    %5152 = vmatpush.msra.mxu0 0.0
    %5153 = vmatpush.msra.mxu0 0.0
    %5154 = vmatpush.msra.mxu0 0.0
    %5155 = vmatpush.msra.mxu0 0.0
    %5156 = vmatpush.msra.mxu0 0.0
    %5157 = vmatpush.msra.mxu0 0.0
    %5158 = vmatpush.msra.mxu0 0.0
    %5159 = vmatpush.msra.mxu0 0.0
    %5160 = vmatpush.msra.mxu0 0.0
    %5161 = vmatpush.msra.mxu0 0.0
    %5162 = vmatpush.msra.mxu0 0.0
    %v5163 = vand.u32 %v95, 4294901760
    %v5164 = vsub.f32 %v95, %v5163
    %5165 = vmatpush.msra.mxu0 %v5164
    %v5166 = vand.u32 %v2955, 4294901760
    %v5167 = vsub.f32 %v2955, %v5166
    %5168 = vmatmul.f32.gmra.mxu0 %v5167
    %v5169 = vpop.f32.mrf.mxu0
    %v5170 = vadd.f32 %v5142, %v5169
    %v5171 = vand.u32 %v2958, 4294901760
    %v5172 = vsub.f32 %v2958, %v5171
    %5173 = vmatmul.f32.gmra.mxu0 %v5172
    %v5174 = vpop.f32.mrf.mxu0
    %v5175 = vadd.f32 %v5146, %v5174
    %5176 = vdwg.mxu0
    %5177 = vmatpush.msra.mxu0 0.0
    %5178 = vmatpush.msra.mxu0 0.0
    %5179 = vmatpush.msra.mxu0 0.0
    %5180 = vmatpush.msra.mxu0 0.0
    %5181 = vmatpush.msra.mxu0 0.0
    %5182 = vmatpush.msra.mxu0 0.0
    %5183 = vmatpush.msra.mxu0 0.0
    %5184 = vmatpush.msra.mxu0 0.0
    %5185 = vmatpush.msra.mxu0 0.0
    %5186 = vmatpush.msra.mxu0 0.0
    %5187 = vmatpush.msra.mxu0 0.0
    %5188 = vmatpush.msra.mxu0 0.0
    %5189 = vmatpush.msra.mxu0 0.0
    %5190 = vmatpush.msra.mxu0 0.0
    %5191 = vmatpush.msra.mxu0 0.0
    %v5192 = vand.u32 %v95, 4294901760
    %5193 = vmatpush.msra.mxu0 %v5192
    %v5194 = vand.u32 %v2955, 4294901760
    %v5195 = vsub.f32 %v2955, %v5194
    %v5196 = vand.u32 %v5195, 4294901760
    %5197 = vmatmul.f32.gmra.mxu0 %v5196
    %v5198 = vpop.f32.mrf.mxu0
    %v5199 = vadd.f32 %v5170, %v5198
    %v5200 = vand.u32 %v2958, 4294901760
    %v5201 = vsub.f32 %v2958, %v5200
    %v5202 = vand.u32 %v5201, 4294901760
    %5203 = vmatmul.f32.gmra.mxu0 %v5202
    %v5204 = vpop.f32.mrf.mxu0
    %v5205 = vadd.f32 %v5175, %v5204
    %5206 = vdwg.mxu0
    %5207 = vmatpush.msra.mxu0 0.0
    %5208 = vmatpush.msra.mxu0 0.0
    %5209 = vmatpush.msra.mxu0 0.0
    %5210 = vmatpush.msra.mxu0 0.0
    %5211 = vmatpush.msra.mxu0 0.0
    %5212 = vmatpush.msra.mxu0 0.0
    %5213 = vmatpush.msra.mxu0 0.0
    %5214 = vmatpush.msra.mxu0 0.0
    %5215 = vmatpush.msra.mxu0 0.0
    %5216 = vmatpush.msra.mxu0 0.0
    %5217 = vmatpush.msra.mxu0 0.0
    %5218 = vmatpush.msra.mxu0 0.0
    %5219 = vmatpush.msra.mxu0 0.0
    %5220 = vmatpush.msra.mxu0 0.0
    %5221 = vmatpush.msra.mxu0 0.0
    %v5222 = vand.u32 %v95, 4294901760
    %v5223 = vsub.f32 %v95, %v5222
    %v5224 = vand.u32 %v5223, 4294901760
    %5225 = vmatpush.msra.mxu0 %v5224
    %v5226 = vand.u32 %v2955, 4294901760
    %5227 = vmatmul.f32.gmra.mxu0 %v5226
    %v5228 = vpop.f32.mrf.mxu0
    %v5229 = vadd.f32 %v5199, %v5228
    %v5230 = vand.u32 %v2958, 4294901760
    %5231 = vmatmul.f32.gmra.mxu0 %v5230
    %v5232 = vpop.f32.mrf.mxu0
    %v5233 = vadd.f32 %v5205, %v5232
    %5234 = vdwg.mxu0
    %5235 = vmatpush.msra.mxu0 0.0
    %5236 = vmatpush.msra.mxu0 0.0
    %5237 = vmatpush.msra.mxu0 0.0
    %5238 = vmatpush.msra.mxu0 0.0
    %5239 = vmatpush.msra.mxu0 0.0
    %5240 = vmatpush.msra.mxu0 0.0
    %5241 = vmatpush.msra.mxu0 0.0
    %5242 = vmatpush.msra.mxu0 0.0
    %5243 = vmatpush.msra.mxu0 0.0
    %5244 = vmatpush.msra.mxu0 0.0
    %5245 = vmatpush.msra.mxu0 0.0
    %5246 = vmatpush.msra.mxu0 0.0
    %5247 = vmatpush.msra.mxu0 0.0
    %5248 = vmatpush.msra.mxu0 0.0
    %5249 = vmatpush.msra.mxu0 0.0
    %v5250 = vand.u32 %v95, 4294901760
    %5251 = vmatpush.msra.mxu0 %v5250
    %v5252 = vand.u32 %v2955, 4294901760
    %5253 = vmatmul.f32.gmra.mxu0 %v5252
    %v5254 = vpop.f32.mrf.mxu0
    %v5255 = vadd.f32 %v5229, %v5254
    %v5256 = vand.u32 %v2958, 4294901760
    %5257 = vmatmul.f32.gmra.mxu0 %v5256
    %v5258 = vpop.f32.mrf.mxu0
    %v5259 = vadd.f32 %v5233, %v5258
    %5260 = vdwg.mxu0
    %5261 = vmatpush.msra.mxu0 0.0
    %5262 = vmatpush.msra.mxu0 0.0
    %5263 = vmatpush.msra.mxu0 0.0
    %5264 = vmatpush.msra.mxu0 0.0
    %5265 = vmatpush.msra.mxu0 0.0
    %5266 = vmatpush.msra.mxu0 0.0
    %5267 = vmatpush.msra.mxu0 0.0
    %5268 = vmatpush.msra.mxu0 0.0
    %5269 = vmatpush.msra.mxu0 0.0
    %5270 = vmatpush.msra.mxu0 0.0
    %5271 = vmatpush.msra.mxu0 0.0
    %5272 = vmatpush.msra.mxu0 0.0
    %5273 = vmatpush.msra.mxu0 0.0
    %5274 = vmatpush.msra.mxu0 0.0
    %5275 = vmatpush.msra.mxu0 0.0
    %v5276 = vand.u32 %v96, 4294901760
    %5277 = vmatpush.msra.mxu0 %v5276
    %v5278 = vand.u32 %v2955, 4294901760
    %v5279 = vsub.f32 %v2955, %v5278
    %v5280 = vand.u32 %v5279, 4294901760
    %v5281 = vsub.f32 %v5279, %v5280
    %v5282 = vand.u32 %v5281, 4294901760
    %5283 = vmatmul.f32.gmra.mxu0 %v5282
    %v5284 = vpop.f32.mrf.mxu0
    %v5285 = vadd.f32 %v2594, %v5284
    %v5286 = vand.u32 %v2958, 4294901760
    %v5287 = vsub.f32 %v2958, %v5286
    %v5288 = vand.u32 %v5287, 4294901760
    %v5289 = vsub.f32 %v5287, %v5288
    %v5290 = vand.u32 %v5289, 4294901760
    %5291 = vmatmul.f32.gmra.mxu0 %v5290
    %v5292 = vpop.f32.mrf.mxu0
    %v5293 = vadd.f32 %v2598, %v5292
    %5294 = vdwg.mxu0
    %5295 = vmatpush.msra.mxu0 0.0
    %5296 = vmatpush.msra.mxu0 0.0
    %5297 = vmatpush.msra.mxu0 0.0
    %5298 = vmatpush.msra.mxu0 0.0
    %5299 = vmatpush.msra.mxu0 0.0
    %5300 = vmatpush.msra.mxu0 0.0
    %5301 = vmatpush.msra.mxu0 0.0
    %5302 = vmatpush.msra.mxu0 0.0
    %5303 = vmatpush.msra.mxu0 0.0
    %5304 = vmatpush.msra.mxu0 0.0
    %5305 = vmatpush.msra.mxu0 0.0
    %5306 = vmatpush.msra.mxu0 0.0
    %5307 = vmatpush.msra.mxu0 0.0
    %5308 = vmatpush.msra.mxu0 0.0
    %5309 = vmatpush.msra.mxu0 0.0
    %v5310 = vand.u32 %v96, 4294901760
    %v5311 = vsub.f32 %v96, %v5310
    %v5312 = vand.u32 %v5311, 4294901760
    %v5313 = vsub.f32 %v5311, %v5312
    %v5314 = vand.u32 %v5313, 4294901760
    %5315 = vmatpush.msra.mxu0 %v5314
    %v5316 = vand.u32 %v2955, 4294901760
    %5317 = vmatmul.f32.gmra.mxu0 %v5316
    %v5318 = vpop.f32.mrf.mxu0
    %v5319 = vadd.f32 %v5285, %v5318
    %v5320 = vand.u32 %v2958, 4294901760
    %5321 = vmatmul.f32.gmra.mxu0 %v5320
    %v5322 = vpop.f32.mrf.mxu0
    %v5323 = vadd.f32 %v5293, %v5322
    %5324 = vdwg.mxu0
    %5325 = vmatpush.msra.mxu0 0.0
    %5326 = vmatpush.msra.mxu0 0.0
    %5327 = vmatpush.msra.mxu0 0.0
    %5328 = vmatpush.msra.mxu0 0.0
    %5329 = vmatpush.msra.mxu0 0.0
    %5330 = vmatpush.msra.mxu0 0.0
    %5331 = vmatpush.msra.mxu0 0.0
    %5332 = vmatpush.msra.mxu0 0.0
    %5333 = vmatpush.msra.mxu0 0.0
    %5334 = vmatpush.msra.mxu0 0.0
    %5335 = vmatpush.msra.mxu0 0.0
    %5336 = vmatpush.msra.mxu0 0.0
    %5337 = vmatpush.msra.mxu0 0.0
    %5338 = vmatpush.msra.mxu0 0.0
    %5339 = vmatpush.msra.mxu0 0.0
    %v5340 = vand.u32 %v96, 4294901760
    %v5341 = vsub.f32 %v96, %v5340
    %5342 = vmatpush.msra.mxu0 %v5341
    %v5343 = vand.u32 %v2955, 4294901760
    %v5344 = vsub.f32 %v2955, %v5343
    %5345 = vmatmul.f32.gmra.mxu0 %v5344
    %v5346 = vpop.f32.mrf.mxu0
    %v5347 = vadd.f32 %v5319, %v5346
    %v5348 = vand.u32 %v2958, 4294901760
    %v5349 = vsub.f32 %v2958, %v5348
    %5350 = vmatmul.f32.gmra.mxu0 %v5349
    %v5351 = vpop.f32.mrf.mxu0
    %v5352 = vadd.f32 %v5323, %v5351
    %5353 = vdwg.mxu0
    %5354 = vmatpush.msra.mxu0 0.0
    %5355 = vmatpush.msra.mxu0 0.0
    %5356 = vmatpush.msra.mxu0 0.0
    %5357 = vmatpush.msra.mxu0 0.0
    %5358 = vmatpush.msra.mxu0 0.0
    %5359 = vmatpush.msra.mxu0 0.0
    %5360 = vmatpush.msra.mxu0 0.0
    %5361 = vmatpush.msra.mxu0 0.0
    %5362 = vmatpush.msra.mxu0 0.0
    %5363 = vmatpush.msra.mxu0 0.0
    %5364 = vmatpush.msra.mxu0 0.0
    %5365 = vmatpush.msra.mxu0 0.0
    %5366 = vmatpush.msra.mxu0 0.0
    %5367 = vmatpush.msra.mxu0 0.0
    %5368 = vmatpush.msra.mxu0 0.0
    %v5369 = vand.u32 %v96, 4294901760
    %5370 = vmatpush.msra.mxu0 %v5369
    %v5371 = vand.u32 %v2955, 4294901760
    %v5372 = vsub.f32 %v2955, %v5371
    %v5373 = vand.u32 %v5372, 4294901760
    %5374 = vmatmul.f32.gmra.mxu0 %v5373
    %v5375 = vpop.f32.mrf.mxu0
    %v5376 = vadd.f32 %v5347, %v5375
    %v5377 = vand.u32 %v2958, 4294901760
    %v5378 = vsub.f32 %v2958, %v5377
    %v5379 = vand.u32 %v5378, 4294901760
    %5380 = vmatmul.f32.gmra.mxu0 %v5379
    %v5381 = vpop.f32.mrf.mxu0
    %v5382 = vadd.f32 %v5352, %v5381
    %5383 = vdwg.mxu0
    %5384 = vmatpush.msra.mxu0 0.0
    %5385 = vmatpush.msra.mxu0 0.0
    %5386 = vmatpush.msra.mxu0 0.0
    %5387 = vmatpush.msra.mxu0 0.0
    %5388 = vmatpush.msra.mxu0 0.0
    %5389 = vmatpush.msra.mxu0 0.0
    %5390 = vmatpush.msra.mxu0 0.0
    %5391 = vmatpush.msra.mxu0 0.0
    %5392 = vmatpush.msra.mxu0 0.0
    %5393 = vmatpush.msra.mxu0 0.0
    %5394 = vmatpush.msra.mxu0 0.0
    %5395 = vmatpush.msra.mxu0 0.0
    %5396 = vmatpush.msra.mxu0 0.0
    %5397 = vmatpush.msra.mxu0 0.0
    %5398 = vmatpush.msra.mxu0 0.0
    %v5399 = vand.u32 %v96, 4294901760
    %v5400 = vsub.f32 %v96, %v5399
    %v5401 = vand.u32 %v5400, 4294901760
    %5402 = vmatpush.msra.mxu0 %v5401
    %v5403 = vand.u32 %v2955, 4294901760
    %5404 = vmatmul.f32.gmra.mxu0 %v5403
    %v5405 = vpop.f32.mrf.mxu0
    %v5406 = vadd.f32 %v5376, %v5405
    %v5407 = vand.u32 %v2958, 4294901760
    %5408 = vmatmul.f32.gmra.mxu0 %v5407
    %v5409 = vpop.f32.mrf.mxu0
    %v5410 = vadd.f32 %v5382, %v5409
    %5411 = vdwg.mxu0
    %5412 = vmatpush.msra.mxu0 0.0
    %5413 = vmatpush.msra.mxu0 0.0
    %5414 = vmatpush.msra.mxu0 0.0
    %5415 = vmatpush.msra.mxu0 0.0
    %5416 = vmatpush.msra.mxu0 0.0
    %5417 = vmatpush.msra.mxu0 0.0
    %5418 = vmatpush.msra.mxu0 0.0
    %5419 = vmatpush.msra.mxu0 0.0
    %5420 = vmatpush.msra.mxu0 0.0
    %5421 = vmatpush.msra.mxu0 0.0
    %5422 = vmatpush.msra.mxu0 0.0
    %5423 = vmatpush.msra.mxu0 0.0
    %5424 = vmatpush.msra.mxu0 0.0
    %5425 = vmatpush.msra.mxu0 0.0
    %5426 = vmatpush.msra.mxu0 0.0
    %v5427 = vand.u32 %v96, 4294901760
    %5428 = vmatpush.msra.mxu0 %v5427
    %v5429 = vand.u32 %v2955, 4294901760
    %5430 = vmatmul.f32.gmra.mxu0 %v5429
    %v5431 = vpop.f32.mrf.mxu0
    %v5432 = vadd.f32 %v5406, %v5431
    %v5433 = vand.u32 %v2958, 4294901760
    %5434 = vmatmul.f32.gmra.mxu0 %v5433
    %v5435 = vpop.f32.mrf.mxu0
    %v5436 = vadd.f32 %v5410, %v5435
    %5437 = vdwg.mxu0
    %5438 = vmatpush.msra.mxu0 0.0
    %5439 = vmatpush.msra.mxu0 0.0
    %5440 = vmatpush.msra.mxu0 0.0
    %5441 = vmatpush.msra.mxu0 0.0
    %5442 = vmatpush.msra.mxu0 0.0
    %5443 = vmatpush.msra.mxu0 0.0
    %5444 = vmatpush.msra.mxu0 0.0
    %5445 = vmatpush.msra.mxu0 0.0
    %5446 = vmatpush.msra.mxu0 0.0
    %5447 = vmatpush.msra.mxu0 0.0
    %5448 = vmatpush.msra.mxu0 0.0
    %5449 = vmatpush.msra.mxu0 0.0
    %5450 = vmatpush.msra.mxu0 0.0
    %5451 = vmatpush.msra.mxu0 0.0
    %5452 = vmatpush.msra.mxu0 0.0
    %v5453 = vand.u32 %v97, 4294901760
    %5454 = vmatpush.msra.mxu0 %v5453
    %v5455 = vand.u32 %v2955, 4294901760
    %v5456 = vsub.f32 %v2955, %v5455
    %v5457 = vand.u32 %v5456, 4294901760
    %v5458 = vsub.f32 %v5456, %v5457
    %v5459 = vand.u32 %v5458, 4294901760
    %5460 = vmatmul.f32.gmra.mxu0 %v5459
    %v5461 = vpop.f32.mrf.mxu0
    %v5462 = vadd.f32 %v2771, %v5461
    %v5463 = vand.u32 %v2958, 4294901760
    %v5464 = vsub.f32 %v2958, %v5463
    %v5465 = vand.u32 %v5464, 4294901760
    %v5466 = vsub.f32 %v5464, %v5465
    %v5467 = vand.u32 %v5466, 4294901760
    %5468 = vmatmul.f32.gmra.mxu0 %v5467
    %v5469 = vpop.f32.mrf.mxu0
    %v5470 = vadd.f32 %v2775, %v5469
    %5471 = vdwg.mxu0
    %5472 = vmatpush.msra.mxu0 0.0
    %5473 = vmatpush.msra.mxu0 0.0
    %5474 = vmatpush.msra.mxu0 0.0
    %5475 = vmatpush.msra.mxu0 0.0
    %5476 = vmatpush.msra.mxu0 0.0
    %5477 = vmatpush.msra.mxu0 0.0
    %5478 = vmatpush.msra.mxu0 0.0
    %5479 = vmatpush.msra.mxu0 0.0
    %5480 = vmatpush.msra.mxu0 0.0
    %5481 = vmatpush.msra.mxu0 0.0
    %5482 = vmatpush.msra.mxu0 0.0
    %5483 = vmatpush.msra.mxu0 0.0
    %5484 = vmatpush.msra.mxu0 0.0
    %5485 = vmatpush.msra.mxu0 0.0
    %5486 = vmatpush.msra.mxu0 0.0
    %v5487 = vand.u32 %v97, 4294901760
    %v5488 = vsub.f32 %v97, %v5487
    %v5489 = vand.u32 %v5488, 4294901760
    %v5490 = vsub.f32 %v5488, %v5489
    %v5491 = vand.u32 %v5490, 4294901760
    %5492 = vmatpush.msra.mxu0 %v5491
    %v5493 = vand.u32 %v2955, 4294901760
    %5494 = vmatmul.f32.gmra.mxu0 %v5493
    %v5495 = vpop.f32.mrf.mxu0
    %v5496 = vadd.f32 %v5462, %v5495
    %v5497 = vand.u32 %v2958, 4294901760
    %5498 = vmatmul.f32.gmra.mxu0 %v5497
    %v5499 = vpop.f32.mrf.mxu0
    %v5500 = vadd.f32 %v5470, %v5499
    %5501 = vdwg.mxu0
    %5502 = vmatpush.msra.mxu0 0.0
    %5503 = vmatpush.msra.mxu0 0.0
    %5504 = vmatpush.msra.mxu0 0.0
    %5505 = vmatpush.msra.mxu0 0.0
    %5506 = vmatpush.msra.mxu0 0.0
    %5507 = vmatpush.msra.mxu0 0.0
    %5508 = vmatpush.msra.mxu0 0.0
    %5509 = vmatpush.msra.mxu0 0.0
    %5510 = vmatpush.msra.mxu0 0.0
    %5511 = vmatpush.msra.mxu0 0.0
    %5512 = vmatpush.msra.mxu0 0.0
    %5513 = vmatpush.msra.mxu0 0.0
    %5514 = vmatpush.msra.mxu0 0.0
    %5515 = vmatpush.msra.mxu0 0.0
    %5516 = vmatpush.msra.mxu0 0.0
    %v5517 = vand.u32 %v97, 4294901760
    %v5518 = vsub.f32 %v97, %v5517
    %5519 = vmatpush.msra.mxu0 %v5518
    %v5520 = vand.u32 %v2955, 4294901760
    %v5521 = vsub.f32 %v2955, %v5520
    %5522 = vmatmul.f32.gmra.mxu0 %v5521
    %v5523 = vpop.f32.mrf.mxu0
    %v5524 = vadd.f32 %v5496, %v5523
    %v5525 = vand.u32 %v2958, 4294901760
    %v5526 = vsub.f32 %v2958, %v5525
    %5527 = vmatmul.f32.gmra.mxu0 %v5526
    %v5528 = vpop.f32.mrf.mxu0
    %v5529 = vadd.f32 %v5500, %v5528
    %5530 = vdwg.mxu0
    %5531 = vmatpush.msra.mxu0 0.0
    %5532 = vmatpush.msra.mxu0 0.0
    %5533 = vmatpush.msra.mxu0 0.0
    %5534 = vmatpush.msra.mxu0 0.0
    %5535 = vmatpush.msra.mxu0 0.0
    %5536 = vmatpush.msra.mxu0 0.0
    %5537 = vmatpush.msra.mxu0 0.0
    %5538 = vmatpush.msra.mxu0 0.0
    %5539 = vmatpush.msra.mxu0 0.0
    %5540 = vmatpush.msra.mxu0 0.0
    %5541 = vmatpush.msra.mxu0 0.0
    %5542 = vmatpush.msra.mxu0 0.0
    %5543 = vmatpush.msra.mxu0 0.0
    %5544 = vmatpush.msra.mxu0 0.0
    %5545 = vmatpush.msra.mxu0 0.0
    %v5546 = vand.u32 %v97, 4294901760
    %5547 = vmatpush.msra.mxu0 %v5546
    %v5548 = vand.u32 %v2955, 4294901760
    %v5549 = vsub.f32 %v2955, %v5548
    %v5550 = vand.u32 %v5549, 4294901760
    %5551 = vmatmul.f32.gmra.mxu0 %v5550
    %v5552 = vpop.f32.mrf.mxu0
    %v5553 = vadd.f32 %v5524, %v5552
    %v5554 = vand.u32 %v2958, 4294901760
    %v5555 = vsub.f32 %v2958, %v5554
    %v5556 = vand.u32 %v5555, 4294901760
    %5557 = vmatmul.f32.gmra.mxu0 %v5556
    %v5558 = vpop.f32.mrf.mxu0
    %v5559 = vadd.f32 %v5529, %v5558
    %5560 = vdwg.mxu0
    %5561 = vmatpush.msra.mxu0 0.0
    %5562 = vmatpush.msra.mxu0 0.0
    %5563 = vmatpush.msra.mxu0 0.0
    %5564 = vmatpush.msra.mxu0 0.0
    %5565 = vmatpush.msra.mxu0 0.0
    %5566 = vmatpush.msra.mxu0 0.0
    %5567 = vmatpush.msra.mxu0 0.0
    %5568 = vmatpush.msra.mxu0 0.0
    %5569 = vmatpush.msra.mxu0 0.0
    %5570 = vmatpush.msra.mxu0 0.0
    %5571 = vmatpush.msra.mxu0 0.0
    %5572 = vmatpush.msra.mxu0 0.0
    %5573 = vmatpush.msra.mxu0 0.0
    %5574 = vmatpush.msra.mxu0 0.0
    %5575 = vmatpush.msra.mxu0 0.0
    %v5576 = vand.u32 %v97, 4294901760
    %v5577 = vsub.f32 %v97, %v5576
    %v5578 = vand.u32 %v5577, 4294901760
    %5579 = vmatpush.msra.mxu0 %v5578
    %v5580 = vand.u32 %v2955, 4294901760
    %5581 = vmatmul.f32.gmra.mxu0 %v5580
    %v5582 = vpop.f32.mrf.mxu0
    %v5583 = vadd.f32 %v5553, %v5582
    %v5584 = vand.u32 %v2958, 4294901760
    %5585 = vmatmul.f32.gmra.mxu0 %v5584
    %v5586 = vpop.f32.mrf.mxu0
    %v5587 = vadd.f32 %v5559, %v5586
    %5588 = vdwg.mxu0
    %5589 = vmatpush.msra.mxu0 0.0
    %5590 = vmatpush.msra.mxu0 0.0
    %5591 = vmatpush.msra.mxu0 0.0
    %5592 = vmatpush.msra.mxu0 0.0
    %5593 = vmatpush.msra.mxu0 0.0
    %5594 = vmatpush.msra.mxu0 0.0
    %5595 = vmatpush.msra.mxu0 0.0
    %5596 = vmatpush.msra.mxu0 0.0
    %5597 = vmatpush.msra.mxu0 0.0
    %5598 = vmatpush.msra.mxu0 0.0
    %5599 = vmatpush.msra.mxu0 0.0
    %5600 = vmatpush.msra.mxu0 0.0
    %5601 = vmatpush.msra.mxu0 0.0
    %5602 = vmatpush.msra.mxu0 0.0
    %5603 = vmatpush.msra.mxu0 0.0
    %v5604 = vand.u32 %v97, 4294901760
    %5605 = vmatpush.msra.mxu0 %v5604
    %v5606 = vand.u32 %v2955, 4294901760
    %5607 = vmatmul.f32.gmra.mxu0 %v5606
    %v5608 = vpop.f32.mrf.mxu0
    %v5609 = vadd.f32 %v5583, %v5608
    %v5610 = vand.u32 %v2958, 4294901760
    %5611 = vmatmul.f32.gmra.mxu0 %v5610
    %v5612 = vpop.f32.mrf.mxu0
    %v5613 = vadd.f32 %v5587, %v5612
    %5614 = vdwg.mxu0
    %5615 = vmatpush.msra.mxu0 0.0
    %5616 = vmatpush.msra.mxu0 0.0
    %5617 = vmatpush.msra.mxu0 0.0
    %5618 = vmatpush.msra.mxu0 0.0
    %5619 = vmatpush.msra.mxu0 0.0
    %5620 = vmatpush.msra.mxu0 0.0
    %5621 = vmatpush.msra.mxu0 0.0
    %5622 = vmatpush.msra.mxu0 0.0
    %5623 = vmatpush.msra.mxu0 0.0
    %5624 = vmatpush.msra.mxu0 0.0
    %5625 = vmatpush.msra.mxu0 0.0
    %5626 = vmatpush.msra.mxu0 0.0
    %5627 = vmatpush.msra.mxu0 0.0
    %5628 = vmatpush.msra.mxu0 0.0
    %5629 = vmatpush.msra.mxu0 0.0
    %v5630 = vand.u32 %v98, 4294901760
    %5631 = vmatpush.msra.mxu0 %v5630
    %v5632 = vand.u32 %v2955, 4294901760
    %v5633 = vsub.f32 %v2955, %v5632
    %v5634 = vand.u32 %v5633, 4294901760
    %v5635 = vsub.f32 %v5633, %v5634
    %v5636 = vand.u32 %v5635, 4294901760
    %5637 = vmatmul.f32.gmra.mxu0 %v5636
    %v5638 = vpop.f32.mrf.mxu0
    %v5639 = vadd.f32 %v2948, %v5638
    %v5640 = vand.u32 %v2958, 4294901760
    %v5641 = vsub.f32 %v2958, %v5640
    %v5642 = vand.u32 %v5641, 4294901760
    %v5643 = vsub.f32 %v5641, %v5642
    %v5644 = vand.u32 %v5643, 4294901760
    %5645 = vmatmul.f32.gmra.mxu0 %v5644
    %v5646 = vpop.f32.mrf.mxu0
    %v5647 = vadd.f32 %v2952, %v5646
    %5648 = vdwg.mxu0
    %5649 = vmatpush.msra.mxu0 0.0
    %5650 = vmatpush.msra.mxu0 0.0
    %5651 = vmatpush.msra.mxu0 0.0
    %5652 = vmatpush.msra.mxu0 0.0
    %5653 = vmatpush.msra.mxu0 0.0
    %5654 = vmatpush.msra.mxu0 0.0
    %5655 = vmatpush.msra.mxu0 0.0
    %5656 = vmatpush.msra.mxu0 0.0
    %5657 = vmatpush.msra.mxu0 0.0
    %5658 = vmatpush.msra.mxu0 0.0
    %5659 = vmatpush.msra.mxu0 0.0
    %5660 = vmatpush.msra.mxu0 0.0
    %5661 = vmatpush.msra.mxu0 0.0
    %5662 = vmatpush.msra.mxu0 0.0
    %5663 = vmatpush.msra.mxu0 0.0
    %v5664 = vand.u32 %v98, 4294901760
    %v5665 = vsub.f32 %v98, %v5664
    %v5666 = vand.u32 %v5665, 4294901760
    %v5667 = vsub.f32 %v5665, %v5666
    %v5668 = vand.u32 %v5667, 4294901760
    %5669 = vmatpush.msra.mxu0 %v5668
    %v5670 = vand.u32 %v2955, 4294901760
    %5671 = vmatmul.f32.gmra.mxu0 %v5670
    %v5672 = vpop.f32.mrf.mxu0
    %v5673 = vadd.f32 %v5639, %v5672
    %v5674 = vand.u32 %v2958, 4294901760
    %5675 = vmatmul.f32.gmra.mxu0 %v5674
    %v5676 = vpop.f32.mrf.mxu0
    %v5677 = vadd.f32 %v5647, %v5676
    %5678 = vdwg.mxu0
    %5679 = vmatpush.msra.mxu0 0.0
    %5680 = vmatpush.msra.mxu0 0.0
    %5681 = vmatpush.msra.mxu0 0.0
    %5682 = vmatpush.msra.mxu0 0.0
    %5683 = vmatpush.msra.mxu0 0.0
    %5684 = vmatpush.msra.mxu0 0.0
    %5685 = vmatpush.msra.mxu0 0.0
    %5686 = vmatpush.msra.mxu0 0.0
    %5687 = vmatpush.msra.mxu0 0.0
    %5688 = vmatpush.msra.mxu0 0.0
    %5689 = vmatpush.msra.mxu0 0.0
    %5690 = vmatpush.msra.mxu0 0.0
    %5691 = vmatpush.msra.mxu0 0.0
    %5692 = vmatpush.msra.mxu0 0.0
    %5693 = vmatpush.msra.mxu0 0.0
    %v5694 = vand.u32 %v98, 4294901760
    %v5695 = vsub.f32 %v98, %v5694
    %5696 = vmatpush.msra.mxu0 %v5695
    %v5697 = vand.u32 %v2955, 4294901760
    %v5698 = vsub.f32 %v2955, %v5697
    %5699 = vmatmul.f32.gmra.mxu0 %v5698
    %v5700 = vpop.f32.mrf.mxu0
    %v5701 = vadd.f32 %v5673, %v5700
    %v5702 = vand.u32 %v2958, 4294901760
    %v5703 = vsub.f32 %v2958, %v5702
    %5704 = vmatmul.f32.gmra.mxu0 %v5703
    %v5705 = vpop.f32.mrf.mxu0
    %v5706 = vadd.f32 %v5677, %v5705
    %5707 = vdwg.mxu0
    %5708 = vmatpush.msra.mxu0 0.0
    %5709 = vmatpush.msra.mxu0 0.0
    %5710 = vmatpush.msra.mxu0 0.0
    %5711 = vmatpush.msra.mxu0 0.0
    %5712 = vmatpush.msra.mxu0 0.0
    %5713 = vmatpush.msra.mxu0 0.0
    %5714 = vmatpush.msra.mxu0 0.0
    %5715 = vmatpush.msra.mxu0 0.0
    %5716 = vmatpush.msra.mxu0 0.0
    %5717 = vmatpush.msra.mxu0 0.0
    %5718 = vmatpush.msra.mxu0 0.0
    %5719 = vmatpush.msra.mxu0 0.0
    %5720 = vmatpush.msra.mxu0 0.0
    %5721 = vmatpush.msra.mxu0 0.0
    %5722 = vmatpush.msra.mxu0 0.0
    %v5723 = vand.u32 %v98, 4294901760
    %5724 = vmatpush.msra.mxu0 %v5723
    %v5725 = vand.u32 %v2955, 4294901760
    %v5726 = vsub.f32 %v2955, %v5725
    %v5727 = vand.u32 %v5726, 4294901760
    %5728 = vmatmul.f32.gmra.mxu0 %v5727
    %v5729 = vpop.f32.mrf.mxu0
    %v5730 = vadd.f32 %v5701, %v5729
    %v5731 = vand.u32 %v2958, 4294901760
    %v5732 = vsub.f32 %v2958, %v5731
    %v5733 = vand.u32 %v5732, 4294901760
    %5734 = vmatmul.f32.gmra.mxu0 %v5733
    %v5735 = vpop.f32.mrf.mxu0
    %v5736 = vadd.f32 %v5706, %v5735
    %5737 = vdwg.mxu0
    %5738 = vmatpush.msra.mxu0 0.0
    %5739 = vmatpush.msra.mxu0 0.0
    %5740 = vmatpush.msra.mxu0 0.0
    %5741 = vmatpush.msra.mxu0 0.0
    %5742 = vmatpush.msra.mxu0 0.0
    %5743 = vmatpush.msra.mxu0 0.0
    %5744 = vmatpush.msra.mxu0 0.0
    %5745 = vmatpush.msra.mxu0 0.0
    %5746 = vmatpush.msra.mxu0 0.0
    %5747 = vmatpush.msra.mxu0 0.0
    %5748 = vmatpush.msra.mxu0 0.0
    %5749 = vmatpush.msra.mxu0 0.0
    %5750 = vmatpush.msra.mxu0 0.0
    %5751 = vmatpush.msra.mxu0 0.0
    %5752 = vmatpush.msra.mxu0 0.0
    %v5753 = vand.u32 %v98, 4294901760
    %v5754 = vsub.f32 %v98, %v5753
    %v5755 = vand.u32 %v5754, 4294901760
    %5756 = vmatpush.msra.mxu0 %v5755
    %v5757 = vand.u32 %v2955, 4294901760
    %5758 = vmatmul.f32.gmra.mxu0 %v5757
    %v5759 = vpop.f32.mrf.mxu0
    %v5760 = vadd.f32 %v5730, %v5759
    %v5761 = vand.u32 %v2958, 4294901760
    %5762 = vmatmul.f32.gmra.mxu0 %v5761
    %v5763 = vpop.f32.mrf.mxu0
    %v5764 = vadd.f32 %v5736, %v5763
    %5765 = vdwg.mxu0
    %5766 = vmatpush.msra.mxu0 0.0
    %5767 = vmatpush.msra.mxu0 0.0
    %5768 = vmatpush.msra.mxu0 0.0
    %5769 = vmatpush.msra.mxu0 0.0
    %5770 = vmatpush.msra.mxu0 0.0
    %5771 = vmatpush.msra.mxu0 0.0
    %5772 = vmatpush.msra.mxu0 0.0
    %5773 = vmatpush.msra.mxu0 0.0
    %5774 = vmatpush.msra.mxu0 0.0
    %5775 = vmatpush.msra.mxu0 0.0
    %5776 = vmatpush.msra.mxu0 0.0
    %5777 = vmatpush.msra.mxu0 0.0
    %5778 = vmatpush.msra.mxu0 0.0
    %5779 = vmatpush.msra.mxu0 0.0
    %5780 = vmatpush.msra.mxu0 0.0
    %v5781 = vand.u32 %v98, 4294901760
    %5782 = vmatpush.msra.mxu0 %v5781
    %v5783 = vand.u32 %v2955, 4294901760
    %5784 = vmatmul.f32.gmra.mxu0 %v5783
    %v5785 = vpop.f32.mrf.mxu0
    %v5786 = vadd.f32 %v5760, %v5785
    %v5787 = vand.u32 %v2958, 4294901760
    %5788 = vmatmul.f32.gmra.mxu0 %v5787
    %v5789 = vpop.f32.mrf.mxu0
    %v5790 = vadd.f32 %v5764, %v5789
    %5791 = vdwg.mxu0
    %v5792 = vld [vmem:[%s3] sm:$0xff]
    %v5793 = vld [vmem:[%s3 + $0x8] sm:$0xff]
    %v5796 = vperm.slane %v5792, 0
    %v5797 = vperm.slane %v5792, 1
    %v5798 = vperm.slane %v5792, 2
    %v5799 = vperm.slane %v5792, 3
    %v5800 = vperm.slane %v5792, 4
    %v5801 = vperm.slane %v5792, 5
    %v5802 = vperm.slane %v5792, 6
    %v5803 = vperm.slane %v5792, 7
    %v5804 = vperm.slane %v5793, 0
    %v5805 = vperm.slane %v5793, 1
    %v5806 = vperm.slane %v5793, 2
    %v5807 = vperm.slane %v5793, 3
    %v5808 = vperm.slane %v5793, 4
    %v5809 = vperm.slane %v5793, 5
    %v5810 = vperm.slane %v5793, 6
    %v5811 = vperm.slane %v5793, 7
    %v5828 = vadd.f32 %v3131, %v5796
    %v5829 = vadd.f32 %v3308, %v5797
    %v5830 = vadd.f32 %v3485, %v5798
    %v5831 = vadd.f32 %v3662, %v5799
    %v5832 = vadd.f32 %v3839, %v5800
    %v5833 = vadd.f32 %v4016, %v5801
    %v5834 = vadd.f32 %v4193, %v5802
    %v5835 = vadd.f32 %v4370, %v5803
    %v5836 = vadd.f32 %v4547, %v5804
    %v5837 = vadd.f32 %v4724, %v5805
    %v5838 = vadd.f32 %v4901, %v5806
    %v5839 = vadd.f32 %v5078, %v5807
    %v5840 = vadd.f32 %v5255, %v5808
    %v5841 = vadd.f32 %v5432, %v5809
    %v5842 = vadd.f32 %v5609, %v5810
    %v5843 = vadd.f32 %v5786, %v5811
    %v5844 = vadd.f32 %v3135, %v5796
    %v5845 = vadd.f32 %v3312, %v5797
    %v5846 = vadd.f32 %v3489, %v5798
    %v5847 = vadd.f32 %v3666, %v5799
    %v5848 = vadd.f32 %v3843, %v5800
    %v5849 = vadd.f32 %v4020, %v5801
    %v5850 = vadd.f32 %v4197, %v5802
    %v5851 = vadd.f32 %v4374, %v5803
    %v5852 = vadd.f32 %v4551, %v5804
    %v5853 = vadd.f32 %v4728, %v5805
    %v5854 = vadd.f32 %v4905, %v5806
    %v5855 = vadd.f32 %v5082, %v5807
    %v5856 = vadd.f32 %v5259, %v5808
    %v5857 = vadd.f32 %v5436, %v5809
    %v5858 = vadd.f32 %v5613, %v5810
    %v5859 = vadd.f32 %v5790, %v5811
    %v5860 = vmax.f32 %v5828, %v5829
    %v5861 = vmax.f32 %v5844, %v5845
    %v5862 = vmax.f32 %v5860, %v5830
    %v5863 = vmax.f32 %v5861, %v5846
    %v5864 = vmax.f32 %v5862, %v5831
    %v5865 = vmax.f32 %v5863, %v5847
    %v5866 = vmax.f32 %v5864, %v5832
    %v5867 = vmax.f32 %v5865, %v5848
    %v5868 = vmax.f32 %v5866, %v5833
    %v5869 = vmax.f32 %v5867, %v5849
    %v5870 = vmax.f32 %v5868, %v5834
    %v5871 = vmax.f32 %v5869, %v5850
    %v5872 = vmax.f32 %v5870, %v5835
    %v5873 = vmax.f32 %v5871, %v5851
    %v5874 = vmax.f32 %v5872, %v5836
    %v5875 = vmax.f32 %v5873, %v5852
    %v5876 = vmax.f32 %v5874, %v5837
    %v5877 = vmax.f32 %v5875, %v5853
    %v5878 = vmax.f32 %v5876, %v5838
    %v5879 = vmax.f32 %v5877, %v5854
    %v5880 = vmax.f32 %v5878, %v5839
    %v5881 = vmax.f32 %v5879, %v5855
    %v5882 = vmax.f32 %v5880, %v5840
    %v5883 = vmax.f32 %v5881, %v5856
    %v5884 = vmax.f32 %v5882, %v5841
    %v5885 = vmax.f32 %v5883, %v5857
    %v5886 = vmax.f32 %v5884, %v5842
    %v5887 = vmax.f32 %v5885, %v5858
    %v5888 = vmax.f32 %v5886, %v5843
    %v5889 = vmax.f32 %v5887, %v5859
    %v5890 = vsub.f32 %v5828, %v5888
    %v5891 = vsub.f32 %v5844, %v5889
    %v5892 = vmul.f32 %v5890, 1.442695
    %v5893 = vpow.pop %v5892
    %v5894 = vmul.f32 %v5891, 1.442695
    %v5895 = vpow.pop %v5894
    %v5896 = vsub.f32 %v5836, %v5888
    %v5897 = vsub.f32 %v5852, %v5889
    %v5898 = vmul.f32 %v5896, 1.442695
    %v5899 = vpow.pop %v5898
    %v5900 = vmul.f32 %v5897, 1.442695
    %v5901 = vpow.pop %v5900
    %v5902 = vadd.f32 %v5893, %v5899
    %v5903 = vadd.f32 %v5895, %v5901
    %s5904 = sld [smem:[#allocation7]]
    %v5905 = vstv %s5904
    %v5906 = vmul.f32 %v5902, %v5905
    %v5907 = vmul.f32 %v5903, %v5905
    %s5908 = sld [smem:[#allocation7 + $0x1]]
    %v5909 = vstv %s5908
    %v5910 = vmul.f32 %v5902, %v5909
    %v5911 = vmul.f32 %v5903, %v5909
    %v5912 = vsub.f32 %v5829, %v5888
    %v5913 = vsub.f32 %v5845, %v5889
    %v5914 = vmul.f32 %v5912, 1.442695
    %v5915 = vpow.pop %v5914
    %v5916 = vmul.f32 %v5913, 1.442695
    %v5917 = vpow.pop %v5916
    %v5918 = vsub.f32 %v5837, %v5888
    %v5919 = vsub.f32 %v5853, %v5889
    %v5920 = vmul.f32 %v5918, 1.442695
    %v5921 = vpow.pop %v5920
    %v5922 = vmul.f32 %v5919, 1.442695
    %v5923 = vpow.pop %v5922
    %v5924 = vadd.f32 %v5915, %v5921
    %v5925 = vadd.f32 %v5917, %v5923
    %v5926 = vadd.f32 %v5902, %v5924
    %v5927 = vadd.f32 %v5903, %v5925
    %s5928 = sld [smem:[#allocation7 + $0x80]]
    %v5929 = vstv %s5928
    %v5930 = vmul.f32 %v5924, %v5929
    %v5931 = vmul.f32 %v5925, %v5929
    %v5932 = vadd.f32 %v5906, %v5930
    %v5933 = vadd.f32 %v5907, %v5931
    %s5934 = sld [smem:[#allocation7 + $0x81]]
    %v5935 = vstv %s5934
    %v5936 = vmul.f32 %v5924, %v5935
    %v5937 = vmul.f32 %v5925, %v5935
    %v5938 = vadd.f32 %v5910, %v5936
    %v5939 = vadd.f32 %v5911, %v5937
    %v5940 = vsub.f32 %v5830, %v5888
    %v5941 = vsub.f32 %v5846, %v5889
    %v5942 = vmul.f32 %v5940, 1.442695
    %v5943 = vpow.pop %v5942
    %v5944 = vmul.f32 %v5941, 1.442695
    %v5945 = vpow.pop %v5944
    %v5946 = vsub.f32 %v5838, %v5888
    %v5947 = vsub.f32 %v5854, %v5889
    %v5948 = vmul.f32 %v5946, 1.442695
    %v5949 = vpow.pop %v5948
    %v5950 = vmul.f32 %v5947, 1.442695
    %v5951 = vpow.pop %v5950
    %v5952 = vadd.f32 %v5943, %v5949
    %v5953 = vadd.f32 %v5945, %v5951
    %v5954 = vadd.f32 %v5926, %v5952
    %v5955 = vadd.f32 %v5927, %v5953
    %s5956 = sld [smem:[#allocation7 + $0x100]]
    %v5957 = vstv %s5956
    %v5958 = vmul.f32 %v5952, %v5957
    %v5959 = vmul.f32 %v5953, %v5957
    %v5960 = vadd.f32 %v5932, %v5958
    %v5961 = vadd.f32 %v5933, %v5959
    %s5962 = sld [smem:[#allocation7 + $0x101]]
    %v5963 = vstv %s5962
    %v5964 = vmul.f32 %v5952, %v5963
    %v5965 = vmul.f32 %v5953, %v5963
    %v5966 = vadd.f32 %v5938, %v5964
    %v5967 = vadd.f32 %v5939, %v5965
    %v5968 = vsub.f32 %v5831, %v5888
    %v5969 = vsub.f32 %v5847, %v5889
    %v5970 = vmul.f32 %v5968, 1.442695
    %v5971 = vpow.pop %v5970
    %v5972 = vmul.f32 %v5969, 1.442695
    %v5973 = vpow.pop %v5972
    %v5974 = vsub.f32 %v5839, %v5888
    %v5975 = vsub.f32 %v5855, %v5889
    %v5976 = vmul.f32 %v5974, 1.442695
    %v5977 = vpow.pop %v5976
    %v5978 = vmul.f32 %v5975, 1.442695
    %v5979 = vpow.pop %v5978
    %v5980 = vadd.f32 %v5971, %v5977
    %v5981 = vadd.f32 %v5973, %v5979
    %v5982 = vadd.f32 %v5954, %v5980
    %v5983 = vadd.f32 %v5955, %v5981
    %s5984 = sld [smem:[#allocation7 + $0x180]]
    %v5985 = vstv %s5984
    %v5986 = vmul.f32 %v5980, %v5985
    %v5987 = vmul.f32 %v5981, %v5985
    %v5988 = vadd.f32 %v5960, %v5986
    %v5989 = vadd.f32 %v5961, %v5987
    %s5990 = sld [smem:[#allocation7 + $0x181]]
    %v5991 = vstv %s5990
    %v5992 = vmul.f32 %v5980, %v5991
    %v5993 = vmul.f32 %v5981, %v5991
    %v5994 = vadd.f32 %v5966, %v5992
    %v5995 = vadd.f32 %v5967, %v5993
    %v5996 = vsub.f32 %v5832, %v5888
    %v5997 = vsub.f32 %v5848, %v5889
    %v5998 = vmul.f32 %v5996, 1.442695
    %v5999 = vpow.pop %v5998
    %v6000 = vmul.f32 %v5997, 1.442695
    %v6001 = vpow.pop %v6000
    %v6002 = vsub.f32 %v5840, %v5888
    %v6003 = vsub.f32 %v5856, %v5889
    %v6004 = vmul.f32 %v6002, 1.442695
    %v6005 = vpow.pop %v6004
    %v6006 = vmul.f32 %v6003, 1.442695
    %v6007 = vpow.pop %v6006
    %v6008 = vadd.f32 %v5999, %v6005
    %v6009 = vadd.f32 %v6001, %v6007
    %v6010 = vadd.f32 %v5982, %v6008
    %v6011 = vadd.f32 %v5983, %v6009
    %s6012 = sld [smem:[#allocation7 + $0x200]]
    %v6013 = vstv %s6012
    %v6014 = vmul.f32 %v6008, %v6013
    %v6015 = vmul.f32 %v6009, %v6013
    %v6016 = vadd.f32 %v5988, %v6014
    %v6017 = vadd.f32 %v5989, %v6015
    %s6018 = sld [smem:[#allocation7 + $0x201]]
    %v6019 = vstv %s6018
    %v6020 = vmul.f32 %v6008, %v6019
    %v6021 = vmul.f32 %v6009, %v6019
    %v6022 = vadd.f32 %v5994, %v6020
    %v6023 = vadd.f32 %v5995, %v6021
    %v6024 = vsub.f32 %v5833, %v5888
    %v6025 = vsub.f32 %v5849, %v5889
    %v6026 = vmul.f32 %v6024, 1.442695
    %v6027 = vpow.pop %v6026
    %v6028 = vmul.f32 %v6025, 1.442695
    %v6029 = vpow.pop %v6028
    %v6030 = vsub.f32 %v5841, %v5888
    %v6031 = vsub.f32 %v5857, %v5889
    %v6032 = vmul.f32 %v6030, 1.442695
    %v6033 = vpow.pop %v6032
    %v6034 = vmul.f32 %v6031, 1.442695
    %v6035 = vpow.pop %v6034
    %v6036 = vadd.f32 %v6027, %v6033
    %v6037 = vadd.f32 %v6029, %v6035
    %v6038 = vadd.f32 %v6010, %v6036
    %v6039 = vadd.f32 %v6011, %v6037
    %s6040 = sld [smem:[#allocation7 + $0x280]]
    %v6041 = vstv %s6040
    %v6042 = vmul.f32 %v6036, %v6041
    %v6043 = vmul.f32 %v6037, %v6041
    %v6044 = vadd.f32 %v6016, %v6042
    %v6045 = vadd.f32 %v6017, %v6043
    %s6046 = sld [smem:[#allocation7 + $0x281]]
    %v6047 = vstv %s6046
    %v6048 = vmul.f32 %v6036, %v6047
    %v6049 = vmul.f32 %v6037, %v6047
    %v6050 = vadd.f32 %v6022, %v6048
    %v6051 = vadd.f32 %v6023, %v6049
    %v6052 = vsub.f32 %v5834, %v5888
    %v6053 = vsub.f32 %v5850, %v5889
    %v6054 = vmul.f32 %v6052, 1.442695
    %v6055 = vpow.pop %v6054
    %v6056 = vmul.f32 %v6053, 1.442695
    %v6057 = vpow.pop %v6056
    %v6058 = vsub.f32 %v5842, %v5888
    %v6059 = vsub.f32 %v5858, %v5889
    %v6060 = vmul.f32 %v6058, 1.442695
    %v6061 = vpow.pop %v6060
    %v6062 = vmul.f32 %v6059, 1.442695
    %v6063 = vpow.pop %v6062
    %v6064 = vadd.f32 %v6055, %v6061
    %v6065 = vadd.f32 %v6057, %v6063
    %v6066 = vadd.f32 %v6038, %v6064
    %v6067 = vadd.f32 %v6039, %v6065
    %s6068 = sld [smem:[#allocation7 + $0x300]]
    %v6069 = vstv %s6068
    %v6070 = vmul.f32 %v6064, %v6069
    %v6071 = vmul.f32 %v6065, %v6069
    %v6072 = vadd.f32 %v6044, %v6070
    %v6073 = vadd.f32 %v6045, %v6071
    %s6074 = sld [smem:[#allocation7 + $0x301]]
    %v6075 = vstv %s6074
    %v6076 = vmul.f32 %v6064, %v6075
    %v6077 = vmul.f32 %v6065, %v6075
    %v6078 = vadd.f32 %v6050, %v6076
    %v6079 = vadd.f32 %v6051, %v6077
    %v6080 = vsub.f32 %v5835, %v5888
    %v6081 = vsub.f32 %v5851, %v5889
    %v6082 = vmul.f32 %v6080, 1.442695
    %v6083 = vpow.pop %v6082
    %v6084 = vmul.f32 %v6081, 1.442695
    %v6085 = vpow.pop %v6084
    %v6086 = vsub.f32 %v5843, %v5888
    %v6087 = vsub.f32 %v5859, %v5889
    %v6088 = vmul.f32 %v6086, 1.442695
    %v6089 = vpow.pop %v6088
    %v6090 = vmul.f32 %v6087, 1.442695
    %v6091 = vpow.pop %v6090
    %v6092 = vadd.f32 %v6083, %v6089
    %v6093 = vadd.f32 %v6085, %v6091
    %v6094 = vadd.f32 %v6066, %v6092
    %v6095 = vadd.f32 %v6067, %v6093
    %s6096 = sld [smem:[#allocation7 + $0x380]]
    %v6097 = vstv %s6096
    %v6098 = vmul.f32 %v6092, %v6097
    %v6099 = vmul.f32 %v6093, %v6097
    %v6100 = vadd.f32 %v6072, %v6098
    %v6101 = vadd.f32 %v6073, %v6099
    %s6102 = sld [smem:[#allocation7 + $0x381]]
    %v6103 = vstv %s6102
    %v6104 = vmul.f32 %v6092, %v6103
    %v6105 = vmul.f32 %v6093, %v6103
    %v6106 = vadd.f32 %v6078, %v6104
    %v6107 = vadd.f32 %v6079, %v6105
    %v6108 = vrcp.pop %v6094
    %v6109 = vrcp.pop %v6095
    %v6110 = vmul.f32 %v6094, %v6108
    %v6111 = vmul.f32 %v6095, %v6109
    %v6112 = vsub.f32 2.0, %v6110
    %v6113 = vsub.f32 2.0, %v6111
    %v6114 = vmul.f32 %v6108, %v6112
    %v6115 = vmul.f32 %v6109, %v6113
    %v6116 = vld [vmem:[%s4] sm:$0x1]
    %v6118 = vperm.slane %v6116, 0
    %v6120 = vmul.f32 %v6114, %v6118
    %v6121 = vmul.f32 %v6115, %v6118
    %v6122 = vmul.f32 %v6100, %v6120
    %v6123 = vmul.f32 %v6101, %v6121
    %6124 = vadd.xlane.f32.xlu0 %v6122
    %v6125 = vpop.xlane.xlu0 %6124
    %6126 = vadd.xlane.f32.xlu0 %v6123
    %v6127 = vpop.xlane.xlu0 %6126
    %s6128 = sld [smem:[#allocation8]]
    %v6129 = vstv %s6128
    %v6130 = vadd.f32 %v6125, %v6129
    %v6131 = vadd.f32 %v6127, %v6129
    %vm6132 = vcmask 7168
    %6133 = vst.msk [vmem:[%s7] sm:$0xff] %vm6132, %v6130
    %6134 = vst.msk [vmem:[%s7 + $0x8] sm:$0xff] %vm6132, %v6131
    %v6135 = vmul.f32 %v6106, %v6120
    %v6136 = vmul.f32 %v6107, %v6121
    %6137 = vadd.xlane.f32.xlu0 %v6135
    %v6138 = vpop.xlane.xlu0 %6137
    %6139 = vadd.xlane.f32.xlu0 %v6136
    %v6140 = vpop.xlane.xlu0 %6139
    %s6141 = sld [smem:[#allocation8 + $0x1]]
    %v6142 = vstv %s6141
    %v6143 = vadd.f32 %v6138, %v6142
    %v6144 = vadd.f32 %v6140, %v6142
    %vm6145 = vcmask 15368
    %6146 = vst.msk [vmem:[%s7] sm:$0xff] %vm6145, %v6143
    %6147 = vst.msk [vmem:[%s7 + $0x8] sm:$0xff] %vm6145, %v6144
    // Predicated region
    $region46: #{tpu_custom_call.1} parent=1 // pred_check
      _
    $region47: #{tpu_custom_call.1} parent=1 // pred_check_branch
      %6149 = sbr.rel (0) target = $region49
    $region48: #{tpu_custom_call.1} parent=1 // pred_region
      _
    $region49: #{tpu_custom_call.1} parent=1 // pred_fallthru
      _
    // Predicated region
    $region50: #{tpu_custom_call.1} parent=1 // pred_check
      _
    $region51: #{tpu_custom_call.1} parent=1 // pred_check_branch
      %6151 = sbr.rel (0) target = $region53
    $region52: #{tpu_custom_call.1} parent=1 // pred_region
      _
    $region53: #{tpu_custom_call.1} parent=1 // pred_fallthru
      _
    %6152 = vsyncpa [#allocation3], 1
    %6153 = vsyncpa [#allocation6], 1
    %6154 = vsyncpa [#allocation4], 1
    %6155 = vsyncpa [#allocation9], 1

</llo_original>
